<compile_context>
chip_gen: v7x
topology: tpu7x:2x2x1
jax: 0.10.0
libtpu: 0.0.40
codegen_flags: <defaults>
</compile_context>

<pallas_src>
import functools

import numpy as np
import jax
import jax.numpy as jnp
from jax import lax
from jax.experimental import pallas as pl
from jax.experimental.pallas import tpu as pltpu


# ----------------------------------------------------------------------------
# Helpers
# ----------------------------------------------------------------------------

def _round_up(x, m):
    return (x + m - 1) // m * m


def _largest_factor(x, cap):
    if x <= cap:
        return x
    for c in (2048, 1536, 1152, 1024, 768, 512, 384, 256, 128):
        if c <= cap and x % c == 0:
            return c
    return x


def _pick_tiles(M, K, N):
    """Per-regime tile selection.  K is already a multiple of 128."""
    if M <= 256:
        # Weight-HBM-bound regime (7x7 / 14x14 spatial): stream large weight
        # tiles (single K step when possible); keep >= 2 N blocks so both
        # TensorCores stream weights on v7x.
        bm = M
        bk = K if K <= 2048 else _largest_factor(K, 2048)
        bn = min(N // 2, 1024) if N >= 256 else N
    else:
        bn = _largest_factor(N, 512)
        bk = _largest_factor(K, 512)
        wbytes = bk * bn * 2
        if wbytes <= (1 << 21):       # small weight block -> big A tiles
            bm = min(M, 2048)
        elif wbytes <= (1 << 22):
            bm = min(M, 1024)
        else:
            bm = min(M, 512)
        # Avoid collapsing the grid to a single (non-parallel) block.
        if bm >= M and bn >= N and N >= 256:
            bn = N // 2
    return bm, bk, bn


# ----------------------------------------------------------------------------
# Shared MXU matmul kernel (fused BN prologue / BN+ReLU|Sigmoid epilogue)
# ----------------------------------------------------------------------------

def _mm_kernel(*refs, a_bn, relu, sigmoid, multi_k):
    if a_bn:
        a_ref, b_ref, s_ref, t_ref, p_ref, q_ref, o_ref = refs[:7]
        scratch = refs[7:]
    else:
        a_ref, b_ref, s_ref, t_ref, o_ref = refs[:5]
        scratch = refs[5:]

    a = a_ref[...]
    if a_bn:
        # Fused block-entry BN + ReLU prologue (per-K-channel affine).
        a = jnp.maximum(a.astype(jnp.float32) * p_ref[...] + q_ref[...], 0.0)
        a = a.astype(jnp.bfloat16)

    part = jnp.dot(a, b_ref[...], preferred_element_type=jnp.float32)

    def epilogue(y):
        y = y * s_ref[...] + t_ref[...]
        if relu:
            y = jnp.maximum(y, 0.0)
        if sigmoid:
            y = 1.0 / (1.0 + jnp.exp(-y))
        return y.astype(o_ref.dtype)

    if multi_k:
        acc_ref = scratch[0]

        @pl.when(pl.program_id(2) == 0)
        def _():
            acc_ref[...] = jnp.zeros_like(acc_ref)

        acc_ref[...] += part

        @pl.when(pl.program_id(2) == pl.num_programs(2) - 1)
        def _():
            o_ref[...] = epilogue(acc_ref[...])
    else:
        # Single K step: no f32 scratch round-trip.
        o_ref[...] = epilogue(part)


@functools.partial(jax.jit, static_argnames=("relu", "sigmoid", "a_bn"))
def pallas_matmul(a, b, scale=None, shift=None, a_scale=None, a_shift=None,
                  relu=False, sigmoid=False, a_bn=False):
    """a: (M, K), b: (K, N) -> (M, N) bf16 with fused BN prologue/epilogue."""
    M, K = a.shape
    K2, N = b.shape
    assert K == K2

    if scale is None:
        scale = jnp.ones((N,), jnp.float32)
    if shift is None:
        shift = jnp.zeros((N,), jnp.float32)

    a = a.astype(jnp.bfloat16)
    b = b.astype(jnp.bfloat16)
    s = scale.astype(jnp.float32).reshape(1, N)
    t = shift.astype(jnp.float32).reshape(1, N)
    if a_bn:
        p = a_scale.astype(jnp.float32).reshape(1, K)
        q = a_shift.astype(jnp.float32).reshape(1, K)

    # Keep the contraction dim lane-aligned (only K=64/147 ever need this).
    if K % 128 != 0:
        Kp = _round_up(K, 128)
        a = jnp.pad(a, ((0, 0), (0, Kp - K)))
        b = jnp.pad(b, ((0, Kp - K), (0, 0)))
        if a_bn:
            p = jnp.pad(p, ((0, 0), (0, Kp - K)))
            q = jnp.pad(q, ((0, 0), (0, Kp - K)))
        K = Kp

    bm, bk, bn = _pick_tiles(M, K, N)
    nk = K // bk
    multi_k = nk > 1
    grid = (pl.cdiv(N, bn), pl.cdiv(M, bm), nk)   # N leading -> megacore split

    in_specs = [
        pl.BlockSpec((bm, bk), lambda j, i, k: (i, k)),
        pl.BlockSpec((bk, bn), lambda j, i, k: (k, j)),
        pl.BlockSpec((1, bn), lambda j, i, k: (0, j)),
        pl.BlockSpec((1, bn), lambda j, i, k: (0, j)),
    ]
    args = [a, b, s, t]
    if a_bn:
        in_specs += [
            pl.BlockSpec((1, bk), lambda j, i, k: (0, k)),
            pl.BlockSpec((1, bk), lambda j, i, k: (0, k)),
        ]
        args += [p, q]

    scratch = [pltpu.VMEM((bm, bn), jnp.float32)] if multi_k else []

    out = pl.pallas_call(
        functools.partial(_mm_kernel, a_bn=a_bn, relu=relu, sigmoid=sigmoid,
                          multi_k=multi_k),
        out_shape=jax.ShapeDtypeStruct((M, N), jnp.bfloat16),
        grid_spec=pltpu.PrefetchScalarGridSpec(
            num_scalar_prefetch=0,
            grid=grid,
            in_specs=in_specs,
            out_specs=pl.BlockSpec((bm, bn), lambda j, i, k: (i, j)),
            scratch_shapes=scratch,
        ),
        compiler_params=pltpu.CompilerParams(
            dimension_semantics=("parallel", "parallel", "arbitrary"),
            vmem_limit_bytes=48 * 1024 * 1024),
    )(*args)
    return out


# ----------------------------------------------------------------------------
# Direct stride-1 3x3 conv kernel (no im2col): 9 shifted-row matmul taps
# accumulated in an f32 VMEM scratch, BN+ReLU epilogue fused.
# ----------------------------------------------------------------------------

def _conv3x3_kernel(x_ref, w_ref, s_ref, t_ref, o_ref, acc_ref, *, Wp, relu):
    # x_ref: (1, Lin, C) flattened zero-padded image; w_ref: (9, C, bco)
    # o_ref: (1, Lout, bco) with Lout = H * Wp (padded-width geometry)
    Lout = acc_ref.shape[0]
    acc_ref[...] = jnp.zeros_like(acc_ref)
    for dy in range(3):
        for dx in range(3):
            off = dy * Wp + dx
            acc_ref[...] += jnp.dot(x_ref[0, off:off + Lout, :],
                                    w_ref[dy * 3 + dx],
                                    preferred_element_type=jnp.float32)
    y = acc_ref[...] * s_ref[...] + t_ref[...]
    if relu:
        y = jnp.maximum(y, 0.0)
    o_ref[0] = y.astype(o_ref.dtype)


@functools.partial(jax.jit, static_argnames=("relu",))
def conv3x3_s1(x, w, scale, shift, relu=False):
    """3x3 / stride-1 / pad-1 conv.  x: (N,H,W,C) bf16, w: (9*C, Cout)."""
    N, H, W, C = x.shape
    Cout = w.shape[1]
    assert w.shape[0] == 9 * C
    Wp = W + 2
    Lin = (H + 3) * Wp          # +1 top pad, +2 bottom pad (slice-OOB guard)
    Lout = H * Wp

    xp = jnp.pad(x.astype(jnp.bfloat16),
                 ((0, 0), (1, 2), (1, 1), (0, 0))).reshape(N, Lin, C)
    wr = w.astype(jnp.bfloat16).reshape(9, C, Cout)
    s = scale.astype(jnp.float32).reshape(1, Cout)
    t = shift.astype(jnp.float32).reshape(1, Cout)

    bco = Cout if Cout <= 256 else 256          # >=2 parallel blocks at 512
    grid = (N, Cout // bco)

    out = pl.pallas_call(
        functools.partial(_conv3x3_kernel, Wp=Wp, relu=relu),
        out_shape=jax.ShapeDtypeStruct((N, Lout, Cout), jnp.bfloat16),
        grid_spec=pltpu.PrefetchScalarGridSpec(
            num_scalar_prefetch=0,
            grid=grid,
            in_specs=[
                pl.BlockSpec((1, Lin, C), lambda n, j: (n, 0, 0)),
                pl.BlockSpec((9, C, bco), lambda n, j: (0, 0, j)),
                pl.BlockSpec((1, bco), lambda n, j: (0, j)),
                pl.BlockSpec((1, bco), lambda n, j: (0, j)),
            ],
            out_specs=pl.BlockSpec((1, Lout, bco), lambda n, j: (n, 0, j)),
            scratch_shapes=[pltpu.VMEM((Lout, bco), jnp.float32)],
        ),
        compiler_params=pltpu.CompilerParams(
            dimension_semantics=("parallel", "parallel"),
            vmem_limit_bytes=48 * 1024 * 1024),
    )(xp, wr, s, t)

    # Drop the 2 junk columns of the padded-width geometry.
    return out.reshape(N, H, Wp, Cout)[:, :, :W, :]


# ----------------------------------------------------------------------------
# Fused head kernel: BN + ReLU + AvgPool(7) + Linear(2048,1) + Sigmoid
# ----------------------------------------------------------------------------

def _head_kernel(x_ref, bs_ref, bt_ref, w_ref, b_ref, o_ref):
    x = x_ref[0].astype(jnp.float32)                     # (S, C)
    x = jnp.maximum(x * bs_ref[...] + bt_ref[...], 0.0)  # fused BN + ReLU
    m = jnp.mean(x, axis=0, keepdims=True)               # AvgPool over 49 pos
    logit = jnp.sum(m * w_ref[...], axis=1, keepdims=True) + b_ref[...]
    o_ref[...] = 1.0 / (1.0 + jnp.exp(-logit))


@jax.jit
def pallas_head(feats, bn_scale, bn_shift, w, b):
    """feats: (N, S, C) bf16 -> (N, 1) sigmoid(fc(avgpool(relu(bn(feats)))))."""
    N, S, C = feats.shape
    return pl.pallas_call(
        _head_kernel,
        out_shape=jax.ShapeDtypeStruct((N, 1), jnp.float32),
        grid_spec=pltpu.PrefetchScalarGridSpec(
            num_scalar_prefetch=0,
            grid=(N,),
            in_specs=[
                pl.BlockSpec((1, S, C), lambda n: (n, 0, 0)),
                pl.BlockSpec((1, C), lambda n: (0, 0)),
                pl.BlockSpec((1, C), lambda n: (0, 0)),
                pl.BlockSpec((1, C), lambda n: (0, 0)),
                pl.BlockSpec((1, 1), lambda n: (0, 0)),
            ],
            out_specs=pl.BlockSpec((1, 1), lambda n: (n, 0)),
        ),
    )(feats, bn_scale.astype(jnp.float32).reshape(1, C),
      bn_shift.astype(jnp.float32).reshape(1, C), w, b)


# ----------------------------------------------------------------------------
# Conv wrappers + plain-JAX glue (im2col for strided convs, pooling, upsample)
# ----------------------------------------------------------------------------

def conv1x1(x, w, scale=None, shift=None, relu=False, sigmoid=False,
            stride=1, a_scale=None, a_shift=None, a_bn=False):
    """x: NHWC, w: (Cin, Cout).  Optional fused entry-BN prologue & epilogue."""
    if stride > 1:
        x = x[:, ::stride, ::stride, :]
    N, H, W, C = x.shape
    y = pallas_matmul(x.reshape(N * H * W, C), w, scale, shift,
                      a_scale=a_scale, a_shift=a_shift,
                      relu=relu, sigmoid=sigmoid, a_bn=a_bn)
    return y.reshape(N, H, W, w.shape[1])


def conv_kxk(x, w, k, stride, pad, scale=None, shift=None, relu=False):
    """im2col glue + fused Pallas matmul (used only for stride-2 / 7x7 convs)."""
    N, H, W, C = x.shape
    Ho = (H + 2 * pad - k) // stride + 1
    Wo = (W + 2 * pad - k) // stride + 1
    xp = jnp.pad(x, ((0, 0), (pad, pad), (pad, pad), (0, 0)))
    cols = []
    for dy in range(k):
        for dx in range(k):
            cols.append(xp[:, dy:dy + (Ho - 1) * stride + 1:stride,
                           dx:dx + (Wo - 1) * stride + 1:stride, :])
    patches = jnp.concatenate(cols, axis=-1)              # (N, Ho, Wo, k*k*C)
    y = pallas_matmul(patches.reshape(N * Ho * Wo, k * k * C), w,
                      scale, shift, relu=relu)
    return y.reshape(N, Ho, Wo, w.shape[1])


def maxpool3x3s2(x):
    """nn.MaxPool2d(kernel_size=3, stride=2, padding=1) on NHWC."""
    neg = jnp.asarray(-jnp.inf, dtype=x.dtype)
    return lax.reduce_window(x, neg, lax.max,
                             (1, 3, 3, 1), (1, 2, 2, 1),
                             [(0, 0), (1, 1), (1, 1), (0, 0)])


_INTERP_CACHE = {}


def _interp_matrix(out_size, in_size):
    key = (out_size, in_size)
    if key not in _INTERP_CACHE:
        src = np.arange(out_size) * (in_size - 1) / (out_size - 1)
        lo = np.floor(src).astype(np.int64)
        hi = np.minimum(lo + 1, in_size - 1)
        frac = (src - lo).astype(np.float32)
        A = np.zeros((out_size, in_size), np.float32)
        A[np.arange(out_size), lo] += 1.0 - frac
        A[np.arange(out_size), hi] += frac
        _INTERP_CACHE[key] = jnp.asarray(A)
    return _INTERP_CACHE[key]


def upsample_bilinear(x, out_hw):
    """nn.UpsamplingBilinear2d (align_corners=True) on NHWC."""
    H_out, W_out = out_hw
    N, H, W, C = x.shape
    Ah = _interp_matrix(int(H_out), H)
    Aw = _interp_matrix(int(W_out), W)
    y = jnp.einsum('Hh,nhwc->nHwc', Ah, x.astype(jnp.float32))
    y = jnp.einsum('Ww,nHwc->nHWc', Aw, y)
    return y.astype(x.dtype)


# ----------------------------------------------------------------------------
# Deterministic parameter init (weights bf16, folded-BN affine f32)
# ----------------------------------------------------------------------------

class KeyGen:
    def __init__(self, seed):
        self._key = jax.random.PRNGKey(seed)

    def __call__(self):
        self._key, sub = jax.random.split(self._key)
        return sub


def init_conv(kg, cin, cout, k):
    fan_in = k * k * cin
    w = jax.random.normal(kg(), (fan_in, cout), jnp.float32) / np.sqrt(fan_in)
    return w.astype(jnp.bfloat16)


def init_bn(kg, c):
    scale = 1.0 + 0.05 * jax.random.normal(kg(), (c,), jnp.float32)
    shift = 0.05 * jax.random.normal(kg(), (c,), jnp.float32)
    return scale, shift


def init_rb(kg, cin, cout, stride=1):
    p = dict(stride=stride,
             bn1=init_bn(kg, cin),
             conv1=init_conv(kg, cin, cout // 4, 1),
             bn2=init_bn(kg, cout // 4),
             conv2=init_conv(kg, cout // 4, cout // 4, 3),
             bn3=init_bn(kg, cout // 4),
             conv3=init_conv(kg, cout // 4, cout, 1))
    if cin != cout or stride != 1:
        p['conv4'] = init_conv(kg, cin, cout, 1)
    return p


def init_mask_head(kg, c):
    return dict(bn1=init_bn(kg, c), conv1=init_conv(kg, c, c, 1),
                bn2=init_bn(kg, c), conv2=init_conv(kg, c, c, 1))


def init_att1(kg, c):
    return dict(first=init_rb(kg, c, c),
                trunk=[init_rb(kg, c, c), init_rb(kg, c, c)],
                sm1=init_rb(kg, c, c), skip1=init_rb(kg, c, c),
                sm2=init_rb(kg, c, c), skip2=init_rb(kg, c, c),
                sm3=[init_rb(kg, c, c), init_rb(kg, c, c)],
                sm4=init_rb(kg, c, c), sm5=init_rb(kg, c, c),
                mask=init_mask_head(kg, c),
                last=init_rb(kg, c, c))


def init_att2(kg, c):
    return dict(first=init_rb(kg, c, c),
                trunk=[init_rb(kg, c, c), init_rb(kg, c, c)],
                sm1=init_rb(kg, c, c), skip1=init_rb(kg, c, c),
                sm2=[init_rb(kg, c, c), init_rb(kg, c, c)],
                sm3=init_rb(kg, c, c),
                mask=init_mask_head(kg, c),
                last=init_rb(kg, c, c))


def init_att3(kg, c):
    return dict(first=init_rb(kg, c, c),
                trunk=[init_rb(kg, c, c), init_rb(kg, c, c)],
                sm1=[init_rb(kg, c, c), init_rb(kg, c, c)],
                mask=init_mask_head(kg, c),
                last=init_rb(kg, c, c))


def init_model(seed=42):
    kg = KeyGen(seed)
    return dict(
        conv1=init_conv(kg, 3, 64, 7),
        bn1=init_bn(kg, 64),
        rb1=init_rb(kg, 64, 256, 1),
        att1=init_att1(kg, 256),
        rb2=init_rb(kg, 256, 512, 2),
        att2=init_att2(kg, 512),
        rb3=init_rb(kg, 512, 1024, 2),
        att3=init_att3(kg, 1024),
        rb4=init_rb(kg, 1024, 2048, 2),
        rb5=init_rb(kg, 2048, 2048, 1),
        rb6=init_rb(kg, 2048, 2048, 1),
        bn_out=init_bn(kg, 2048),
        fc_w=jax.random.normal(kg(), (1, 2048), jnp.float32) / np.sqrt(2048.0),
        fc_b=jnp.zeros((1, 1), jnp.float32),
    )


# ----------------------------------------------------------------------------
# Forward pass
# ----------------------------------------------------------------------------

def rb_fwd(p, x):
    """Pre-activation bottleneck ResidualBlock, all BN/ReLU fused into convs."""
    bs, bt = p['bn1']
    # conv1 on relu(bn1(x)): entry BN fused as A prologue, bn2+relu as epilogue
    out = conv1x1(x, p['conv1'], *p['bn2'], relu=True,
                  a_scale=bs, a_shift=bt, a_bn=True)
    if p['stride'] == 1:
        out = conv3x3_s1(out, p['conv2'], *p['bn3'], relu=True)
    else:
        out = conv_kxk(out, p['conv2'], 3, p['stride'], 1, *p['bn3'], relu=True)
    out = conv1x1(out, p['conv3'])                      # plain conv3
    if 'conv4' in p:
        # conv4 also consumes relu(bn1(x)) -> recompute the prologue there.
        residual = conv1x1(x, p['conv4'], stride=p['stride'],
                           a_scale=bs, a_shift=bt, a_bn=True)
    else:
        residual = x
    return out + residual


def mask_head_fwd(p, x):
    bs, bt = p['bn1']
    out = conv1x1(x, p['conv1'], *p['bn2'], relu=True,
                  a_scale=bs, a_shift=bt, a_bn=True)
    return conv1x1(out, p['conv2'], sigmoid=True)       # fused sigmoid epilogue


def att1_fwd(p, x):
    x = rb_fwd(p['first'], x)
    out_trunk = rb_fwd(p['trunk'][1], rb_fwd(p['trunk'][0], x))
    out_mpool1 = maxpool3x3s2(x)
    out_sm1 = rb_fwd(p['sm1'], out_mpool1)
    out_skip1 = rb_fwd(p['skip1'], out_sm1)
    out_mpool2 = maxpool3x3s2(out_sm1)
    out_sm2 = rb_fwd(p['sm2'], out_mpool2)
    out_skip2 = rb_fwd(p['skip2'], out_sm2)
    out_mpool3 = maxpool3x3s2(out_sm2)
    out_sm3 = rb_fwd(p['sm3'][1], rb_fwd(p['sm3'][0], out_mpool3))
    out_interp3 = upsample_bilinear(out_sm3, out_sm2.shape[1:3]) + out_sm2
    out = out_interp3 + out_skip2
    out_sm4 = rb_fwd(p['sm4'], out)
    out_interp2 = upsample_bilinear(out_sm4, out_sm1.shape[1:3]) + out_sm1
    out = out_interp2 + out_skip1
    out_sm5 = rb_fwd(p['sm5'], out)
    out_interp1 = upsample_bilinear(out_sm5, out_trunk.shape[1:3]) + out_trunk
    out_mask = mask_head_fwd(p['mask'], out_interp1)
    out = (1.0 + out_mask) * out_trunk
    return rb_fwd(p['last'], out.astype(jnp.bfloat16))


def att2_fwd(p, x):
    x = rb_fwd(p['first'], x)
    out_trunk = rb_fwd(p['trunk'][1], rb_fwd(p['trunk'][0], x))
    out_mpool1 = maxpool3x3s2(x)
    out_sm1 = rb_fwd(p['sm1'], out_mpool1)
    out_skip1 = rb_fwd(p['skip1'], out_sm1)
    out_mpool2 = maxpool3x3s2(out_sm1)
    out_sm2 = rb_fwd(p['sm2'][1], rb_fwd(p['sm2'][0], out_mpool2))
    out_interp2 = upsample_bilinear(out_sm2, out_sm1.shape[1:3]) + out_sm1
    out = out_interp2 + out_skip1
    out_sm3 = rb_fwd(p['sm3'], out)
    out_interp1 = upsample_bilinear(out_sm3, out_trunk.shape[1:3]) + out_trunk
    out_mask = mask_head_fwd(p['mask'], out_interp1)
    out = (1.0 + out_mask) * out_trunk
    return rb_fwd(p['last'], out.astype(jnp.bfloat16))


def att3_fwd(p, x):
    x = rb_fwd(p['first'], x)
    out_trunk = rb_fwd(p['trunk'][1], rb_fwd(p['trunk'][0], x))
    out_mpool1 = maxpool3x3s2(x)
    out_sm1 = rb_fwd(p['sm1'][1], rb_fwd(p['sm1'][0], out_mpool1))
    out_interp1 = upsample_bilinear(out_sm1, out_trunk.shape[1:3]) + out_trunk
    out_mask = mask_head_fwd(p['mask'], out_interp1)
    out = (1.0 + out_mask) * out_trunk
    return rb_fwd(p['last'], out.astype(jnp.bfloat16))


def forward(params, x_nchw):
    """x_nchw: (N, 3, 224, 224) float32 -> (N, 1) sigmoid output."""
    x = jnp.transpose(x_nchw, (0, 2, 3, 1)).astype(jnp.bfloat16)   # NHWC bf16

    # conv1 = Conv7x7/s2 + BN + ReLU (BN+ReLU fused into the matmul epilogue)
    out = conv_kxk(x, params['conv1'], 7, 2, 3, *params['bn1'], relu=True)
    out = maxpool3x3s2(out)

    out = rb_fwd(params['rb1'], out)
    out = att1_fwd(params['att1'], out)
    out = rb_fwd(params['rb2'], out)
    out = att2_fwd(params['att2'], out)
    out = rb_fwd(params['rb3'], out)
    out = att3_fwd(params['att3'], out)
    out = rb_fwd(params['rb4'], out)
    out = rb_fwd(params['rb5'], out)
    out = rb_fwd(params['rb6'], out)

    # mpool2 (BN + ReLU + AvgPool(7)) + fc + sigmoid: single fused head kernel
    N, H, W, C = out.shape
    feats = out.reshape(N, H * W, C)                   # (N, 49, 2048)
    return pallas_head(feats, params['bn_out'][0], params['bn_out'][1],
                       params['fc_w'], params['fc_b'])


# ----------------------------------------------------------------------------
# Main
# ----------------------------------------------------------------------------

if __name__ == "__main__":
    # The AvgPool(7) -> Linear(2048, 1) head after five stride-2 stages
    # requires a 224x224 input; batch is kept at 1 to stay small.
    key = jax.random.PRNGKey(0)
    x = jax.random.normal(key, (1, 3, 224, 224), jnp.float32)

    params = init_model(seed=42)
    out = forward(params, x)
    out = jax.block_until_ready(out)

    assert out.shape == (1, 1)
    assert bool(jnp.all(jnp.isfinite(out)))
    print("KERNEL_OK")
</pallas_src>

<mosaic_0001>
module attributes {stable_mosaic.version = 11 : i64} {
  func.func @_mm_kernel(%arg0: i32, %arg1: i32, %arg2: i32, %arg3: memref<2048x256xbf16, #tpu.memory_space<vmem>>, %arg4: memref<256x64xbf16, #tpu.memory_space<vmem>>, %arg5: memref<1x64xf32, #tpu.memory_space<vmem>>, %arg6: memref<1x64xf32, #tpu.memory_space<vmem>>, %arg7: memref<2048x64xbf16, #tpu.memory_space<vmem>>) attributes {dimension_semantics = [#tpu.dimension_semantics<parallel>, #tpu.dimension_semantics<parallel>, #tpu.dimension_semantics<arbitrary>], iteration_bounds = array<i64: 1, 7, 1>, scalar_prefetch = 0 : i64, scratch_operands = 0 : i64, tpu.core_type = #tpu.core_type<tc>, window_params = [{transform_indices = @transform_0, window_bounds = array<i64: 2048, 256>}, {transform_indices = @transform_1, window_bounds = array<i64: 256, 64>}, {transform_indices = @transform_2, window_bounds = array<i64: 1, 64>}, {transform_indices = @transform_3, window_bounds = array<i64: 1, 64>}, {transform_indices = @transform_4, window_bounds = array<i64: 2048, 64>}]} {
    %c0 = arith.constant 0 : index
    %c0_0 = arith.constant 0 : index
    %0 = vector.load %arg3[%c0, %c0_0] : memref<2048x256xbf16, #tpu.memory_space<vmem>>, vector<2048x256xbf16>
    %c0_1 = arith.constant 0 : index
    %c0_2 = arith.constant 0 : index
    %1 = vector.load %arg4[%c0_1, %c0_2] : memref<256x64xbf16, #tpu.memory_space<vmem>>, vector<256x64xbf16>
    %cst = arith.constant dense<0.000000e+00> : vector<2048x64xf32>
    %2 = tpu.matmul %0, %1, %cst {dimension_numbers = #tpu.dot_dimension_numbers<[1], [0], [0], [1], [0, 0, 1, 1], [], []>} : vector<2048x256xbf16>, vector<256x64xbf16>, vector<2048x64xf32> -> vector<2048x64xf32>
    %c0_3 = arith.constant 0 : index
    %c0_4 = arith.constant 0 : index
    %3 = vector.load %arg5[%c0_3, %c0_4] : memref<1x64xf32, #tpu.memory_space<vmem>>, vector<1x64xf32>
    %4 = vector.broadcast %3 : vector<1x64xf32> to vector<2048x64xf32>
    %5 = arith.mulf %2, %4 : vector<2048x64xf32>
    %c0_5 = arith.constant 0 : index
    %c0_6 = arith.constant 0 : index
    %6 = vector.load %arg6[%c0_5, %c0_6] : memref<1x64xf32, #tpu.memory_space<vmem>>, vector<1x64xf32>
    %7 = vector.broadcast %6 : vector<1x64xf32> to vector<2048x64xf32>
    %8 = arith.addf %5, %7 : vector<2048x64xf32>
    %cst_7 = arith.constant 0.000000e+00 : f32
    %9 = vector.broadcast %cst_7 : f32 to vector<2048x64xf32>
    %10 = arith.maximumf %8, %9 : vector<2048x64xf32>
    %11 = arith.truncf %10 : vector<2048x64xf32> to vector<2048x64xbf16>
    %c0_8 = arith.constant 0 : index
    %c0_9 = arith.constant 0 : index
    %12 = vector.load %arg7[%c0_8, %c0_9] : memref<2048x64xbf16, #tpu.memory_space<vmem>>, vector<2048x64xbf16>
    tpu.vector_store %arg7[%c0_8, %c0_9], %11 {strides = array<i32>} : memref<2048x64xbf16, #tpu.memory_space<vmem>>, vector<2048x64xbf16>,
    return
  }
  func.func @transform_0(%arg0: i32, %arg1: i32, %arg2: i32) -> (i32, i32) {
    %c0_i32 = arith.constant 0 : i32
    return %arg1, %arg2 : i32, i32
  }
  func.func @transform_1(%arg0: i32, %arg1: i32, %arg2: i32) -> (i32, i32) {
    %c0_i32 = arith.constant 0 : i32
    return %arg2, %arg0 : i32, i32
  }
  func.func @transform_2(%arg0: i32, %arg1: i32, %arg2: i32) -> (i32, i32) {
    %c0_i32 = arith.constant 0 : i32
    %c0_i32_0 = arith.constant 0 : i32
    return %c0_i32, %arg0 : i32, i32
  }
  func.func @transform_3(%arg0: i32, %arg1: i32, %arg2: i32) -> (i32, i32) {
    %c0_i32 = arith.constant 0 : i32
    %c0_i32_0 = arith.constant 0 : i32
    return %c0_i32, %arg0 : i32, i32
  }
  func.func @transform_4(%arg0: i32, %arg1: i32, %arg2: i32) -> (i32, i32) {
    %c0_i32 = arith.constant 0 : i32
    return %arg1, %arg0 : i32, i32
  }
}

</mosaic_0001>

<llo_original>
// kernel: pallas_matmul.1
$region0: #{pallas_matmul.1}
  #allocation0 [shape = 'u32[]', space=smem, size = 0x4, offset = 0x4, fixed_abs, tag = 'smem constant byte address 0x4 - core index']
  #allocation1 [shape = 'u32[144,128]{1,0:T(1,128)}', space=vmem, size = 0x12000, scoped, tag = 'internal scratch']
  %s0 = inlined_call_operand.vmem [shape: bf16[12544,256], index: 0, kind: input, shape index: {}]
  %s1 = inlined_call_operand.vmem [shape: bf16[256,64], index: 1, kind: input, shape index: {}]
  %s2 = inlined_call_operand.vmem [shape: f32[1,64], index: 2, kind: input, shape index: {}]
  %s3 = inlined_call_operand.vmem [shape: f32[1,64], index: 3, kind: input, shape index: {}]
  %s4 = inlined_call_operand.vmem [shape: bf16[12544,64], index: 4, kind: output, shape index: {}]
  %s5 = sld [smem:[#allocation0]]
  $region93: #{pallas_matmul.1} parent=0
    _
  %s7 = ssub.s32 1, %s5
  %s8 = scalar_select 0, %s7, %s5
  $region1: #{pallas_matmul.1} parent=0
    #allocation2 [shape = 'u8[1048576]{0}', space=vmem, size = 0x100000, scoped, tag = 'output window, operand 0']
    loop: start=0, step=1, limit=9
    $region2: #{pallas_matmul.1} parent=1 // loop_pre_header
      _
    $region3: #{pallas_matmul.1} parent=1 // loop_header
      %s10 = sphi 0, %s14
      %p11 = scmp.ge.s32.totalorder %s10, 9
      %s17 = sphi 0, %s36
      %s18 = sphi 0, %s32
      %s19 = sphi 0, %s28
      %s20 = sphi 0, %s17
      %s21 = sphi 0, %s18
      %s22 = sphi 0, %s19
      %s23 = sphi 0, %s20
      %s24 = sphi 0, %s21
      %s25 = sphi 0, %s22
      %s41 = sphi 0, %s43
      %s44 = sphi 0, %s41
      %s45 = sphi 0, %s44
      %s61 = sphi 0, %s45
      %s69 = sphi 0, %s71
      %s72 = sphi 0, %s69
      %s73 = sphi 0, %s72
      %s89 = sphi 0, %s73
      %s95 = sphi 0, %s97
      %s98 = sphi 0, %s95
      %s99 = sphi 0, %s98
      %s115 = sphi 0, %s99
      %s121 = sphi 0, %s123
      %s124 = sphi 0, %s121
      %s125 = sphi 0, %s124
      %s141 = sphi 0, %s125
      %s149 = sphi 0, %s151
      %s152 = sphi 0, %s149
      %s153 = sphi 0, %s152
      %s169 = sphi 0, %s153
    $region4: #{pallas_matmul.1} parent=1 // loop_header_branch
      %13 = sbr.rel (%p11) target = $region8
    $region5: #{pallas_matmul.1} parent=1 // loop_body
      %s15 = ssub.s32 %s10, 1
      %s16 = ssub.s32 %s10, 2
      %s26 = sadd.s32 1, %s19
      %p27 = scmp.ge.s32.totalorder %s26, 1
      %s28 = scalar_select %p27, 0, %s26
      %s29 = sadd.s32 1, %s18
      %s30 = scalar_select %p27, %s29, %s18
      %p31 = scmp.ge.s32.totalorder %s30, 7
      %s32 = scalar_select %p31, 0, %s30
      %s33 = sadd.s32 1, %s17
      %s34 = scalar_select %p31, %s33, %s17
      %p35 = scmp.ge.s32.totalorder %s34, 1
      %s36 = scalar_select %p35, 0, %s34
      %s37 = ssub.s32 %s18, %s32
      %s38 = ssub.s32 %s19, %s28
      %s39 = sor.u32 %s37, %s38
      %p40 = scmp.eq.s32.totalorder %s39, 0
      %s42 = sadd.s32 %s41, 1
      %s43 = scalar_select %p40, %s41, %s42
      %p46 = pneg %p40
      %p47 = scmp.eq.s32.totalorder %s10, 6
      %p48 = por %p46, %p47
      %p49 = scmp.ne.s32.totalorder %s41, %s44
      %p50 = scmp.eq.s32.totalorder %s10, 0
      %p51 = por %p49, %p50
      %p52 = scmp.ne.s32.totalorder %s41, %s44
      %p53 = scmp.eq.s32.totalorder %s15, 6
      %p54 = por %p52, %p53
      %p55 = scmp.ne.s32.totalorder %s44, %s45
      %p56 = scmp.eq.s32.totalorder %s15, 0
      %p57 = por %p55, %p56
      %p58 = scmp.ne.s32.totalorder %s44, %s45
      %p59 = scmp.eq.s32.totalorder %s16, 6
      %p60 = por %p58, %p59
      %p62 = scmp.ne.s32.totalorder %s45, %s61
      %p63 = scmp.eq.s32.totalorder %s16, 0
      %p64 = por %p62, %p63
      %s65 = ssub.s32 %s19, %s28
      %s66 = ssub.s32 %s17, %s36
      %s67 = sor.u32 %s65, %s66
      %p68 = scmp.eq.s32.totalorder %s67, 0
      %s70 = sadd.s32 %s69, 1
      %s71 = scalar_select %p68, %s69, %s70
      %p74 = pneg %p68
      %p75 = scmp.eq.s32.totalorder %s10, 6
      %p76 = por %p74, %p75
      %p77 = scmp.ne.s32.totalorder %s69, %s72
      %p78 = scmp.eq.s32.totalorder %s10, 0
      %p79 = por %p77, %p78
      %p80 = scmp.ne.s32.totalorder %s69, %s72
      %p81 = scmp.eq.s32.totalorder %s15, 6
      %p82 = por %p80, %p81
      %p83 = scmp.ne.s32.totalorder %s72, %s73
      %p84 = scmp.eq.s32.totalorder %s15, 0
      %p85 = por %p83, %p84
      %p86 = scmp.ne.s32.totalorder %s72, %s73
      %p87 = scmp.eq.s32.totalorder %s16, 6
      %p88 = por %p86, %p87
      %p90 = scmp.ne.s32.totalorder %s73, %s89
      %p91 = scmp.eq.s32.totalorder %s16, 0
      %p92 = por %p90, %p91
      %s93 = ssub.s32 %s17, %s36
      %p94 = scmp.eq.s32.totalorder %s93, 0
      %s96 = sadd.s32 %s95, 1
      %s97 = scalar_select %p94, %s95, %s96
      %p100 = pneg %p94
      %p101 = scmp.eq.s32.totalorder %s10, 6
      %p102 = por %p100, %p101
      %p103 = scmp.ne.s32.totalorder %s95, %s98
      %p104 = scmp.eq.s32.totalorder %s10, 0
      %p105 = por %p103, %p104
      %p106 = scmp.ne.s32.totalorder %s95, %s98
      %p107 = scmp.eq.s32.totalorder %s15, 6
      %p108 = por %p106, %p107
      %p109 = scmp.ne.s32.totalorder %s98, %s99
      %p110 = scmp.eq.s32.totalorder %s15, 0
      %p111 = por %p109, %p110
      %p112 = scmp.ne.s32.totalorder %s98, %s99
      %p113 = scmp.eq.s32.totalorder %s16, 6
      %p114 = por %p112, %p113
      %p116 = scmp.ne.s32.totalorder %s99, %s115
      %p117 = scmp.eq.s32.totalorder %s16, 0
      %p118 = por %p116, %p117
      %s119 = ssub.s32 %s17, %s36
      %p120 = scmp.eq.s32.totalorder %s119, 0
      %s122 = sadd.s32 %s121, 1
      %s123 = scalar_select %p120, %s121, %s122
      %p126 = pneg %p120
      %p127 = scmp.eq.s32.totalorder %s10, 6
      %p128 = por %p126, %p127
      %p129 = scmp.ne.s32.totalorder %s121, %s124
      %p130 = scmp.eq.s32.totalorder %s10, 0
      %p131 = por %p129, %p130
      %p132 = scmp.ne.s32.totalorder %s121, %s124
      %p133 = scmp.eq.s32.totalorder %s15, 6
      %p134 = por %p132, %p133
      %p135 = scmp.ne.s32.totalorder %s124, %s125
      %p136 = scmp.eq.s32.totalorder %s15, 0
      %p137 = por %p135, %p136
      %p138 = scmp.ne.s32.totalorder %s124, %s125
      %p139 = scmp.eq.s32.totalorder %s16, 6
      %p140 = por %p138, %p139
      %p142 = scmp.ne.s32.totalorder %s125, %s141
      %p143 = scmp.eq.s32.totalorder %s16, 0
      %p144 = por %p142, %p143
      %s145 = ssub.s32 %s18, %s32
      %s146 = ssub.s32 %s17, %s36
      %s147 = sor.u32 %s145, %s146
      %p148 = scmp.eq.s32.totalorder %s147, 0
      %s150 = sadd.s32 %s149, 1
      %s151 = scalar_select %p148, %s149, %s150
      %p154 = pneg %p148
      %p155 = scmp.eq.s32.totalorder %s10, 6
      %p156 = por %p154, %p155
      %p157 = scmp.ne.s32.totalorder %s149, %s152
      %p158 = scmp.eq.s32.totalorder %s10, 0
      %p159 = por %p157, %p158
      %p160 = scmp.ne.s32.totalorder %s149, %s152
      %p161 = scmp.eq.s32.totalorder %s15, 6
      %p162 = por %p160, %p161
      %p163 = scmp.ne.s32.totalorder %s152, %s153
      %p164 = scmp.eq.s32.totalorder %s15, 0
      %p165 = por %p163, %p164
      %p166 = scmp.ne.s32.totalorder %s152, %s153
      %p167 = scmp.eq.s32.totalorder %s16, 6
      %p168 = por %p166, %p167
      %p170 = scmp.ne.s32.totalorder %s153, %s169
      %p171 = scmp.eq.s32.totalorder %s16, 0
      %p172 = por %p170, %p171
      %p173 = scmp.le.s32.totalorder 1, %s10
      %p174 = scmp.lt.s32.totalorder %s10, 8
      %p175 = pnand %p173, %p174
      %p176 = pneg %p175
      // Predicated region
      $region9: #{pallas_matmul.1} parent=5 // pred_check
        _
      $region10: #{pallas_matmul.1} parent=5 // pred_check_branch
        %178 = sbr.rel (%p175) target = $region12
      $region11: #{pallas_matmul.1} parent=5 // pred_region
        %s179 = ssub.s32 %s10, 1
        // Predicated region
        $region13: #{pallas_matmul.1} parent=11 // pred_check
          %p180 = pneg %p85
        $region14: #{pallas_matmul.1} parent=11 // pred_check_branch
          %182 = sbr.rel (%p180) target = $region16
        $region15: #{pallas_matmul.1} parent=11 // pred_region
          %s183 = smul.u32 32, %s22
          %p184 = scmp.lt.s32.totalorder %s183, 31
          %s185 = scalar_select %p184, %s183, 31
          %p186 = scmp.lt.s32.totalorder %s20, 0
          %s187 = scalar_select %p186, %s20, 0
          %s188 = sadd.s32 %s187, %s185
          %s189 = smul.addr %s188, 4
          %s190 = scalar_lea.vmem %s1, %s189
          %s191 = smul.u32 32, %s22
        $region16: #{pallas_matmul.1} parent=11 // pred_fallthru
          _
        // Predicated region
        $region17: #{pallas_matmul.1} parent=11 // pred_check
          %p192 = pneg %p111
        $region18: #{pallas_matmul.1} parent=11 // pred_check_branch
          %194 = sbr.rel (%p192) target = $region20
        $region19: #{pallas_matmul.1} parent=11 // pred_region
          %p195 = scmp.lt.s32.totalorder %s20, 0
          %s196 = scalar_select %p195, %s20, 0
          %s197 = scalar_lea.vmem %s2, %s196
        $region20: #{pallas_matmul.1} parent=11 // pred_fallthru
          _
        // Predicated region
        $region21: #{pallas_matmul.1} parent=11 // pred_check
          %p198 = pneg %p137
        $region22: #{pallas_matmul.1} parent=11 // pred_check_branch
          %200 = sbr.rel (%p198) target = $region24
        $region23: #{pallas_matmul.1} parent=11 // pred_region
          %p201 = scmp.lt.s32.totalorder %s20, 0
          %s202 = scalar_select %p201, %s20, 0
          %s203 = scalar_lea.vmem %s3, %s202
        $region24: #{pallas_matmul.1} parent=11 // pred_fallthru
          _
      $region12: #{pallas_matmul.1} parent=5 // pred_fallthru
        _
      %p204 = scmp.lt.s32.totalorder %s10, 7
      // Predicated region
      $region25: #{pallas_matmul.1} parent=5 // pred_check
        %p205 = pneg %p204
      $region26: #{pallas_matmul.1} parent=5 // pred_check_branch
        %207 = sbr.rel (%p205) target = $region28
      $region27: #{pallas_matmul.1} parent=5 // pred_region
        // Predicated region
        $region29: #{pallas_matmul.1} parent=27 // pred_check
          %p208 = pneg %p51
        $region30: #{pallas_matmul.1} parent=27 // pred_check_branch
          %210 = sbr.rel (%p208) target = $region32
        $region31: #{pallas_matmul.1} parent=27 // pred_region
          %s211 = smul.u32 256, %s18
          %s212 = smul.u32 2, %s19
          %s213 = ssub.s32 1568, %s211
          %p214 = scmp.lt.s32.totalorder %s213, 256
          %s215 = scalar_select %p214, %s213, 256
          %s216 = smul.u32 64, %s215
          %s217 = smul.u32 %s216, 2
          %p218 = scmp.lt.s32.totalorder %s211, 1567
          %s219 = scalar_select %p218, %s211, 1567
          %p220 = scmp.lt.s32.totalorder %s212, 1
          %s221 = scalar_select %p220, %s212, 1
          %s222 = smul.addr %s219, 2
          %s223 = sadd.s32 %s221, %s222
          %s224 = smul.addr %s223, 4
          %s225 = scalar_lea.vmem %s0, %s224
          %s226 = smul.u32 256, %s18
          %s227 = smul.u32 2, %s19
          %s228 = ssub.s32 1568, %s226
          %p229 = scmp.lt.s32.totalorder %s228, 256
          %s230 = scalar_select %p229, %s228, 256
          %s231 = smul.u32 64, %s230
          %s232 = smul.u32 %s231, 2
        $region32: #{pallas_matmul.1} parent=27 // pred_fallthru
          _
      $region28: #{pallas_matmul.1} parent=5 // pred_fallthru
        _
      %p233 = scmp.le.s32.totalorder 1, %s10
      %p234 = scmp.lt.s32.totalorder %s10, 8
      %p235 = pnand %p233, %p234
      %p236 = pneg %p235
      // Predicated region
      $region33: #{pallas_matmul.1} parent=5 // pred_check
        _
      $region34: #{pallas_matmul.1} parent=5 // pred_check_branch
        %238 = sbr.rel (%p235) target = $region36
      $region35: #{pallas_matmul.1} parent=5 // pred_region
        %s239 = ssub.s32 %s10, 1
        %s240 = smul.u32 256, %s21
        %s241 = smul.u32 2, %s22
        %s242 = ssub.s32 1568, %s240
        %p243 = scmp.lt.s32.totalorder %s242, 256
        %s244 = scalar_select %p243, %s242, 256
        %s245 = smul.u32 64, %s244
        %s246 = smul.u32 %s245, 2
        %p247 = scmp.lt.s32.totalorder %s240, 1567
        %s248 = scalar_select %p247, %s240, 1567
        %p249 = scmp.lt.s32.totalorder %s241, 1
        %s250 = scalar_select %p249, %s241, 1
        %s251 = smul.addr %s248, 2
        %s252 = sadd.s32 %s250, %s251
        %s253 = smul.addr %s252, 4
        %s254 = scalar_lea.vmem %s0, %s253
        %p255 = pneg %p57
        %p256 = pneg %p54
        %s257 = smul.u32 32, %s22
        %p258 = scmp.lt.s32.totalorder %s257, 31
        %s259 = scalar_select %p258, %s257, 31
        %p260 = scmp.lt.s32.totalorder %s20, 0
        %s261 = scalar_select %p260, %s20, 0
        %s262 = sadd.s32 %s261, %s259
        %s263 = smul.addr %s262, 4
        %s264 = scalar_lea.vmem %s1, %s263
        %p265 = pneg %p85
        %p266 = pneg %p82
        %p267 = scmp.lt.s32.totalorder %s20, 0
        %s268 = scalar_select %p267, %s20, 0
        %s269 = scalar_lea.vmem %s2, %s268
        %p270 = pneg %p111
        %p271 = pneg %p108
        %p272 = scmp.lt.s32.totalorder %s20, 0
        %s273 = scalar_select %p272, %s20, 0
        %s274 = scalar_lea.vmem %s3, %s273
        %p275 = pneg %p137
        %p276 = pneg %p134
        %p277 = pneg %p165
        %p278 = pneg %p162
        %s279 = sand.u32 %s152, 1
        %s280 = sand.u32 %s152, 1
        %s281 = smul.addr %s280, 1024
        %s282 = scalar_lea.vmem [#allocation2], %s281
        %s283 = smul.u32 256, %s21
        %s284 = smul.u32 2, %s22
        %s285 = ssub.s32 1568, %s283
        %p286 = scmp.lt.s32.totalorder %s285, 256
        %s287 = scalar_select %p286, %s285, 256
        %s288 = smul.u32 64, %s287
        %s289 = smul.u32 %s288, 2
        %p290 = scmp.lt.s32.totalorder %s283, 1567
        %s291 = scalar_select %p290, %s283, 1567
        %p292 = scmp.lt.s32.totalorder %s284, 1
        %s293 = scalar_select %p292, %s284, 1
        %s294 = smul.addr %s291, 2
        %s295 = sadd.s32 %s293, %s294
        %s296 = smul.addr %s295, 4
        %s297 = scalar_lea.vmem %s0, %s296
        %s298 = smul.u32 256, %s21
        %s299 = smul.u32 2, %s22
        %s300 = ssub.s32 1568, %s298
        %p301 = scmp.lt.s32.totalorder %s300, 256
        %s302 = scalar_select %p301, %s300, 256
        %s303 = smul.u32 64, %s302
        %s304 = smul.u32 %s303, 2
        %s305 = smul.u32 32, %s22
        %p306 = scmp.lt.s32.totalorder %s305, 31
        %s307 = scalar_select %p306, %s305, 31
        %p308 = scmp.lt.s32.totalorder %s20, 0
        %s309 = scalar_select %p308, %s20, 0
        %s310 = sadd.s32 %s309, %s307
        %s311 = smul.addr %s310, 4
        %s312 = scalar_lea.vmem %s1, %s311
        %s313 = smul.u32 32, %s22
        %p314 = scmp.lt.s32.totalorder %s20, 0
        %s315 = scalar_select %p314, %s20, 0
        %s316 = scalar_lea.vmem %s2, %s315
        %p317 = scmp.lt.s32.totalorder %s20, 0
        %s318 = scalar_select %p317, %s20, 0
        %s319 = scalar_lea.vmem %s3, %s318
        %s320 = smul.u32 256, %s21
        %s321 = ssub.s32 1568, %s320
        %p322 = scmp.lt.s32.totalorder %s321, 256
        %s323 = scalar_select %p322, %s321, 256
        %s324 = smul.u32 64, %s323
        %v326 = vld [vmem:[%s297] sm:$0xff]
        %v327 = vld [vmem:[%s297 + $0x8] sm:$0xff]
        %v328 = vld [vmem:[%s297 + $0x10] sm:$0xff]
        %v329 = vld [vmem:[%s297 + $0x18] sm:$0xff]
        %v330 = vld [vmem:[%s297 + $0x20] sm:$0xff]
        %v331 = vld [vmem:[%s297 + $0x28] sm:$0xff]
        %v332 = vld [vmem:[%s297 + $0x30] sm:$0xff]
        %v333 = vld [vmem:[%s297 + $0x38] sm:$0xff]
        %v334 = vld [vmem:[%s297 + $0x40] sm:$0xff]
        %v335 = vld [vmem:[%s297 + $0x48] sm:$0xff]
        %v336 = vld [vmem:[%s297 + $0x50] sm:$0xff]
        %v337 = vld [vmem:[%s297 + $0x58] sm:$0xff]
        %v338 = vld [vmem:[%s297 + $0x60] sm:$0xff]
        %v339 = vld [vmem:[%s297 + $0x68] sm:$0xff]
        %v340 = vld [vmem:[%s297 + $0x70] sm:$0xff]
        %v341 = vld [vmem:[%s297 + $0x78] sm:$0xff]
        %v342 = vld [vmem:[%s297 + $0x80] sm:$0xff]
        %v343 = vld [vmem:[%s297 + $0x88] sm:$0xff]
        %v344 = vld [vmem:[%s297 + $0x90] sm:$0xff]
        %v345 = vld [vmem:[%s297 + $0x98] sm:$0xff]
        %v346 = vld [vmem:[%s297 + $0xa0] sm:$0xff]
        %v347 = vld [vmem:[%s297 + $0xa8] sm:$0xff]
        %v348 = vld [vmem:[%s297 + $0xb0] sm:$0xff]
        %v349 = vld [vmem:[%s297 + $0xb8] sm:$0xff]
        %v350 = vld [vmem:[%s297 + $0xc0] sm:$0xff]
        %v351 = vld [vmem:[%s297 + $0xc8] sm:$0xff]
        %v352 = vld [vmem:[%s297 + $0xd0] sm:$0xff]
        %v353 = vld [vmem:[%s297 + $0xd8] sm:$0xff]
        %v354 = vld [vmem:[%s297 + $0xe0] sm:$0xff]
        %v355 = vld [vmem:[%s297 + $0xe8] sm:$0xff]
        %v356 = vld [vmem:[%s297 + $0xf0] sm:$0xff]
        %v357 = vld [vmem:[%s297 + $0xf8] sm:$0xff]
        %v358 = vld [vmem:[%s297 + $0x100] sm:$0xff]
        %v359 = vld [vmem:[%s297 + $0x108] sm:$0xff]
        %v360 = vld [vmem:[%s297 + $0x110] sm:$0xff]
        %v361 = vld [vmem:[%s297 + $0x118] sm:$0xff]
        %v362 = vld [vmem:[%s297 + $0x120] sm:$0xff]
        %v363 = vld [vmem:[%s297 + $0x128] sm:$0xff]
        %v364 = vld [vmem:[%s297 + $0x130] sm:$0xff]
        %v365 = vld [vmem:[%s297 + $0x138] sm:$0xff]
        %v366 = vld [vmem:[%s297 + $0x140] sm:$0xff]
        %v367 = vld [vmem:[%s297 + $0x148] sm:$0xff]
        %v368 = vld [vmem:[%s297 + $0x150] sm:$0xff]
        %v369 = vld [vmem:[%s297 + $0x158] sm:$0xff]
        %v370 = vld [vmem:[%s297 + $0x160] sm:$0xff]
        %v371 = vld [vmem:[%s297 + $0x168] sm:$0xff]
        %v372 = vld [vmem:[%s297 + $0x170] sm:$0xff]
        %v373 = vld [vmem:[%s297 + $0x178] sm:$0xff]
        %v374 = vld [vmem:[%s297 + $0x180] sm:$0xff]
        %v375 = vld [vmem:[%s297 + $0x188] sm:$0xff]
        %v376 = vld [vmem:[%s297 + $0x190] sm:$0xff]
        %v377 = vld [vmem:[%s297 + $0x198] sm:$0xff]
        %v378 = vld [vmem:[%s297 + $0x1a0] sm:$0xff]
        %v379 = vld [vmem:[%s297 + $0x1a8] sm:$0xff]
        %v380 = vld [vmem:[%s297 + $0x1b0] sm:$0xff]
        %v381 = vld [vmem:[%s297 + $0x1b8] sm:$0xff]
        %v382 = vld [vmem:[%s297 + $0x1c0] sm:$0xff]
        %v383 = vld [vmem:[%s297 + $0x1c8] sm:$0xff]
        %v384 = vld [vmem:[%s297 + $0x1d0] sm:$0xff]
        %v385 = vld [vmem:[%s297 + $0x1d8] sm:$0xff]
        %v386 = vld [vmem:[%s297 + $0x1e0] sm:$0xff]
        %v387 = vld [vmem:[%s297 + $0x1e8] sm:$0xff]
        %v388 = vld [vmem:[%s297 + $0x1f0] sm:$0xff]
        %v389 = vld [vmem:[%s297 + $0x1f8] sm:$0xff]
        %v390 = vld [vmem:[%s297 + $0x200] sm:$0xff]
        %v391 = vld [vmem:[%s297 + $0x208] sm:$0xff]
        %v392 = vld [vmem:[%s297 + $0x210] sm:$0xff]
        %v393 = vld [vmem:[%s297 + $0x218] sm:$0xff]
        %v394 = vld [vmem:[%s297 + $0x220] sm:$0xff]
        %v395 = vld [vmem:[%s297 + $0x228] sm:$0xff]
        %v396 = vld [vmem:[%s297 + $0x230] sm:$0xff]
        %v397 = vld [vmem:[%s297 + $0x238] sm:$0xff]
        %v398 = vld [vmem:[%s297 + $0x240] sm:$0xff]
        %v399 = vld [vmem:[%s297 + $0x248] sm:$0xff]
        %v400 = vld [vmem:[%s297 + $0x250] sm:$0xff]
        %v401 = vld [vmem:[%s297 + $0x258] sm:$0xff]
        %v402 = vld [vmem:[%s297 + $0x260] sm:$0xff]
        %v403 = vld [vmem:[%s297 + $0x268] sm:$0xff]
        %v404 = vld [vmem:[%s297 + $0x270] sm:$0xff]
        %v405 = vld [vmem:[%s297 + $0x278] sm:$0xff]
        %v406 = vld [vmem:[%s297 + $0x280] sm:$0xff]
        %v407 = vld [vmem:[%s297 + $0x288] sm:$0xff]
        %v408 = vld [vmem:[%s297 + $0x290] sm:$0xff]
        %v409 = vld [vmem:[%s297 + $0x298] sm:$0xff]
        %v410 = vld [vmem:[%s297 + $0x2a0] sm:$0xff]
        %v411 = vld [vmem:[%s297 + $0x2a8] sm:$0xff]
        %v412 = vld [vmem:[%s297 + $0x2b0] sm:$0xff]
        %v413 = vld [vmem:[%s297 + $0x2b8] sm:$0xff]
        %v414 = vld [vmem:[%s297 + $0x2c0] sm:$0xff]
        %v415 = vld [vmem:[%s297 + $0x2c8] sm:$0xff]
        %v416 = vld [vmem:[%s297 + $0x2d0] sm:$0xff]
        %v417 = vld [vmem:[%s297 + $0x2d8] sm:$0xff]
        %v418 = vld [vmem:[%s297 + $0x2e0] sm:$0xff]
        %v419 = vld [vmem:[%s297 + $0x2e8] sm:$0xff]
        %v420 = vld [vmem:[%s297 + $0x2f0] sm:$0xff]
        %v421 = vld [vmem:[%s297 + $0x2f8] sm:$0xff]
        %v422 = vld [vmem:[%s297 + $0x300] sm:$0xff]
        %v423 = vld [vmem:[%s297 + $0x308] sm:$0xff]
        %v424 = vld [vmem:[%s297 + $0x310] sm:$0xff]
        %v425 = vld [vmem:[%s297 + $0x318] sm:$0xff]
        %v426 = vld [vmem:[%s297 + $0x320] sm:$0xff]
        %v427 = vld [vmem:[%s297 + $0x328] sm:$0xff]
        %v428 = vld [vmem:[%s297 + $0x330] sm:$0xff]
        %v429 = vld [vmem:[%s297 + $0x338] sm:$0xff]
        %v430 = vld [vmem:[%s297 + $0x340] sm:$0xff]
        %v431 = vld [vmem:[%s297 + $0x348] sm:$0xff]
        %v432 = vld [vmem:[%s297 + $0x350] sm:$0xff]
        %v433 = vld [vmem:[%s297 + $0x358] sm:$0xff]
        %v434 = vld [vmem:[%s297 + $0x360] sm:$0xff]
        %v435 = vld [vmem:[%s297 + $0x368] sm:$0xff]
        %v436 = vld [vmem:[%s297 + $0x370] sm:$0xff]
        %v437 = vld [vmem:[%s297 + $0x378] sm:$0xff]
        %v438 = vld [vmem:[%s297 + $0x380] sm:$0xff]
        %v439 = vld [vmem:[%s297 + $0x388] sm:$0xff]
        %v440 = vld [vmem:[%s297 + $0x390] sm:$0xff]
        %v441 = vld [vmem:[%s297 + $0x398] sm:$0xff]
        %v442 = vld [vmem:[%s297 + $0x3a0] sm:$0xff]
        %v443 = vld [vmem:[%s297 + $0x3a8] sm:$0xff]
        %v444 = vld [vmem:[%s297 + $0x3b0] sm:$0xff]
        %v445 = vld [vmem:[%s297 + $0x3b8] sm:$0xff]
        %v446 = vld [vmem:[%s297 + $0x3c0] sm:$0xff]
        %v447 = vld [vmem:[%s297 + $0x3c8] sm:$0xff]
        %v448 = vld [vmem:[%s297 + $0x3d0] sm:$0xff]
        %v449 = vld [vmem:[%s297 + $0x3d8] sm:$0xff]
        %v450 = vld [vmem:[%s297 + $0x3e0] sm:$0xff]
        %v451 = vld [vmem:[%s297 + $0x3e8] sm:$0xff]
        %v452 = vld [vmem:[%s297 + $0x3f0] sm:$0xff]
        %v453 = vld [vmem:[%s297 + $0x3f8] sm:$0xff]
        %v454 = vld [vmem:[%s297 + $0x400] sm:$0xff]
        %v455 = vld [vmem:[%s297 + $0x408] sm:$0xff]
        %v456 = vld [vmem:[%s297 + $0x410] sm:$0xff]
        %v457 = vld [vmem:[%s297 + $0x418] sm:$0xff]
        %v458 = vld [vmem:[%s297 + $0x420] sm:$0xff]
        %v459 = vld [vmem:[%s297 + $0x428] sm:$0xff]
        %v460 = vld [vmem:[%s297 + $0x430] sm:$0xff]
        %v461 = vld [vmem:[%s297 + $0x438] sm:$0xff]
        %v462 = vld [vmem:[%s297 + $0x440] sm:$0xff]
        %v463 = vld [vmem:[%s297 + $0x448] sm:$0xff]
        %v464 = vld [vmem:[%s297 + $0x450] sm:$0xff]
        %v465 = vld [vmem:[%s297 + $0x458] sm:$0xff]
        %v466 = vld [vmem:[%s297 + $0x460] sm:$0xff]
        %v467 = vld [vmem:[%s297 + $0x468] sm:$0xff]
        %v468 = vld [vmem:[%s297 + $0x470] sm:$0xff]
        %v469 = vld [vmem:[%s297 + $0x478] sm:$0xff]
        %v470 = vld [vmem:[%s297 + $0x480] sm:$0xff]
        %v471 = vld [vmem:[%s297 + $0x488] sm:$0xff]
        %v472 = vld [vmem:[%s297 + $0x490] sm:$0xff]
        %v473 = vld [vmem:[%s297 + $0x498] sm:$0xff]
        %v474 = vld [vmem:[%s297 + $0x4a0] sm:$0xff]
        %v475 = vld [vmem:[%s297 + $0x4a8] sm:$0xff]
        %v476 = vld [vmem:[%s297 + $0x4b0] sm:$0xff]
        %v477 = vld [vmem:[%s297 + $0x4b8] sm:$0xff]
        %v478 = vld [vmem:[%s297 + $0x4c0] sm:$0xff]
        %v479 = vld [vmem:[%s297 + $0x4c8] sm:$0xff]
        %v480 = vld [vmem:[%s297 + $0x4d0] sm:$0xff]
        %v481 = vld [vmem:[%s297 + $0x4d8] sm:$0xff]
        %v482 = vld [vmem:[%s297 + $0x4e0] sm:$0xff]
        %v483 = vld [vmem:[%s297 + $0x4e8] sm:$0xff]
        %v484 = vld [vmem:[%s297 + $0x4f0] sm:$0xff]
        %v485 = vld [vmem:[%s297 + $0x4f8] sm:$0xff]
        %v486 = vld [vmem:[%s297 + $0x500] sm:$0xff]
        %v487 = vld [vmem:[%s297 + $0x508] sm:$0xff]
        %v488 = vld [vmem:[%s297 + $0x510] sm:$0xff]
        %v489 = vld [vmem:[%s297 + $0x518] sm:$0xff]
        %v490 = vld [vmem:[%s297 + $0x520] sm:$0xff]
        %v491 = vld [vmem:[%s297 + $0x528] sm:$0xff]
        %v492 = vld [vmem:[%s297 + $0x530] sm:$0xff]
        %v493 = vld [vmem:[%s297 + $0x538] sm:$0xff]
        %v494 = vld [vmem:[%s297 + $0x540] sm:$0xff]
        %v495 = vld [vmem:[%s297 + $0x548] sm:$0xff]
        %v496 = vld [vmem:[%s297 + $0x550] sm:$0xff]
        %v497 = vld [vmem:[%s297 + $0x558] sm:$0xff]
        %v498 = vld [vmem:[%s297 + $0x560] sm:$0xff]
        %v499 = vld [vmem:[%s297 + $0x568] sm:$0xff]
        %v500 = vld [vmem:[%s297 + $0x570] sm:$0xff]
        %v501 = vld [vmem:[%s297 + $0x578] sm:$0xff]
        %v502 = vld [vmem:[%s297 + $0x580] sm:$0xff]
        %v503 = vld [vmem:[%s297 + $0x588] sm:$0xff]
        %v504 = vld [vmem:[%s297 + $0x590] sm:$0xff]
        %v505 = vld [vmem:[%s297 + $0x598] sm:$0xff]
        %v506 = vld [vmem:[%s297 + $0x5a0] sm:$0xff]
        %v507 = vld [vmem:[%s297 + $0x5a8] sm:$0xff]
        %v508 = vld [vmem:[%s297 + $0x5b0] sm:$0xff]
        %v509 = vld [vmem:[%s297 + $0x5b8] sm:$0xff]
        %v510 = vld [vmem:[%s297 + $0x5c0] sm:$0xff]
        %v511 = vld [vmem:[%s297 + $0x5c8] sm:$0xff]
        %v512 = vld [vmem:[%s297 + $0x5d0] sm:$0xff]
        %v513 = vld [vmem:[%s297 + $0x5d8] sm:$0xff]
        %v514 = vld [vmem:[%s297 + $0x5e0] sm:$0xff]
        %v515 = vld [vmem:[%s297 + $0x5e8] sm:$0xff]
        %v516 = vld [vmem:[%s297 + $0x5f0] sm:$0xff]
        %v517 = vld [vmem:[%s297 + $0x5f8] sm:$0xff]
        %v518 = vld [vmem:[%s297 + $0x600] sm:$0xff]
        %v519 = vld [vmem:[%s297 + $0x608] sm:$0xff]
        %v520 = vld [vmem:[%s297 + $0x610] sm:$0xff]
        %v521 = vld [vmem:[%s297 + $0x618] sm:$0xff]
        %v522 = vld [vmem:[%s297 + $0x620] sm:$0xff]
        %v523 = vld [vmem:[%s297 + $0x628] sm:$0xff]
        %v524 = vld [vmem:[%s297 + $0x630] sm:$0xff]
        %v525 = vld [vmem:[%s297 + $0x638] sm:$0xff]
        %v526 = vld [vmem:[%s297 + $0x640] sm:$0xff]
        %v527 = vld [vmem:[%s297 + $0x648] sm:$0xff]
        %v528 = vld [vmem:[%s297 + $0x650] sm:$0xff]
        %v529 = vld [vmem:[%s297 + $0x658] sm:$0xff]
        %v530 = vld [vmem:[%s297 + $0x660] sm:$0xff]
        %v531 = vld [vmem:[%s297 + $0x668] sm:$0xff]
        %v532 = vld [vmem:[%s297 + $0x670] sm:$0xff]
        %v533 = vld [vmem:[%s297 + $0x678] sm:$0xff]
        %v534 = vld [vmem:[%s297 + $0x680] sm:$0xff]
        %v535 = vld [vmem:[%s297 + $0x688] sm:$0xff]
        %v536 = vld [vmem:[%s297 + $0x690] sm:$0xff]
        %v537 = vld [vmem:[%s297 + $0x698] sm:$0xff]
        %v538 = vld [vmem:[%s297 + $0x6a0] sm:$0xff]
        %v539 = vld [vmem:[%s297 + $0x6a8] sm:$0xff]
        %v540 = vld [vmem:[%s297 + $0x6b0] sm:$0xff]
        %v541 = vld [vmem:[%s297 + $0x6b8] sm:$0xff]
        %v542 = vld [vmem:[%s297 + $0x6c0] sm:$0xff]
        %v543 = vld [vmem:[%s297 + $0x6c8] sm:$0xff]
        %v544 = vld [vmem:[%s297 + $0x6d0] sm:$0xff]
        %v545 = vld [vmem:[%s297 + $0x6d8] sm:$0xff]
        %v546 = vld [vmem:[%s297 + $0x6e0] sm:$0xff]
        %v547 = vld [vmem:[%s297 + $0x6e8] sm:$0xff]
        %v548 = vld [vmem:[%s297 + $0x6f0] sm:$0xff]
        %v549 = vld [vmem:[%s297 + $0x6f8] sm:$0xff]
        %v550 = vld [vmem:[%s297 + $0x700] sm:$0xff]
        %v551 = vld [vmem:[%s297 + $0x708] sm:$0xff]
        %v552 = vld [vmem:[%s297 + $0x710] sm:$0xff]
        %v553 = vld [vmem:[%s297 + $0x718] sm:$0xff]
        %v554 = vld [vmem:[%s297 + $0x720] sm:$0xff]
        %v555 = vld [vmem:[%s297 + $0x728] sm:$0xff]
        %v556 = vld [vmem:[%s297 + $0x730] sm:$0xff]
        %v557 = vld [vmem:[%s297 + $0x738] sm:$0xff]
        %v558 = vld [vmem:[%s297 + $0x740] sm:$0xff]
        %v559 = vld [vmem:[%s297 + $0x748] sm:$0xff]
        %v560 = vld [vmem:[%s297 + $0x750] sm:$0xff]
        %v561 = vld [vmem:[%s297 + $0x758] sm:$0xff]
        %v562 = vld [vmem:[%s297 + $0x760] sm:$0xff]
        %v563 = vld [vmem:[%s297 + $0x768] sm:$0xff]
        %v564 = vld [vmem:[%s297 + $0x770] sm:$0xff]
        %v565 = vld [vmem:[%s297 + $0x778] sm:$0xff]
        %v566 = vld [vmem:[%s297 + $0x780] sm:$0xff]
        %v567 = vld [vmem:[%s297 + $0x788] sm:$0xff]
        %v568 = vld [vmem:[%s297 + $0x790] sm:$0xff]
        %v569 = vld [vmem:[%s297 + $0x798] sm:$0xff]
        %v570 = vld [vmem:[%s297 + $0x7a0] sm:$0xff]
        %v571 = vld [vmem:[%s297 + $0x7a8] sm:$0xff]
        %v572 = vld [vmem:[%s297 + $0x7b0] sm:$0xff]
        %v573 = vld [vmem:[%s297 + $0x7b8] sm:$0xff]
        %v574 = vld [vmem:[%s297 + $0x7c0] sm:$0xff]
        %v575 = vld [vmem:[%s297 + $0x7c8] sm:$0xff]
        %v576 = vld [vmem:[%s297 + $0x7d0] sm:$0xff]
        %v577 = vld [vmem:[%s297 + $0x7d8] sm:$0xff]
        %v578 = vld [vmem:[%s297 + $0x7e0] sm:$0xff]
        %v579 = vld [vmem:[%s297 + $0x7e8] sm:$0xff]
        %v580 = vld [vmem:[%s297 + $0x7f0] sm:$0xff]
        %v581 = vld [vmem:[%s297 + $0x7f8] sm:$0xff]
        %v582 = vld [vmem:[%s312] sm:$0xf]
        %v583 = vld [vmem:[%s312 + $0x4] sm:$0xf]
        %v584 = vld [vmem:[%s312 + $0x8] sm:$0xf]
        %v585 = vld [vmem:[%s312 + $0xc] sm:$0xf]
        %v586 = vld [vmem:[%s312 + $0x10] sm:$0xf]
        %v587 = vld [vmem:[%s312 + $0x14] sm:$0xf]
        %v588 = vld [vmem:[%s312 + $0x18] sm:$0xf]
        %v589 = vld [vmem:[%s312 + $0x1c] sm:$0xf]
        %v590 = vld [vmem:[%s312 + $0x20] sm:$0xf]
        %v591 = vld [vmem:[%s312 + $0x24] sm:$0xf]
        %v592 = vld [vmem:[%s312 + $0x28] sm:$0xf]
        %v593 = vld [vmem:[%s312 + $0x2c] sm:$0xf]
        %v594 = vld [vmem:[%s312 + $0x30] sm:$0xf]
        %v595 = vld [vmem:[%s312 + $0x34] sm:$0xf]
        %v596 = vld [vmem:[%s312 + $0x38] sm:$0xf]
        %v597 = vld [vmem:[%s312 + $0x3c] sm:$0xf]
        %v598 = vld [vmem:[%s312 + $0x40] sm:$0xf]
        %v599 = vld [vmem:[%s312 + $0x44] sm:$0xf]
        %v600 = vld [vmem:[%s312 + $0x48] sm:$0xf]
        %v601 = vld [vmem:[%s312 + $0x4c] sm:$0xf]
        %v602 = vld [vmem:[%s312 + $0x50] sm:$0xf]
        %v603 = vld [vmem:[%s312 + $0x54] sm:$0xf]
        %v604 = vld [vmem:[%s312 + $0x58] sm:$0xf]
        %v605 = vld [vmem:[%s312 + $0x5c] sm:$0xf]
        %v606 = vld [vmem:[%s312 + $0x60] sm:$0xf]
        %v607 = vld [vmem:[%s312 + $0x64] sm:$0xf]
        %v608 = vld [vmem:[%s312 + $0x68] sm:$0xf]
        %v609 = vld [vmem:[%s312 + $0x6c] sm:$0xf]
        %v610 = vld [vmem:[%s312 + $0x70] sm:$0xf]
        %v611 = vld [vmem:[%s312 + $0x74] sm:$0xf]
        %v612 = vld [vmem:[%s312 + $0x78] sm:$0xf]
        %v613 = vld [vmem:[%s312 + $0x7c] sm:$0xf]
        %v870 = vunpack.c.l.b16 %v326
        %v871 = vunpack.c.h.b16 %v326
        %v872 = vunpack.c.l.b16 %v327
        %v873 = vunpack.c.h.b16 %v327
        %v874 = vunpack.c.l.b16 %v328
        %v875 = vunpack.c.h.b16 %v328
        %v876 = vunpack.c.l.b16 %v329
        %v877 = vunpack.c.h.b16 %v329
        %v878 = vunpack.c.l.b16 %v330
        %v879 = vunpack.c.h.b16 %v330
        %v880 = vunpack.c.l.b16 %v331
        %v881 = vunpack.c.h.b16 %v331
        %v882 = vunpack.c.l.b16 %v332
        %v883 = vunpack.c.h.b16 %v332
        %v884 = vunpack.c.l.b16 %v333
        %v885 = vunpack.c.h.b16 %v333
        %v886 = vunpack.c.l.b16 %v334
        %v887 = vunpack.c.h.b16 %v334
        %v888 = vunpack.c.l.b16 %v335
        %v889 = vunpack.c.h.b16 %v335
        %v890 = vunpack.c.l.b16 %v336
        %v891 = vunpack.c.h.b16 %v336
        %v892 = vunpack.c.l.b16 %v337
        %v893 = vunpack.c.h.b16 %v337
        %v894 = vunpack.c.l.b16 %v338
        %v895 = vunpack.c.h.b16 %v338
        %v896 = vunpack.c.l.b16 %v339
        %v897 = vunpack.c.h.b16 %v339
        %v898 = vunpack.c.l.b16 %v340
        %v899 = vunpack.c.h.b16 %v340
        %v900 = vunpack.c.l.b16 %v341
        %v901 = vunpack.c.h.b16 %v341
        %v902 = vunpack.c.l.b16 %v342
        %v903 = vunpack.c.h.b16 %v342
        %v904 = vunpack.c.l.b16 %v343
        %v905 = vunpack.c.h.b16 %v343
        %v906 = vunpack.c.l.b16 %v344
        %v907 = vunpack.c.h.b16 %v344
        %v908 = vunpack.c.l.b16 %v345
        %v909 = vunpack.c.h.b16 %v345
        %v910 = vunpack.c.l.b16 %v346
        %v911 = vunpack.c.h.b16 %v346
        %v912 = vunpack.c.l.b16 %v347
        %v913 = vunpack.c.h.b16 %v347
        %v914 = vunpack.c.l.b16 %v348
        %v915 = vunpack.c.h.b16 %v348
        %v916 = vunpack.c.l.b16 %v349
        %v917 = vunpack.c.h.b16 %v349
        %v918 = vunpack.c.l.b16 %v350
        %v919 = vunpack.c.h.b16 %v350
        %v920 = vunpack.c.l.b16 %v351
        %v921 = vunpack.c.h.b16 %v351
        %v922 = vunpack.c.l.b16 %v352
        %v923 = vunpack.c.h.b16 %v352
        %v924 = vunpack.c.l.b16 %v353
        %v925 = vunpack.c.h.b16 %v353
        %v926 = vunpack.c.l.b16 %v354
        %v927 = vunpack.c.h.b16 %v354
        %v928 = vunpack.c.l.b16 %v355
        %v929 = vunpack.c.h.b16 %v355
        %v930 = vunpack.c.l.b16 %v356
        %v931 = vunpack.c.h.b16 %v356
        %v932 = vunpack.c.l.b16 %v357
        %v933 = vunpack.c.h.b16 %v357
        %v934 = vunpack.c.l.b16 %v358
        %v935 = vunpack.c.h.b16 %v358
        %v936 = vunpack.c.l.b16 %v359
        %v937 = vunpack.c.h.b16 %v359
        %v938 = vunpack.c.l.b16 %v360
        %v939 = vunpack.c.h.b16 %v360
        %v940 = vunpack.c.l.b16 %v361
        %v941 = vunpack.c.h.b16 %v361
        %v942 = vunpack.c.l.b16 %v362
        %v943 = vunpack.c.h.b16 %v362
        %v944 = vunpack.c.l.b16 %v363
        %v945 = vunpack.c.h.b16 %v363
        %v946 = vunpack.c.l.b16 %v364
        %v947 = vunpack.c.h.b16 %v364
        %v948 = vunpack.c.l.b16 %v365
        %v949 = vunpack.c.h.b16 %v365
        %v950 = vunpack.c.l.b16 %v366
        %v951 = vunpack.c.h.b16 %v366
        %v952 = vunpack.c.l.b16 %v367
        %v953 = vunpack.c.h.b16 %v367
        %v954 = vunpack.c.l.b16 %v368
        %v955 = vunpack.c.h.b16 %v368
        %v956 = vunpack.c.l.b16 %v369
        %v957 = vunpack.c.h.b16 %v369
        %v958 = vunpack.c.l.b16 %v370
        %v959 = vunpack.c.h.b16 %v370
        %v960 = vunpack.c.l.b16 %v371
        %v961 = vunpack.c.h.b16 %v371
        %v962 = vunpack.c.l.b16 %v372
        %v963 = vunpack.c.h.b16 %v372
        %v964 = vunpack.c.l.b16 %v373
        %v965 = vunpack.c.h.b16 %v373
        %v966 = vunpack.c.l.b16 %v374
        %v967 = vunpack.c.h.b16 %v374
        %v968 = vunpack.c.l.b16 %v375
        %v969 = vunpack.c.h.b16 %v375
        %v970 = vunpack.c.l.b16 %v376
        %v971 = vunpack.c.h.b16 %v376
        %v972 = vunpack.c.l.b16 %v377
        %v973 = vunpack.c.h.b16 %v377
        %v974 = vunpack.c.l.b16 %v378
        %v975 = vunpack.c.h.b16 %v378
        %v976 = vunpack.c.l.b16 %v379
        %v977 = vunpack.c.h.b16 %v379
        %v978 = vunpack.c.l.b16 %v380
        %v979 = vunpack.c.h.b16 %v380
        %v980 = vunpack.c.l.b16 %v381
        %v981 = vunpack.c.h.b16 %v381
        %v982 = vunpack.c.l.b16 %v382
        %v983 = vunpack.c.h.b16 %v382
        %v984 = vunpack.c.l.b16 %v383
        %v985 = vunpack.c.h.b16 %v383
        %v986 = vunpack.c.l.b16 %v384
        %v987 = vunpack.c.h.b16 %v384
        %v988 = vunpack.c.l.b16 %v385
        %v989 = vunpack.c.h.b16 %v385
        %v990 = vunpack.c.l.b16 %v386
        %v991 = vunpack.c.h.b16 %v386
        %v992 = vunpack.c.l.b16 %v387
        %v993 = vunpack.c.h.b16 %v387
        %v994 = vunpack.c.l.b16 %v388
        %v995 = vunpack.c.h.b16 %v388
        %v996 = vunpack.c.l.b16 %v389
        %v997 = vunpack.c.h.b16 %v389
        %v998 = vunpack.c.l.b16 %v390
        %v999 = vunpack.c.h.b16 %v390
        %v1000 = vunpack.c.l.b16 %v391
        %v1001 = vunpack.c.h.b16 %v391
        %v1002 = vunpack.c.l.b16 %v392
        %v1003 = vunpack.c.h.b16 %v392
        %v1004 = vunpack.c.l.b16 %v393
        %v1005 = vunpack.c.h.b16 %v393
        %v1006 = vunpack.c.l.b16 %v394
        %v1007 = vunpack.c.h.b16 %v394
        %v1008 = vunpack.c.l.b16 %v395
        %v1009 = vunpack.c.h.b16 %v395
        %v1010 = vunpack.c.l.b16 %v396
        %v1011 = vunpack.c.h.b16 %v396
        %v1012 = vunpack.c.l.b16 %v397
        %v1013 = vunpack.c.h.b16 %v397
        %v1014 = vunpack.c.l.b16 %v398
        %v1015 = vunpack.c.h.b16 %v398
        %v1016 = vunpack.c.l.b16 %v399
        %v1017 = vunpack.c.h.b16 %v399
        %v1018 = vunpack.c.l.b16 %v400
        %v1019 = vunpack.c.h.b16 %v400
        %v1020 = vunpack.c.l.b16 %v401
        %v1021 = vunpack.c.h.b16 %v401
        %v1022 = vunpack.c.l.b16 %v402
        %v1023 = vunpack.c.h.b16 %v402
        %v1024 = vunpack.c.l.b16 %v403
        %v1025 = vunpack.c.h.b16 %v403
        %v1026 = vunpack.c.l.b16 %v404
        %v1027 = vunpack.c.h.b16 %v404
        %v1028 = vunpack.c.l.b16 %v405
        %v1029 = vunpack.c.h.b16 %v405
        %v1030 = vunpack.c.l.b16 %v406
        %v1031 = vunpack.c.h.b16 %v406
        %v1032 = vunpack.c.l.b16 %v407
        %v1033 = vunpack.c.h.b16 %v407
        %v1034 = vunpack.c.l.b16 %v408
        %v1035 = vunpack.c.h.b16 %v408
        %v1036 = vunpack.c.l.b16 %v409
        %v1037 = vunpack.c.h.b16 %v409
        %v1038 = vunpack.c.l.b16 %v410
        %v1039 = vunpack.c.h.b16 %v410
        %v1040 = vunpack.c.l.b16 %v411
        %v1041 = vunpack.c.h.b16 %v411
        %v1042 = vunpack.c.l.b16 %v412
        %v1043 = vunpack.c.h.b16 %v412
        %v1044 = vunpack.c.l.b16 %v413
        %v1045 = vunpack.c.h.b16 %v413
        %v1046 = vunpack.c.l.b16 %v414
        %v1047 = vunpack.c.h.b16 %v414
        %v1048 = vunpack.c.l.b16 %v415
        %v1049 = vunpack.c.h.b16 %v415
        %v1050 = vunpack.c.l.b16 %v416
        %v1051 = vunpack.c.h.b16 %v416
        %v1052 = vunpack.c.l.b16 %v417
        %v1053 = vunpack.c.h.b16 %v417
        %v1054 = vunpack.c.l.b16 %v418
        %v1055 = vunpack.c.h.b16 %v418
        %v1056 = vunpack.c.l.b16 %v419
        %v1057 = vunpack.c.h.b16 %v419
        %v1058 = vunpack.c.l.b16 %v420
        %v1059 = vunpack.c.h.b16 %v420
        %v1060 = vunpack.c.l.b16 %v421
        %v1061 = vunpack.c.h.b16 %v421
        %v1062 = vunpack.c.l.b16 %v422
        %v1063 = vunpack.c.h.b16 %v422
        %v1064 = vunpack.c.l.b16 %v423
        %v1065 = vunpack.c.h.b16 %v423
        %v1066 = vunpack.c.l.b16 %v424
        %v1067 = vunpack.c.h.b16 %v424
        %v1068 = vunpack.c.l.b16 %v425
        %v1069 = vunpack.c.h.b16 %v425
        %v1070 = vunpack.c.l.b16 %v426
        %v1071 = vunpack.c.h.b16 %v426
        %v1072 = vunpack.c.l.b16 %v427
        %v1073 = vunpack.c.h.b16 %v427
        %v1074 = vunpack.c.l.b16 %v428
        %v1075 = vunpack.c.h.b16 %v428
        %v1076 = vunpack.c.l.b16 %v429
        %v1077 = vunpack.c.h.b16 %v429
        %v1078 = vunpack.c.l.b16 %v430
        %v1079 = vunpack.c.h.b16 %v430
        %v1080 = vunpack.c.l.b16 %v431
        %v1081 = vunpack.c.h.b16 %v431
        %v1082 = vunpack.c.l.b16 %v432
        %v1083 = vunpack.c.h.b16 %v432
        %v1084 = vunpack.c.l.b16 %v433
        %v1085 = vunpack.c.h.b16 %v433
        %v1086 = vunpack.c.l.b16 %v434
        %v1087 = vunpack.c.h.b16 %v434
        %v1088 = vunpack.c.l.b16 %v435
        %v1089 = vunpack.c.h.b16 %v435
        %v1090 = vunpack.c.l.b16 %v436
        %v1091 = vunpack.c.h.b16 %v436
        %v1092 = vunpack.c.l.b16 %v437
        %v1093 = vunpack.c.h.b16 %v437
        %v1094 = vunpack.c.l.b16 %v438
        %v1095 = vunpack.c.h.b16 %v438
        %v1096 = vunpack.c.l.b16 %v439
        %v1097 = vunpack.c.h.b16 %v439
        %v1098 = vunpack.c.l.b16 %v440
        %v1099 = vunpack.c.h.b16 %v440
        %v1100 = vunpack.c.l.b16 %v441
        %v1101 = vunpack.c.h.b16 %v441
        %v1102 = vunpack.c.l.b16 %v442
        %v1103 = vunpack.c.h.b16 %v442
        %v1104 = vunpack.c.l.b16 %v443
        %v1105 = vunpack.c.h.b16 %v443
        %v1106 = vunpack.c.l.b16 %v444
        %v1107 = vunpack.c.h.b16 %v444
        %v1108 = vunpack.c.l.b16 %v445
        %v1109 = vunpack.c.h.b16 %v445
        %v1110 = vunpack.c.l.b16 %v446
        %v1111 = vunpack.c.h.b16 %v446
        %v1112 = vunpack.c.l.b16 %v447
        %v1113 = vunpack.c.h.b16 %v447
        %v1114 = vunpack.c.l.b16 %v448
        %v1115 = vunpack.c.h.b16 %v448
        %v1116 = vunpack.c.l.b16 %v449
        %v1117 = vunpack.c.h.b16 %v449
        %v1118 = vunpack.c.l.b16 %v450
        %v1119 = vunpack.c.h.b16 %v450
        %v1120 = vunpack.c.l.b16 %v451
        %v1121 = vunpack.c.h.b16 %v451
        %v1122 = vunpack.c.l.b16 %v452
        %v1123 = vunpack.c.h.b16 %v452
        %v1124 = vunpack.c.l.b16 %v453
        %v1125 = vunpack.c.h.b16 %v453
        %v1126 = vunpack.c.l.b16 %v454
        %v1127 = vunpack.c.h.b16 %v454
        %v1128 = vunpack.c.l.b16 %v455
        %v1129 = vunpack.c.h.b16 %v455
        %v1130 = vunpack.c.l.b16 %v456
        %v1131 = vunpack.c.h.b16 %v456
        %v1132 = vunpack.c.l.b16 %v457
        %v1133 = vunpack.c.h.b16 %v457
        %v1134 = vunpack.c.l.b16 %v458
        %v1135 = vunpack.c.h.b16 %v458
        %v1136 = vunpack.c.l.b16 %v459
        %v1137 = vunpack.c.h.b16 %v459
        %v1138 = vunpack.c.l.b16 %v460
        %v1139 = vunpack.c.h.b16 %v460
        %v1140 = vunpack.c.l.b16 %v461
        %v1141 = vunpack.c.h.b16 %v461
        %v1142 = vunpack.c.l.b16 %v462
        %v1143 = vunpack.c.h.b16 %v462
        %v1144 = vunpack.c.l.b16 %v463
        %v1145 = vunpack.c.h.b16 %v463
        %v1146 = vunpack.c.l.b16 %v464
        %v1147 = vunpack.c.h.b16 %v464
        %v1148 = vunpack.c.l.b16 %v465
        %v1149 = vunpack.c.h.b16 %v465
        %v1150 = vunpack.c.l.b16 %v466
        %v1151 = vunpack.c.h.b16 %v466
        %v1152 = vunpack.c.l.b16 %v467
        %v1153 = vunpack.c.h.b16 %v467
        %v1154 = vunpack.c.l.b16 %v468
        %v1155 = vunpack.c.h.b16 %v468
        %v1156 = vunpack.c.l.b16 %v469
        %v1157 = vunpack.c.h.b16 %v469
        %v1158 = vunpack.c.l.b16 %v470
        %v1159 = vunpack.c.h.b16 %v470
        %v1160 = vunpack.c.l.b16 %v471
        %v1161 = vunpack.c.h.b16 %v471
        %v1162 = vunpack.c.l.b16 %v472
        %v1163 = vunpack.c.h.b16 %v472
        %v1164 = vunpack.c.l.b16 %v473
        %v1165 = vunpack.c.h.b16 %v473
        %v1166 = vunpack.c.l.b16 %v474
        %v1167 = vunpack.c.h.b16 %v474
        %v1168 = vunpack.c.l.b16 %v475
        %v1169 = vunpack.c.h.b16 %v475
        %v1170 = vunpack.c.l.b16 %v476
        %v1171 = vunpack.c.h.b16 %v476
        %v1172 = vunpack.c.l.b16 %v477
        %v1173 = vunpack.c.h.b16 %v477
        %v1174 = vunpack.c.l.b16 %v478
        %v1175 = vunpack.c.h.b16 %v478
        %v1176 = vunpack.c.l.b16 %v479
        %v1177 = vunpack.c.h.b16 %v479
        %v1178 = vunpack.c.l.b16 %v480
        %v1179 = vunpack.c.h.b16 %v480
        %v1180 = vunpack.c.l.b16 %v481
        %v1181 = vunpack.c.h.b16 %v481
        %v1182 = vunpack.c.l.b16 %v482
        %v1183 = vunpack.c.h.b16 %v482
        %v1184 = vunpack.c.l.b16 %v483
        %v1185 = vunpack.c.h.b16 %v483
        %v1186 = vunpack.c.l.b16 %v484
        %v1187 = vunpack.c.h.b16 %v484
        %v1188 = vunpack.c.l.b16 %v485
        %v1189 = vunpack.c.h.b16 %v485
        %v1190 = vunpack.c.l.b16 %v486
        %v1191 = vunpack.c.h.b16 %v486
        %v1192 = vunpack.c.l.b16 %v487
        %v1193 = vunpack.c.h.b16 %v487
        %v1194 = vunpack.c.l.b16 %v488
        %v1195 = vunpack.c.h.b16 %v488
        %v1196 = vunpack.c.l.b16 %v489
        %v1197 = vunpack.c.h.b16 %v489
        %v1198 = vunpack.c.l.b16 %v490
        %v1199 = vunpack.c.h.b16 %v490
        %v1200 = vunpack.c.l.b16 %v491
        %v1201 = vunpack.c.h.b16 %v491
        %v1202 = vunpack.c.l.b16 %v492
        %v1203 = vunpack.c.h.b16 %v492
        %v1204 = vunpack.c.l.b16 %v493
        %v1205 = vunpack.c.h.b16 %v493
        %v1206 = vunpack.c.l.b16 %v494
        %v1207 = vunpack.c.h.b16 %v494
        %v1208 = vunpack.c.l.b16 %v495
        %v1209 = vunpack.c.h.b16 %v495
        %v1210 = vunpack.c.l.b16 %v496
        %v1211 = vunpack.c.h.b16 %v496
        %v1212 = vunpack.c.l.b16 %v497
        %v1213 = vunpack.c.h.b16 %v497
        %v1214 = vunpack.c.l.b16 %v498
        %v1215 = vunpack.c.h.b16 %v498
        %v1216 = vunpack.c.l.b16 %v499
        %v1217 = vunpack.c.h.b16 %v499
        %v1218 = vunpack.c.l.b16 %v500
        %v1219 = vunpack.c.h.b16 %v500
        %v1220 = vunpack.c.l.b16 %v501
        %v1221 = vunpack.c.h.b16 %v501
        %v1222 = vunpack.c.l.b16 %v502
        %v1223 = vunpack.c.h.b16 %v502
        %v1224 = vunpack.c.l.b16 %v503
        %v1225 = vunpack.c.h.b16 %v503
        %v1226 = vunpack.c.l.b16 %v504
        %v1227 = vunpack.c.h.b16 %v504
        %v1228 = vunpack.c.l.b16 %v505
        %v1229 = vunpack.c.h.b16 %v505
        %v1230 = vunpack.c.l.b16 %v506
        %v1231 = vunpack.c.h.b16 %v506
        %v1232 = vunpack.c.l.b16 %v507
        %v1233 = vunpack.c.h.b16 %v507
        %v1234 = vunpack.c.l.b16 %v508
        %v1235 = vunpack.c.h.b16 %v508
        %v1236 = vunpack.c.l.b16 %v509
        %v1237 = vunpack.c.h.b16 %v509
        %v1238 = vunpack.c.l.b16 %v510
        %v1239 = vunpack.c.h.b16 %v510
        %v1240 = vunpack.c.l.b16 %v511
        %v1241 = vunpack.c.h.b16 %v511
        %v1242 = vunpack.c.l.b16 %v512
        %v1243 = vunpack.c.h.b16 %v512
        %v1244 = vunpack.c.l.b16 %v513
        %v1245 = vunpack.c.h.b16 %v513
        %v1246 = vunpack.c.l.b16 %v514
        %v1247 = vunpack.c.h.b16 %v514
        %v1248 = vunpack.c.l.b16 %v515
        %v1249 = vunpack.c.h.b16 %v515
        %v1250 = vunpack.c.l.b16 %v516
        %v1251 = vunpack.c.h.b16 %v516
        %v1252 = vunpack.c.l.b16 %v517
        %v1253 = vunpack.c.h.b16 %v517
        %v1254 = vunpack.c.l.b16 %v518
        %v1255 = vunpack.c.h.b16 %v518
        %v1256 = vunpack.c.l.b16 %v519
        %v1257 = vunpack.c.h.b16 %v519
        %v1258 = vunpack.c.l.b16 %v520
        %v1259 = vunpack.c.h.b16 %v520
        %v1260 = vunpack.c.l.b16 %v521
        %v1261 = vunpack.c.h.b16 %v521
        %v1262 = vunpack.c.l.b16 %v522
        %v1263 = vunpack.c.h.b16 %v522
        %v1264 = vunpack.c.l.b16 %v523
        %v1265 = vunpack.c.h.b16 %v523
        %v1266 = vunpack.c.l.b16 %v524
        %v1267 = vunpack.c.h.b16 %v524
        %v1268 = vunpack.c.l.b16 %v525
        %v1269 = vunpack.c.h.b16 %v525
        %v1270 = vunpack.c.l.b16 %v526
        %v1271 = vunpack.c.h.b16 %v526
        %v1272 = vunpack.c.l.b16 %v527
        %v1273 = vunpack.c.h.b16 %v527
        %v1274 = vunpack.c.l.b16 %v528
        %v1275 = vunpack.c.h.b16 %v528
        %v1276 = vunpack.c.l.b16 %v529
        %v1277 = vunpack.c.h.b16 %v529
        %v1278 = vunpack.c.l.b16 %v530
        %v1279 = vunpack.c.h.b16 %v530
        %v1280 = vunpack.c.l.b16 %v531
        %v1281 = vunpack.c.h.b16 %v531
        %v1282 = vunpack.c.l.b16 %v532
        %v1283 = vunpack.c.h.b16 %v532
        %v1284 = vunpack.c.l.b16 %v533
        %v1285 = vunpack.c.h.b16 %v533
        %v1286 = vunpack.c.l.b16 %v534
        %v1287 = vunpack.c.h.b16 %v534
        %v1288 = vunpack.c.l.b16 %v535
        %v1289 = vunpack.c.h.b16 %v535
        %v1290 = vunpack.c.l.b16 %v536
        %v1291 = vunpack.c.h.b16 %v536
        %v1292 = vunpack.c.l.b16 %v537
        %v1293 = vunpack.c.h.b16 %v537
        %v1294 = vunpack.c.l.b16 %v538
        %v1295 = vunpack.c.h.b16 %v538
        %v1296 = vunpack.c.l.b16 %v539
        %v1297 = vunpack.c.h.b16 %v539
        %v1298 = vunpack.c.l.b16 %v540
        %v1299 = vunpack.c.h.b16 %v540
        %v1300 = vunpack.c.l.b16 %v541
        %v1301 = vunpack.c.h.b16 %v541
        %v1302 = vunpack.c.l.b16 %v542
        %v1303 = vunpack.c.h.b16 %v542
        %v1304 = vunpack.c.l.b16 %v543
        %v1305 = vunpack.c.h.b16 %v543
        %v1306 = vunpack.c.l.b16 %v544
        %v1307 = vunpack.c.h.b16 %v544
        %v1308 = vunpack.c.l.b16 %v545
        %v1309 = vunpack.c.h.b16 %v545
        %v1310 = vunpack.c.l.b16 %v546
        %v1311 = vunpack.c.h.b16 %v546
        %v1312 = vunpack.c.l.b16 %v547
        %v1313 = vunpack.c.h.b16 %v547
        %v1314 = vunpack.c.l.b16 %v548
        %v1315 = vunpack.c.h.b16 %v548
        %v1316 = vunpack.c.l.b16 %v549
        %v1317 = vunpack.c.h.b16 %v549
        %v1318 = vunpack.c.l.b16 %v550
        %v1319 = vunpack.c.h.b16 %v550
        %v1320 = vunpack.c.l.b16 %v551
        %v1321 = vunpack.c.h.b16 %v551
        %v1322 = vunpack.c.l.b16 %v552
        %v1323 = vunpack.c.h.b16 %v552
        %v1324 = vunpack.c.l.b16 %v553
        %v1325 = vunpack.c.h.b16 %v553
        %v1326 = vunpack.c.l.b16 %v554
        %v1327 = vunpack.c.h.b16 %v554
        %v1328 = vunpack.c.l.b16 %v555
        %v1329 = vunpack.c.h.b16 %v555
        %v1330 = vunpack.c.l.b16 %v556
        %v1331 = vunpack.c.h.b16 %v556
        %v1332 = vunpack.c.l.b16 %v557
        %v1333 = vunpack.c.h.b16 %v557
        %v1334 = vunpack.c.l.b16 %v558
        %v1335 = vunpack.c.h.b16 %v558
        %v1336 = vunpack.c.l.b16 %v559
        %v1337 = vunpack.c.h.b16 %v559
        %v1338 = vunpack.c.l.b16 %v560
        %v1339 = vunpack.c.h.b16 %v560
        %v1340 = vunpack.c.l.b16 %v561
        %v1341 = vunpack.c.h.b16 %v561
        %v1342 = vunpack.c.l.b16 %v562
        %v1343 = vunpack.c.h.b16 %v562
        %v1344 = vunpack.c.l.b16 %v563
        %v1345 = vunpack.c.h.b16 %v563
        %v1346 = vunpack.c.l.b16 %v564
        %v1347 = vunpack.c.h.b16 %v564
        %v1348 = vunpack.c.l.b16 %v565
        %v1349 = vunpack.c.h.b16 %v565
        %v1350 = vunpack.c.l.b16 %v566
        %v1351 = vunpack.c.h.b16 %v566
        %v1352 = vunpack.c.l.b16 %v567
        %v1353 = vunpack.c.h.b16 %v567
        %v1354 = vunpack.c.l.b16 %v568
        %v1355 = vunpack.c.h.b16 %v568
        %v1356 = vunpack.c.l.b16 %v569
        %v1357 = vunpack.c.h.b16 %v569
        %v1358 = vunpack.c.l.b16 %v570
        %v1359 = vunpack.c.h.b16 %v570
        %v1360 = vunpack.c.l.b16 %v571
        %v1361 = vunpack.c.h.b16 %v571
        %v1362 = vunpack.c.l.b16 %v572
        %v1363 = vunpack.c.h.b16 %v572
        %v1364 = vunpack.c.l.b16 %v573
        %v1365 = vunpack.c.h.b16 %v573
        %v1366 = vunpack.c.l.b16 %v574
        %v1367 = vunpack.c.h.b16 %v574
        %v1368 = vunpack.c.l.b16 %v575
        %v1369 = vunpack.c.h.b16 %v575
        %v1370 = vunpack.c.l.b16 %v576
        %v1371 = vunpack.c.h.b16 %v576
        %v1372 = vunpack.c.l.b16 %v577
        %v1373 = vunpack.c.h.b16 %v577
        %v1374 = vunpack.c.l.b16 %v578
        %v1375 = vunpack.c.h.b16 %v578
        %v1376 = vunpack.c.l.b16 %v579
        %v1377 = vunpack.c.h.b16 %v579
        %v1378 = vunpack.c.l.b16 %v580
        %v1379 = vunpack.c.h.b16 %v580
        %v1380 = vunpack.c.l.b16 %v581
        %v1381 = vunpack.c.h.b16 %v581
        %v1382 = vpack.c.b16 %v872, %v870
        %v1383 = vpack.c.b16 %v873, %v871
        %v1384 = vpack.c.b16 %v876, %v874
        %v1385 = vpack.c.b16 %v877, %v875
        %v1386 = vpack.c.b16 %v880, %v878
        %v1387 = vpack.c.b16 %v881, %v879
        %v1388 = vpack.c.b16 %v884, %v882
        %v1389 = vpack.c.b16 %v885, %v883
        %v1390 = vpack.c.b16 %v888, %v886
        %v1391 = vpack.c.b16 %v889, %v887
        %v1392 = vpack.c.b16 %v892, %v890
        %v1393 = vpack.c.b16 %v893, %v891
        %v1394 = vpack.c.b16 %v896, %v894
        %v1395 = vpack.c.b16 %v897, %v895
        %v1396 = vpack.c.b16 %v900, %v898
        %v1397 = vpack.c.b16 %v901, %v899
        %v1398 = vpack.c.b16 %v904, %v902
        %v1399 = vpack.c.b16 %v905, %v903
        %v1400 = vpack.c.b16 %v908, %v906
        %v1401 = vpack.c.b16 %v909, %v907
        %v1402 = vpack.c.b16 %v912, %v910
        %v1403 = vpack.c.b16 %v913, %v911
        %v1404 = vpack.c.b16 %v916, %v914
        %v1405 = vpack.c.b16 %v917, %v915
        %v1406 = vpack.c.b16 %v920, %v918
        %v1407 = vpack.c.b16 %v921, %v919
        %v1408 = vpack.c.b16 %v924, %v922
        %v1409 = vpack.c.b16 %v925, %v923
        %v1410 = vpack.c.b16 %v928, %v926
        %v1411 = vpack.c.b16 %v929, %v927
        %v1412 = vpack.c.b16 %v932, %v930
        %v1413 = vpack.c.b16 %v933, %v931
        %v1414 = vpack.c.b16 %v936, %v934
        %v1415 = vpack.c.b16 %v937, %v935
        %v1416 = vpack.c.b16 %v940, %v938
        %v1417 = vpack.c.b16 %v941, %v939
        %v1418 = vpack.c.b16 %v944, %v942
        %v1419 = vpack.c.b16 %v945, %v943
        %v1420 = vpack.c.b16 %v948, %v946
        %v1421 = vpack.c.b16 %v949, %v947
        %v1422 = vpack.c.b16 %v952, %v950
        %v1423 = vpack.c.b16 %v953, %v951
        %v1424 = vpack.c.b16 %v956, %v954
        %v1425 = vpack.c.b16 %v957, %v955
        %v1426 = vpack.c.b16 %v960, %v958
        %v1427 = vpack.c.b16 %v961, %v959
        %v1428 = vpack.c.b16 %v964, %v962
        %v1429 = vpack.c.b16 %v965, %v963
        %v1430 = vpack.c.b16 %v968, %v966
        %v1431 = vpack.c.b16 %v969, %v967
        %v1432 = vpack.c.b16 %v972, %v970
        %v1433 = vpack.c.b16 %v973, %v971
        %v1434 = vpack.c.b16 %v976, %v974
        %v1435 = vpack.c.b16 %v977, %v975
        %v1436 = vpack.c.b16 %v980, %v978
        %v1437 = vpack.c.b16 %v981, %v979
        %v1438 = vpack.c.b16 %v984, %v982
        %v1439 = vpack.c.b16 %v985, %v983
        %v1440 = vpack.c.b16 %v988, %v986
        %v1441 = vpack.c.b16 %v989, %v987
        %v1442 = vpack.c.b16 %v992, %v990
        %v1443 = vpack.c.b16 %v993, %v991
        %v1444 = vpack.c.b16 %v996, %v994
        %v1445 = vpack.c.b16 %v997, %v995
        %v1446 = vpack.c.b16 %v1000, %v998
        %v1447 = vpack.c.b16 %v1001, %v999
        %v1448 = vpack.c.b16 %v1004, %v1002
        %v1449 = vpack.c.b16 %v1005, %v1003
        %v1450 = vpack.c.b16 %v1008, %v1006
        %v1451 = vpack.c.b16 %v1009, %v1007
        %v1452 = vpack.c.b16 %v1012, %v1010
        %v1453 = vpack.c.b16 %v1013, %v1011
        %v1454 = vpack.c.b16 %v1016, %v1014
        %v1455 = vpack.c.b16 %v1017, %v1015
        %v1456 = vpack.c.b16 %v1020, %v1018
        %v1457 = vpack.c.b16 %v1021, %v1019
        %v1458 = vpack.c.b16 %v1024, %v1022
        %v1459 = vpack.c.b16 %v1025, %v1023
        %v1460 = vpack.c.b16 %v1028, %v1026
        %v1461 = vpack.c.b16 %v1029, %v1027
        %v1462 = vpack.c.b16 %v1032, %v1030
        %v1463 = vpack.c.b16 %v1033, %v1031
        %v1464 = vpack.c.b16 %v1036, %v1034
        %v1465 = vpack.c.b16 %v1037, %v1035
        %v1466 = vpack.c.b16 %v1040, %v1038
        %v1467 = vpack.c.b16 %v1041, %v1039
        %v1468 = vpack.c.b16 %v1044, %v1042
        %v1469 = vpack.c.b16 %v1045, %v1043
        %v1470 = vpack.c.b16 %v1048, %v1046
        %v1471 = vpack.c.b16 %v1049, %v1047
        %v1472 = vpack.c.b16 %v1052, %v1050
        %v1473 = vpack.c.b16 %v1053, %v1051
        %v1474 = vpack.c.b16 %v1056, %v1054
        %v1475 = vpack.c.b16 %v1057, %v1055
        %v1476 = vpack.c.b16 %v1060, %v1058
        %v1477 = vpack.c.b16 %v1061, %v1059
        %v1478 = vpack.c.b16 %v1064, %v1062
        %v1479 = vpack.c.b16 %v1065, %v1063
        %v1480 = vpack.c.b16 %v1068, %v1066
        %v1481 = vpack.c.b16 %v1069, %v1067
        %v1482 = vpack.c.b16 %v1072, %v1070
        %v1483 = vpack.c.b16 %v1073, %v1071
        %v1484 = vpack.c.b16 %v1076, %v1074
        %v1485 = vpack.c.b16 %v1077, %v1075
        %v1486 = vpack.c.b16 %v1080, %v1078
        %v1487 = vpack.c.b16 %v1081, %v1079
        %v1488 = vpack.c.b16 %v1084, %v1082
        %v1489 = vpack.c.b16 %v1085, %v1083
        %v1490 = vpack.c.b16 %v1088, %v1086
        %v1491 = vpack.c.b16 %v1089, %v1087
        %v1492 = vpack.c.b16 %v1092, %v1090
        %v1493 = vpack.c.b16 %v1093, %v1091
        %v1494 = vpack.c.b16 %v1096, %v1094
        %v1495 = vpack.c.b16 %v1097, %v1095
        %v1496 = vpack.c.b16 %v1100, %v1098
        %v1497 = vpack.c.b16 %v1101, %v1099
        %v1498 = vpack.c.b16 %v1104, %v1102
        %v1499 = vpack.c.b16 %v1105, %v1103
        %v1500 = vpack.c.b16 %v1108, %v1106
        %v1501 = vpack.c.b16 %v1109, %v1107
        %v1502 = vpack.c.b16 %v1112, %v1110
        %v1503 = vpack.c.b16 %v1113, %v1111
        %v1504 = vpack.c.b16 %v1116, %v1114
        %v1505 = vpack.c.b16 %v1117, %v1115
        %v1506 = vpack.c.b16 %v1120, %v1118
        %v1507 = vpack.c.b16 %v1121, %v1119
        %v1508 = vpack.c.b16 %v1124, %v1122
        %v1509 = vpack.c.b16 %v1125, %v1123
        %v1510 = vpack.c.b16 %v1128, %v1126
        %v1511 = vpack.c.b16 %v1129, %v1127
        %v1512 = vpack.c.b16 %v1132, %v1130
        %v1513 = vpack.c.b16 %v1133, %v1131
        %v1514 = vpack.c.b16 %v1136, %v1134
        %v1515 = vpack.c.b16 %v1137, %v1135
        %v1516 = vpack.c.b16 %v1140, %v1138
        %v1517 = vpack.c.b16 %v1141, %v1139
        %v1518 = vpack.c.b16 %v1144, %v1142
        %v1519 = vpack.c.b16 %v1145, %v1143
        %v1520 = vpack.c.b16 %v1148, %v1146
        %v1521 = vpack.c.b16 %v1149, %v1147
        %v1522 = vpack.c.b16 %v1152, %v1150
        %v1523 = vpack.c.b16 %v1153, %v1151
        %v1524 = vpack.c.b16 %v1156, %v1154
        %v1525 = vpack.c.b16 %v1157, %v1155
        %v1526 = vpack.c.b16 %v1160, %v1158
        %v1527 = vpack.c.b16 %v1161, %v1159
        %v1528 = vpack.c.b16 %v1164, %v1162
        %v1529 = vpack.c.b16 %v1165, %v1163
        %v1530 = vpack.c.b16 %v1168, %v1166
        %v1531 = vpack.c.b16 %v1169, %v1167
        %v1532 = vpack.c.b16 %v1172, %v1170
        %v1533 = vpack.c.b16 %v1173, %v1171
        %v1534 = vpack.c.b16 %v1176, %v1174
        %v1535 = vpack.c.b16 %v1177, %v1175
        %v1536 = vpack.c.b16 %v1180, %v1178
        %v1537 = vpack.c.b16 %v1181, %v1179
        %v1538 = vpack.c.b16 %v1184, %v1182
        %v1539 = vpack.c.b16 %v1185, %v1183
        %v1540 = vpack.c.b16 %v1188, %v1186
        %v1541 = vpack.c.b16 %v1189, %v1187
        %v1542 = vpack.c.b16 %v1192, %v1190
        %v1543 = vpack.c.b16 %v1193, %v1191
        %v1544 = vpack.c.b16 %v1196, %v1194
        %v1545 = vpack.c.b16 %v1197, %v1195
        %v1546 = vpack.c.b16 %v1200, %v1198
        %v1547 = vpack.c.b16 %v1201, %v1199
        %v1548 = vpack.c.b16 %v1204, %v1202
        %v1549 = vpack.c.b16 %v1205, %v1203
        %v1550 = vpack.c.b16 %v1208, %v1206
        %v1551 = vpack.c.b16 %v1209, %v1207
        %v1552 = vpack.c.b16 %v1212, %v1210
        %v1553 = vpack.c.b16 %v1213, %v1211
        %v1554 = vpack.c.b16 %v1216, %v1214
        %v1555 = vpack.c.b16 %v1217, %v1215
        %v1556 = vpack.c.b16 %v1220, %v1218
        %v1557 = vpack.c.b16 %v1221, %v1219
        %v1558 = vpack.c.b16 %v1224, %v1222
        %v1559 = vpack.c.b16 %v1225, %v1223
        %v1560 = vpack.c.b16 %v1228, %v1226
        %v1561 = vpack.c.b16 %v1229, %v1227
        %v1562 = vpack.c.b16 %v1232, %v1230
        %v1563 = vpack.c.b16 %v1233, %v1231
        %v1564 = vpack.c.b16 %v1236, %v1234
        %v1565 = vpack.c.b16 %v1237, %v1235
        %v1566 = vpack.c.b16 %v1240, %v1238
        %v1567 = vpack.c.b16 %v1241, %v1239
        %v1568 = vpack.c.b16 %v1244, %v1242
        %v1569 = vpack.c.b16 %v1245, %v1243
        %v1570 = vpack.c.b16 %v1248, %v1246
        %v1571 = vpack.c.b16 %v1249, %v1247
        %v1572 = vpack.c.b16 %v1252, %v1250
        %v1573 = vpack.c.b16 %v1253, %v1251
        %v1574 = vpack.c.b16 %v1256, %v1254
        %v1575 = vpack.c.b16 %v1257, %v1255
        %v1576 = vpack.c.b16 %v1260, %v1258
        %v1577 = vpack.c.b16 %v1261, %v1259
        %v1578 = vpack.c.b16 %v1264, %v1262
        %v1579 = vpack.c.b16 %v1265, %v1263
        %v1580 = vpack.c.b16 %v1268, %v1266
        %v1581 = vpack.c.b16 %v1269, %v1267
        %v1582 = vpack.c.b16 %v1272, %v1270
        %v1583 = vpack.c.b16 %v1273, %v1271
        %v1584 = vpack.c.b16 %v1276, %v1274
        %v1585 = vpack.c.b16 %v1277, %v1275
        %v1586 = vpack.c.b16 %v1280, %v1278
        %v1587 = vpack.c.b16 %v1281, %v1279
        %v1588 = vpack.c.b16 %v1284, %v1282
        %v1589 = vpack.c.b16 %v1285, %v1283
        %v1590 = vpack.c.b16 %v1288, %v1286
        %v1591 = vpack.c.b16 %v1289, %v1287
        %v1592 = vpack.c.b16 %v1292, %v1290
        %v1593 = vpack.c.b16 %v1293, %v1291
        %v1594 = vpack.c.b16 %v1296, %v1294
        %v1595 = vpack.c.b16 %v1297, %v1295
        %v1596 = vpack.c.b16 %v1300, %v1298
        %v1597 = vpack.c.b16 %v1301, %v1299
        %v1598 = vpack.c.b16 %v1304, %v1302
        %v1599 = vpack.c.b16 %v1305, %v1303
        %v1600 = vpack.c.b16 %v1308, %v1306
        %v1601 = vpack.c.b16 %v1309, %v1307
        %v1602 = vpack.c.b16 %v1312, %v1310
        %v1603 = vpack.c.b16 %v1313, %v1311
        %v1604 = vpack.c.b16 %v1316, %v1314
        %v1605 = vpack.c.b16 %v1317, %v1315
        %v1606 = vpack.c.b16 %v1320, %v1318
        %v1607 = vpack.c.b16 %v1321, %v1319
        %v1608 = vpack.c.b16 %v1324, %v1322
        %v1609 = vpack.c.b16 %v1325, %v1323
        %v1610 = vpack.c.b16 %v1328, %v1326
        %v1611 = vpack.c.b16 %v1329, %v1327
        %v1612 = vpack.c.b16 %v1332, %v1330
        %v1613 = vpack.c.b16 %v1333, %v1331
        %v1614 = vpack.c.b16 %v1336, %v1334
        %v1615 = vpack.c.b16 %v1337, %v1335
        %v1616 = vpack.c.b16 %v1340, %v1338
        %v1617 = vpack.c.b16 %v1341, %v1339
        %v1618 = vpack.c.b16 %v1344, %v1342
        %v1619 = vpack.c.b16 %v1345, %v1343
        %v1620 = vpack.c.b16 %v1348, %v1346
        %v1621 = vpack.c.b16 %v1349, %v1347
        %v1622 = vpack.c.b16 %v1352, %v1350
        %v1623 = vpack.c.b16 %v1353, %v1351
        %v1624 = vpack.c.b16 %v1356, %v1354
        %v1625 = vpack.c.b16 %v1357, %v1355
        %v1626 = vpack.c.b16 %v1360, %v1358
        %v1627 = vpack.c.b16 %v1361, %v1359
        %v1628 = vpack.c.b16 %v1364, %v1362
        %v1629 = vpack.c.b16 %v1365, %v1363
        %v1630 = vpack.c.b16 %v1368, %v1366
        %v1631 = vpack.c.b16 %v1369, %v1367
        %v1632 = vpack.c.b16 %v1372, %v1370
        %v1633 = vpack.c.b16 %v1373, %v1371
        %v1634 = vpack.c.b16 %v1376, %v1374
        %v1635 = vpack.c.b16 %v1377, %v1375
        %v1636 = vpack.c.b16 %v1380, %v1378
        %v1637 = vpack.c.b16 %v1381, %v1379
        %v1926 = vunpack.c.l.b16 %v582
        %v1927 = vunpack.c.l.b16 %v583
        %v1928 = vunpack.c.l.b16 %v584
        %v1929 = vunpack.c.l.b16 %v585
        %v1930 = vunpack.c.l.b16 %v586
        %v1931 = vunpack.c.l.b16 %v587
        %v1932 = vunpack.c.l.b16 %v588
        %v1933 = vunpack.c.l.b16 %v589
        %v1934 = vunpack.c.l.b16 %v590
        %v1935 = vunpack.c.l.b16 %v591
        %v1936 = vunpack.c.l.b16 %v592
        %v1937 = vunpack.c.l.b16 %v593
        %v1938 = vunpack.c.l.b16 %v594
        %v1939 = vunpack.c.l.b16 %v595
        %v1940 = vunpack.c.l.b16 %v596
        %v1941 = vunpack.c.l.b16 %v597
        %v1942 = vunpack.c.l.b16 %v598
        %v1943 = vunpack.c.l.b16 %v599
        %v1944 = vunpack.c.l.b16 %v600
        %v1945 = vunpack.c.l.b16 %v601
        %v1946 = vunpack.c.l.b16 %v602
        %v1947 = vunpack.c.l.b16 %v603
        %v1948 = vunpack.c.l.b16 %v604
        %v1949 = vunpack.c.l.b16 %v605
        %v1950 = vunpack.c.l.b16 %v606
        %v1951 = vunpack.c.l.b16 %v607
        %v1952 = vunpack.c.l.b16 %v608
        %v1953 = vunpack.c.l.b16 %v609
        %v1954 = vunpack.c.l.b16 %v610
        %v1955 = vunpack.c.l.b16 %v611
        %v1956 = vunpack.c.l.b16 %v612
        %v1957 = vunpack.c.l.b16 %v613
        %v1958 = vpack.c.b16 %v1927, %v1926
        %v1959 = vpack.c.b16 %v1929, %v1928
        %v1960 = vpack.c.b16 %v1931, %v1930
        %v1961 = vpack.c.b16 %v1933, %v1932
        %v1962 = vpack.c.b16 %v1935, %v1934
        %v1963 = vpack.c.b16 %v1937, %v1936
        %v1964 = vpack.c.b16 %v1939, %v1938
        %v1965 = vpack.c.b16 %v1941, %v1940
        %v1966 = vpack.c.b16 %v1943, %v1942
        %v1967 = vpack.c.b16 %v1945, %v1944
        %v1968 = vpack.c.b16 %v1947, %v1946
        %v1969 = vpack.c.b16 %v1949, %v1948
        %v1970 = vpack.c.b16 %v1951, %v1950
        %v1971 = vpack.c.b16 %v1953, %v1952
        %v1972 = vpack.c.b16 %v1955, %v1954
        %v1973 = vpack.c.b16 %v1957, %v1956
        %1990 = vmatprep.subr.bf16.mxu0 0
        %1991 = vmatpush1.bf16.msra.mxu0 %v1958
        %1992 = vmatprep.subr.bf16.mxu0 0
        %1993 = vmatpush1.bf16.msra.mxu0 %v1959
        %1994 = vmatprep.subr.bf16.mxu0 0
        %1995 = vmatpush1.bf16.msra.mxu0 %v1960
        %1996 = vmatprep.subr.bf16.mxu0 0
        %1997 = vmatpush1.bf16.msra.mxu0 %v1961
        %1998 = vmatprep.subr.bf16.mxu0 0
        %1999 = vmatpush1.bf16.msra.mxu0 %v1962
        %2000 = vmatprep.subr.bf16.mxu0 0
        %2001 = vmatpush1.bf16.msra.mxu0 %v1963
        %2002 = vmatprep.subr.bf16.mxu0 0
        %2003 = vmatpush1.bf16.msra.mxu0 %v1964
        %2004 = vmatprep.subr.bf16.mxu0 0
        %2005 = vmatpush1.bf16.msra.mxu0 %v1965
        %2006 = vmatprep.subr.bf16.mxu0 0
        %2007 = vmatpush1.bf16.msra.mxu0 %v1966
        %2008 = vmatprep.subr.bf16.mxu0 0
        %2009 = vmatpush1.bf16.msra.mxu0 %v1967
        %2010 = vmatprep.subr.bf16.mxu0 0
        %2011 = vmatpush1.bf16.msra.mxu0 %v1968
        %2012 = vmatprep.subr.bf16.mxu0 0
        %2013 = vmatpush1.bf16.msra.mxu0 %v1969
        %2014 = vmatprep.subr.bf16.mxu0 0
        %2015 = vmatpush1.bf16.msra.mxu0 %v1970
        %2016 = vmatprep.subr.bf16.mxu0 0
        %2017 = vmatpush1.bf16.msra.mxu0 %v1971
        %2018 = vmatprep.subr.bf16.mxu0 0
        %2019 = vmatpush1.bf16.msra.mxu0 %v1972
        %2020 = vmatprep.subr.bf16.mxu0 0
        %2021 = vmatpush1.bf16.msra.mxu0 %v1973
        %2022 = vmatprep.mubr.bf16.mxu0 %v1383
        %2023 = vmatmul.mubr.bf16.gmra.mrb[0].mxu0 %v1382
        %v2024 = vpop.f32.mrb[0].mxu0
        %v2025 = vadd.f32 0.0, %v2024
        %v2026 = vpop.f32.mrb[0].mxu0
        %v2027 = vpop.f32.mrb[0].mxu0
        %v2028 = vadd.f32 0.0, %v2027
        %v2029 = vpop.f32.mrb[0].mxu0
        %2030 = vmatprep.mubr.bf16.mxu0 %v1385
        %2031 = vmatmul.mubr.bf16.gmra.mrb[0].mxu0 %v1384
        %v2032 = vpop.f32.mrb[0].mxu0
        %v2033 = vadd.f32 0.0, %v2032
        %v2034 = vpop.f32.mrb[0].mxu0
        %v2035 = vpop.f32.mrb[0].mxu0
        %v2036 = vadd.f32 0.0, %v2035
        %v2037 = vpop.f32.mrb[0].mxu0
        %2038 = vmatprep.mubr.bf16.mxu0 %v1387
        %2039 = vmatmul.mubr.bf16.gmra.mrb[0].mxu0 %v1386
        %v2040 = vpop.f32.mrb[0].mxu0
        %v2041 = vadd.f32 0.0, %v2040
        %v2042 = vpop.f32.mrb[0].mxu0
        %v2043 = vpop.f32.mrb[0].mxu0
        %v2044 = vadd.f32 0.0, %v2043
        %v2045 = vpop.f32.mrb[0].mxu0
        %2046 = vmatprep.mubr.bf16.mxu0 %v1389
        %2047 = vmatmul.mubr.bf16.gmra.mrb[0].mxu0 %v1388
        %v2048 = vpop.f32.mrb[0].mxu0
        %v2049 = vadd.f32 0.0, %v2048
        %v2050 = vpop.f32.mrb[0].mxu0
        %v2051 = vpop.f32.mrb[0].mxu0
        %v2052 = vadd.f32 0.0, %v2051
        %v2053 = vpop.f32.mrb[0].mxu0
        %2054 = vmatprep.mubr.bf16.mxu0 %v1391
        %2055 = vmatmul.mubr.bf16.gmra.mrb[0].mxu0 %v1390
        %v2056 = vpop.f32.mrb[0].mxu0
        %v2057 = vadd.f32 0.0, %v2056
        %v2058 = vpop.f32.mrb[0].mxu0
        %v2059 = vpop.f32.mrb[0].mxu0
        %v2060 = vadd.f32 0.0, %v2059
        %v2061 = vpop.f32.mrb[0].mxu0
        %2062 = vmatprep.mubr.bf16.mxu0 %v1393
        %2063 = vmatmul.mubr.bf16.gmra.mrb[0].mxu0 %v1392
        %v2064 = vpop.f32.mrb[0].mxu0
        %v2065 = vadd.f32 0.0, %v2064
        %v2066 = vpop.f32.mrb[0].mxu0
        %v2067 = vpop.f32.mrb[0].mxu0
        %v2068 = vadd.f32 0.0, %v2067
        %v2069 = vpop.f32.mrb[0].mxu0
        %2070 = vmatprep.mubr.bf16.mxu0 %v1395
        %2071 = vmatmul.mubr.bf16.gmra.mrb[0].mxu0 %v1394
        %v2072 = vpop.f32.mrb[0].mxu0
        %v2073 = vadd.f32 0.0, %v2072
        %v2074 = vpop.f32.mrb[0].mxu0
        %v2075 = vpop.f32.mrb[0].mxu0
        %v2076 = vadd.f32 0.0, %v2075
        %v2077 = vpop.f32.mrb[0].mxu0
        %2078 = vmatprep.mubr.bf16.mxu0 %v1397
        %2079 = vmatmul.mubr.bf16.gmra.mrb[0].mxu0 %v1396
        %v2080 = vpop.f32.mrb[0].mxu0
        %v2081 = vadd.f32 0.0, %v2080
        %v2082 = vpop.f32.mrb[0].mxu0
        %v2083 = vpop.f32.mrb[0].mxu0
        %v2084 = vadd.f32 0.0, %v2083
        %v2085 = vpop.f32.mrb[0].mxu0
        %2086 = vmatprep.mubr.bf16.mxu0 %v1399
        %2087 = vmatmul.mubr.bf16.gmra.mrb[0].mxu0 %v1398
        %v2088 = vpop.f32.mrb[0].mxu0
        %v2089 = vadd.f32 0.0, %v2088
        %v2090 = vpop.f32.mrb[0].mxu0
        %v2091 = vpop.f32.mrb[0].mxu0
        %v2092 = vadd.f32 0.0, %v2091
        %v2093 = vpop.f32.mrb[0].mxu0
        %2094 = vmatprep.mubr.bf16.mxu0 %v1401
        %2095 = vmatmul.mubr.bf16.gmra.mrb[0].mxu0 %v1400
        %v2096 = vpop.f32.mrb[0].mxu0
        %v2097 = vadd.f32 0.0, %v2096
        %v2098 = vpop.f32.mrb[0].mxu0
        %v2099 = vpop.f32.mrb[0].mxu0
        %v2100 = vadd.f32 0.0, %v2099
        %v2101 = vpop.f32.mrb[0].mxu0
        %2102 = vmatprep.mubr.bf16.mxu0 %v1403
        %2103 = vmatmul.mubr.bf16.gmra.mrb[0].mxu0 %v1402
        %v2104 = vpop.f32.mrb[0].mxu0
        %v2105 = vadd.f32 0.0, %v2104
        %v2106 = vpop.f32.mrb[0].mxu0
        %v2107 = vpop.f32.mrb[0].mxu0
        %v2108 = vadd.f32 0.0, %v2107
        %v2109 = vpop.f32.mrb[0].mxu0
        %2110 = vmatprep.mubr.bf16.mxu0 %v1405
        %2111 = vmatmul.mubr.bf16.gmra.mrb[0].mxu0 %v1404
        %v2112 = vpop.f32.mrb[0].mxu0
        %v2113 = vadd.f32 0.0, %v2112
        %v2114 = vpop.f32.mrb[0].mxu0
        %v2115 = vpop.f32.mrb[0].mxu0
        %v2116 = vadd.f32 0.0, %v2115
        %v2117 = vpop.f32.mrb[0].mxu0
        %2118 = vmatprep.mubr.bf16.mxu0 %v1407
        %2119 = vmatmul.mubr.bf16.gmra.mrb[0].mxu0 %v1406
        %v2120 = vpop.f32.mrb[0].mxu0
        %v2121 = vadd.f32 0.0, %v2120
        %v2122 = vpop.f32.mrb[0].mxu0
        %v2123 = vpop.f32.mrb[0].mxu0
        %v2124 = vadd.f32 0.0, %v2123
        %v2125 = vpop.f32.mrb[0].mxu0
        %2126 = vmatprep.mubr.bf16.mxu0 %v1409
        %2127 = vmatmul.mubr.bf16.gmra.mrb[0].mxu0 %v1408
        %v2128 = vpop.f32.mrb[0].mxu0
        %v2129 = vadd.f32 0.0, %v2128
        %v2130 = vpop.f32.mrb[0].mxu0
        %v2131 = vpop.f32.mrb[0].mxu0
        %v2132 = vadd.f32 0.0, %v2131
        %v2133 = vpop.f32.mrb[0].mxu0
        %2134 = vmatprep.mubr.bf16.mxu0 %v1411
        %2135 = vmatmul.mubr.bf16.gmra.mrb[0].mxu0 %v1410
        %v2136 = vpop.f32.mrb[0].mxu0
        %v2137 = vadd.f32 0.0, %v2136
        %v2138 = vpop.f32.mrb[0].mxu0
        %v2139 = vpop.f32.mrb[0].mxu0
        %v2140 = vadd.f32 0.0, %v2139
        %v2141 = vpop.f32.mrb[0].mxu0
        %2142 = vmatprep.mubr.bf16.mxu0 %v1413
        %2143 = vmatmul.mubr.bf16.gmra.mrb[0].mxu0 %v1412
        %v2144 = vpop.f32.mrb[0].mxu0
        %v2145 = vadd.f32 0.0, %v2144
        %v2146 = vpop.f32.mrb[0].mxu0
        %v2147 = vpop.f32.mrb[0].mxu0
        %v2148 = vadd.f32 0.0, %v2147
        %v2149 = vpop.f32.mrb[0].mxu0
        %2150 = vmatprep.mubr.bf16.mxu0 %v1415
        %2151 = vmatmul.mubr.bf16.gmra.mrb[0].mxu0 %v1414
        %v2152 = vpop.f32.mrb[0].mxu0
        %v2153 = vadd.f32 0.0, %v2152
        %v2154 = vpop.f32.mrb[0].mxu0
        %v2155 = vpop.f32.mrb[0].mxu0
        %v2156 = vadd.f32 0.0, %v2155
        %v2157 = vpop.f32.mrb[0].mxu0
        %2158 = vmatprep.mubr.bf16.mxu0 %v1417
        %2159 = vmatmul.mubr.bf16.gmra.mrb[0].mxu0 %v1416
        %v2160 = vpop.f32.mrb[0].mxu0
        %v2161 = vadd.f32 0.0, %v2160
        %v2162 = vpop.f32.mrb[0].mxu0
        %v2163 = vpop.f32.mrb[0].mxu0
        %v2164 = vadd.f32 0.0, %v2163
        %v2165 = vpop.f32.mrb[0].mxu0
        %2166 = vmatprep.mubr.bf16.mxu0 %v1419
        %2167 = vmatmul.mubr.bf16.gmra.mrb[0].mxu0 %v1418
        %v2168 = vpop.f32.mrb[0].mxu0
        %v2169 = vadd.f32 0.0, %v2168
        %v2170 = vpop.f32.mrb[0].mxu0
        %v2171 = vpop.f32.mrb[0].mxu0
        %v2172 = vadd.f32 0.0, %v2171
        %v2173 = vpop.f32.mrb[0].mxu0
        %2174 = vmatprep.mubr.bf16.mxu0 %v1421
        %2175 = vmatmul.mubr.bf16.gmra.mrb[0].mxu0 %v1420
        %v2176 = vpop.f32.mrb[0].mxu0
        %v2177 = vadd.f32 0.0, %v2176
        %v2178 = vpop.f32.mrb[0].mxu0
        %v2179 = vpop.f32.mrb[0].mxu0
        %v2180 = vadd.f32 0.0, %v2179
        %v2181 = vpop.f32.mrb[0].mxu0
        %2182 = vmatprep.mubr.bf16.mxu0 %v1423
        %2183 = vmatmul.mubr.bf16.gmra.mrb[0].mxu0 %v1422
        %v2184 = vpop.f32.mrb[0].mxu0
        %v2185 = vadd.f32 0.0, %v2184
        %v2186 = vpop.f32.mrb[0].mxu0
        %v2187 = vpop.f32.mrb[0].mxu0
        %v2188 = vadd.f32 0.0, %v2187
        %v2189 = vpop.f32.mrb[0].mxu0
        %2190 = vmatprep.mubr.bf16.mxu0 %v1425
        %2191 = vmatmul.mubr.bf16.gmra.mrb[0].mxu0 %v1424
        %v2192 = vpop.f32.mrb[0].mxu0
        %v2193 = vadd.f32 0.0, %v2192
        %v2194 = vpop.f32.mrb[0].mxu0
        %v2195 = vpop.f32.mrb[0].mxu0
        %v2196 = vadd.f32 0.0, %v2195
        %v2197 = vpop.f32.mrb[0].mxu0
        %2198 = vmatprep.mubr.bf16.mxu0 %v1427
        %2199 = vmatmul.mubr.bf16.gmra.mrb[0].mxu0 %v1426
        %v2200 = vpop.f32.mrb[0].mxu0
        %v2201 = vadd.f32 0.0, %v2200
        %v2202 = vpop.f32.mrb[0].mxu0
        %v2203 = vpop.f32.mrb[0].mxu0
        %v2204 = vadd.f32 0.0, %v2203
        %v2205 = vpop.f32.mrb[0].mxu0
        %2206 = vmatprep.mubr.bf16.mxu0 %v1429
        %2207 = vmatmul.mubr.bf16.gmra.mrb[0].mxu0 %v1428
        %v2208 = vpop.f32.mrb[0].mxu0
        %v2209 = vadd.f32 0.0, %v2208
        %v2210 = vpop.f32.mrb[0].mxu0
        %v2211 = vpop.f32.mrb[0].mxu0
        %v2212 = vadd.f32 0.0, %v2211
        %v2213 = vpop.f32.mrb[0].mxu0
        %2214 = vmatprep.mubr.bf16.mxu0 %v1431
        %2215 = vmatmul.mubr.bf16.gmra.mrb[0].mxu0 %v1430
        %v2216 = vpop.f32.mrb[0].mxu0
        %v2217 = vadd.f32 0.0, %v2216
        %v2218 = vpop.f32.mrb[0].mxu0
        %v2219 = vpop.f32.mrb[0].mxu0
        %v2220 = vadd.f32 0.0, %v2219
        %v2221 = vpop.f32.mrb[0].mxu0
        %2222 = vmatprep.mubr.bf16.mxu0 %v1433
        %2223 = vmatmul.mubr.bf16.gmra.mrb[0].mxu0 %v1432
        %v2224 = vpop.f32.mrb[0].mxu0
        %v2225 = vadd.f32 0.0, %v2224
        %v2226 = vpop.f32.mrb[0].mxu0
        %v2227 = vpop.f32.mrb[0].mxu0
        %v2228 = vadd.f32 0.0, %v2227
        %v2229 = vpop.f32.mrb[0].mxu0
        %2230 = vmatprep.mubr.bf16.mxu0 %v1435
        %2231 = vmatmul.mubr.bf16.gmra.mrb[0].mxu0 %v1434
        %v2232 = vpop.f32.mrb[0].mxu0
        %v2233 = vadd.f32 0.0, %v2232
        %v2234 = vpop.f32.mrb[0].mxu0
        %v2235 = vpop.f32.mrb[0].mxu0
        %v2236 = vadd.f32 0.0, %v2235
        %v2237 = vpop.f32.mrb[0].mxu0
        %2238 = vmatprep.mubr.bf16.mxu0 %v1437
        %2239 = vmatmul.mubr.bf16.gmra.mrb[0].mxu0 %v1436
        %v2240 = vpop.f32.mrb[0].mxu0
        %v2241 = vadd.f32 0.0, %v2240
        %v2242 = vpop.f32.mrb[0].mxu0
        %v2243 = vpop.f32.mrb[0].mxu0
        %v2244 = vadd.f32 0.0, %v2243
        %v2245 = vpop.f32.mrb[0].mxu0
        %2246 = vmatprep.mubr.bf16.mxu0 %v1439
        %2247 = vmatmul.mubr.bf16.gmra.mrb[0].mxu0 %v1438
        %v2248 = vpop.f32.mrb[0].mxu0
        %v2249 = vadd.f32 0.0, %v2248
        %v2250 = vpop.f32.mrb[0].mxu0
        %v2251 = vpop.f32.mrb[0].mxu0
        %v2252 = vadd.f32 0.0, %v2251
        %v2253 = vpop.f32.mrb[0].mxu0
        %2254 = vmatprep.mubr.bf16.mxu0 %v1441
        %2255 = vmatmul.mubr.bf16.gmra.mrb[0].mxu0 %v1440
        %v2256 = vpop.f32.mrb[0].mxu0
        %v2257 = vadd.f32 0.0, %v2256
        %v2258 = vpop.f32.mrb[0].mxu0
        %v2259 = vpop.f32.mrb[0].mxu0
        %v2260 = vadd.f32 0.0, %v2259
        %v2261 = vpop.f32.mrb[0].mxu0
        %2262 = vmatprep.mubr.bf16.mxu0 %v1443
        %2263 = vmatmul.mubr.bf16.gmra.mrb[0].mxu0 %v1442
        %v2264 = vpop.f32.mrb[0].mxu0
        %v2265 = vadd.f32 0.0, %v2264
        %v2266 = vpop.f32.mrb[0].mxu0
        %v2267 = vpop.f32.mrb[0].mxu0
        %v2268 = vadd.f32 0.0, %v2267
        %v2269 = vpop.f32.mrb[0].mxu0
        %2270 = vmatprep.mubr.bf16.mxu0 %v1445
        %2271 = vmatmul.mubr.bf16.gmra.mrb[0].mxu0 %v1444
        %v2272 = vpop.f32.mrb[0].mxu0
        %v2273 = vadd.f32 0.0, %v2272
        %v2274 = vpop.f32.mrb[0].mxu0
        %v2275 = vpop.f32.mrb[0].mxu0
        %v2276 = vadd.f32 0.0, %v2275
        %v2277 = vpop.f32.mrb[0].mxu0
        %2278 = vmatprep.mubr.bf16.mxu0 %v1447
        %2279 = vmatmul.mubr.bf16.gmra.mrb[0].mxu0 %v1446
        %v2280 = vpop.f32.mrb[0].mxu0
        %v2281 = vadd.f32 0.0, %v2280
        %v2282 = vpop.f32.mrb[0].mxu0
        %v2283 = vpop.f32.mrb[0].mxu0
        %v2284 = vadd.f32 0.0, %v2283
        %v2285 = vpop.f32.mrb[0].mxu0
        %2286 = vmatprep.mubr.bf16.mxu0 %v1449
        %2287 = vmatmul.mubr.bf16.gmra.mrb[0].mxu0 %v1448
        %v2288 = vpop.f32.mrb[0].mxu0
        %v2289 = vadd.f32 0.0, %v2288
        %v2290 = vpop.f32.mrb[0].mxu0
        %v2291 = vpop.f32.mrb[0].mxu0
        %v2292 = vadd.f32 0.0, %v2291
        %v2293 = vpop.f32.mrb[0].mxu0
        %2294 = vmatprep.mubr.bf16.mxu0 %v1451
        %2295 = vmatmul.mubr.bf16.gmra.mrb[0].mxu0 %v1450
        %v2296 = vpop.f32.mrb[0].mxu0
        %v2297 = vadd.f32 0.0, %v2296
        %v2298 = vpop.f32.mrb[0].mxu0
        %v2299 = vpop.f32.mrb[0].mxu0
        %v2300 = vadd.f32 0.0, %v2299
        %v2301 = vpop.f32.mrb[0].mxu0
        %2302 = vmatprep.mubr.bf16.mxu0 %v1453
        %2303 = vmatmul.mubr.bf16.gmra.mrb[0].mxu0 %v1452
        %v2304 = vpop.f32.mrb[0].mxu0
        %v2305 = vadd.f32 0.0, %v2304
        %v2306 = vpop.f32.mrb[0].mxu0
        %v2307 = vpop.f32.mrb[0].mxu0
        %v2308 = vadd.f32 0.0, %v2307
        %v2309 = vpop.f32.mrb[0].mxu0
        %2310 = vmatprep.mubr.bf16.mxu0 %v1455
        %2311 = vmatmul.mubr.bf16.gmra.mrb[0].mxu0 %v1454
        %v2312 = vpop.f32.mrb[0].mxu0
        %v2313 = vadd.f32 0.0, %v2312
        %v2314 = vpop.f32.mrb[0].mxu0
        %v2315 = vpop.f32.mrb[0].mxu0
        %v2316 = vadd.f32 0.0, %v2315
        %v2317 = vpop.f32.mrb[0].mxu0
        %2318 = vmatprep.mubr.bf16.mxu0 %v1457
        %2319 = vmatmul.mubr.bf16.gmra.mrb[0].mxu0 %v1456
        %v2320 = vpop.f32.mrb[0].mxu0
        %v2321 = vadd.f32 0.0, %v2320
        %v2322 = vpop.f32.mrb[0].mxu0
        %v2323 = vpop.f32.mrb[0].mxu0
        %v2324 = vadd.f32 0.0, %v2323
        %v2325 = vpop.f32.mrb[0].mxu0
        %2326 = vmatprep.mubr.bf16.mxu0 %v1459
        %2327 = vmatmul.mubr.bf16.gmra.mrb[0].mxu0 %v1458
        %v2328 = vpop.f32.mrb[0].mxu0
        %v2329 = vadd.f32 0.0, %v2328
        %v2330 = vpop.f32.mrb[0].mxu0
        %v2331 = vpop.f32.mrb[0].mxu0
        %v2332 = vadd.f32 0.0, %v2331
        %v2333 = vpop.f32.mrb[0].mxu0
        %2334 = vmatprep.mubr.bf16.mxu0 %v1461
        %2335 = vmatmul.mubr.bf16.gmra.mrb[0].mxu0 %v1460
        %v2336 = vpop.f32.mrb[0].mxu0
        %v2337 = vadd.f32 0.0, %v2336
        %v2338 = vpop.f32.mrb[0].mxu0
        %v2339 = vpop.f32.mrb[0].mxu0
        %v2340 = vadd.f32 0.0, %v2339
        %v2341 = vpop.f32.mrb[0].mxu0
        %2342 = vmatprep.mubr.bf16.mxu0 %v1463
        %2343 = vmatmul.mubr.bf16.gmra.mrb[0].mxu0 %v1462
        %v2344 = vpop.f32.mrb[0].mxu0
        %v2345 = vadd.f32 0.0, %v2344
        %v2346 = vpop.f32.mrb[0].mxu0
        %v2347 = vpop.f32.mrb[0].mxu0
        %v2348 = vadd.f32 0.0, %v2347
        %v2349 = vpop.f32.mrb[0].mxu0
        %2350 = vmatprep.mubr.bf16.mxu0 %v1465
        %2351 = vmatmul.mubr.bf16.gmra.mrb[0].mxu0 %v1464
        %v2352 = vpop.f32.mrb[0].mxu0
        %v2353 = vadd.f32 0.0, %v2352
        %v2354 = vpop.f32.mrb[0].mxu0
        %v2355 = vpop.f32.mrb[0].mxu0
        %v2356 = vadd.f32 0.0, %v2355
        %v2357 = vpop.f32.mrb[0].mxu0
        %2358 = vmatprep.mubr.bf16.mxu0 %v1467
        %2359 = vmatmul.mubr.bf16.gmra.mrb[0].mxu0 %v1466
        %v2360 = vpop.f32.mrb[0].mxu0
        %v2361 = vadd.f32 0.0, %v2360
        %v2362 = vpop.f32.mrb[0].mxu0
        %v2363 = vpop.f32.mrb[0].mxu0
        %v2364 = vadd.f32 0.0, %v2363
        %v2365 = vpop.f32.mrb[0].mxu0
        %2366 = vmatprep.mubr.bf16.mxu0 %v1469
        %2367 = vmatmul.mubr.bf16.gmra.mrb[0].mxu0 %v1468
        %v2368 = vpop.f32.mrb[0].mxu0
        %v2369 = vadd.f32 0.0, %v2368
        %v2370 = vpop.f32.mrb[0].mxu0
        %v2371 = vpop.f32.mrb[0].mxu0
        %v2372 = vadd.f32 0.0, %v2371
        %v2373 = vpop.f32.mrb[0].mxu0
        %2374 = vmatprep.mubr.bf16.mxu0 %v1471
        %2375 = vmatmul.mubr.bf16.gmra.mrb[0].mxu0 %v1470
        %v2376 = vpop.f32.mrb[0].mxu0
        %v2377 = vadd.f32 0.0, %v2376
        %v2378 = vpop.f32.mrb[0].mxu0
        %v2379 = vpop.f32.mrb[0].mxu0
        %v2380 = vadd.f32 0.0, %v2379
        %v2381 = vpop.f32.mrb[0].mxu0
        %2382 = vmatprep.mubr.bf16.mxu0 %v1473
        %2383 = vmatmul.mubr.bf16.gmra.mrb[0].mxu0 %v1472
        %v2384 = vpop.f32.mrb[0].mxu0
        %v2385 = vadd.f32 0.0, %v2384
        %v2386 = vpop.f32.mrb[0].mxu0
        %v2387 = vpop.f32.mrb[0].mxu0
        %v2388 = vadd.f32 0.0, %v2387
        %v2389 = vpop.f32.mrb[0].mxu0
        %2390 = vmatprep.mubr.bf16.mxu0 %v1475
        %2391 = vmatmul.mubr.bf16.gmra.mrb[0].mxu0 %v1474
        %v2392 = vpop.f32.mrb[0].mxu0
        %v2393 = vadd.f32 0.0, %v2392
        %v2394 = vpop.f32.mrb[0].mxu0
        %v2395 = vpop.f32.mrb[0].mxu0
        %v2396 = vadd.f32 0.0, %v2395
        %v2397 = vpop.f32.mrb[0].mxu0
        %2398 = vmatprep.mubr.bf16.mxu0 %v1477
        %2399 = vmatmul.mubr.bf16.gmra.mrb[0].mxu0 %v1476
        %v2400 = vpop.f32.mrb[0].mxu0
        %v2401 = vadd.f32 0.0, %v2400
        %v2402 = vpop.f32.mrb[0].mxu0
        %v2403 = vpop.f32.mrb[0].mxu0
        %v2404 = vadd.f32 0.0, %v2403
        %v2405 = vpop.f32.mrb[0].mxu0
        %2406 = vmatprep.mubr.bf16.mxu0 %v1479
        %2407 = vmatmul.mubr.bf16.gmra.mrb[0].mxu0 %v1478
        %v2408 = vpop.f32.mrb[0].mxu0
        %v2409 = vadd.f32 0.0, %v2408
        %v2410 = vpop.f32.mrb[0].mxu0
        %v2411 = vpop.f32.mrb[0].mxu0
        %v2412 = vadd.f32 0.0, %v2411
        %v2413 = vpop.f32.mrb[0].mxu0
        %2414 = vmatprep.mubr.bf16.mxu0 %v1481
        %2415 = vmatmul.mubr.bf16.gmra.mrb[0].mxu0 %v1480
        %v2416 = vpop.f32.mrb[0].mxu0
        %v2417 = vadd.f32 0.0, %v2416
        %v2418 = vpop.f32.mrb[0].mxu0
        %v2419 = vpop.f32.mrb[0].mxu0
        %v2420 = vadd.f32 0.0, %v2419
        %v2421 = vpop.f32.mrb[0].mxu0
        %2422 = vmatprep.mubr.bf16.mxu0 %v1483
        %2423 = vmatmul.mubr.bf16.gmra.mrb[0].mxu0 %v1482
        %v2424 = vpop.f32.mrb[0].mxu0
        %v2425 = vadd.f32 0.0, %v2424
        %v2426 = vpop.f32.mrb[0].mxu0
        %v2427 = vpop.f32.mrb[0].mxu0
        %v2428 = vadd.f32 0.0, %v2427
        %v2429 = vpop.f32.mrb[0].mxu0
        %2430 = vmatprep.mubr.bf16.mxu0 %v1485
        %2431 = vmatmul.mubr.bf16.gmra.mrb[0].mxu0 %v1484
        %v2432 = vpop.f32.mrb[0].mxu0
        %v2433 = vadd.f32 0.0, %v2432
        %v2434 = vpop.f32.mrb[0].mxu0
        %v2435 = vpop.f32.mrb[0].mxu0
        %v2436 = vadd.f32 0.0, %v2435
        %v2437 = vpop.f32.mrb[0].mxu0
        %2438 = vmatprep.mubr.bf16.mxu0 %v1487
        %2439 = vmatmul.mubr.bf16.gmra.mrb[0].mxu0 %v1486
        %v2440 = vpop.f32.mrb[0].mxu0
        %v2441 = vadd.f32 0.0, %v2440
        %v2442 = vpop.f32.mrb[0].mxu0
        %v2443 = vpop.f32.mrb[0].mxu0
        %v2444 = vadd.f32 0.0, %v2443
        %v2445 = vpop.f32.mrb[0].mxu0
        %2446 = vmatprep.mubr.bf16.mxu0 %v1489
        %2447 = vmatmul.mubr.bf16.gmra.mrb[0].mxu0 %v1488
        %v2448 = vpop.f32.mrb[0].mxu0
        %v2449 = vadd.f32 0.0, %v2448
        %v2450 = vpop.f32.mrb[0].mxu0
        %v2451 = vpop.f32.mrb[0].mxu0
        %v2452 = vadd.f32 0.0, %v2451
        %v2453 = vpop.f32.mrb[0].mxu0
        %2454 = vmatprep.mubr.bf16.mxu0 %v1491
        %2455 = vmatmul.mubr.bf16.gmra.mrb[0].mxu0 %v1490
        %v2456 = vpop.f32.mrb[0].mxu0
        %v2457 = vadd.f32 0.0, %v2456
        %v2458 = vpop.f32.mrb[0].mxu0
        %v2459 = vpop.f32.mrb[0].mxu0
        %v2460 = vadd.f32 0.0, %v2459
        %v2461 = vpop.f32.mrb[0].mxu0
        %2462 = vmatprep.mubr.bf16.mxu0 %v1493
        %2463 = vmatmul.mubr.bf16.gmra.mrb[0].mxu0 %v1492
        %v2464 = vpop.f32.mrb[0].mxu0
        %v2465 = vadd.f32 0.0, %v2464
        %v2466 = vpop.f32.mrb[0].mxu0
        %v2467 = vpop.f32.mrb[0].mxu0
        %v2468 = vadd.f32 0.0, %v2467
        %v2469 = vpop.f32.mrb[0].mxu0
        %2470 = vmatprep.mubr.bf16.mxu0 %v1495
        %2471 = vmatmul.mubr.bf16.gmra.mrb[0].mxu0 %v1494
        %v2472 = vpop.f32.mrb[0].mxu0
        %v2473 = vadd.f32 0.0, %v2472
        %v2474 = vpop.f32.mrb[0].mxu0
        %v2475 = vpop.f32.mrb[0].mxu0
        %v2476 = vadd.f32 0.0, %v2475
        %v2477 = vpop.f32.mrb[0].mxu0
        %2478 = vmatprep.mubr.bf16.mxu0 %v1497
        %2479 = vmatmul.mubr.bf16.gmra.mrb[0].mxu0 %v1496
        %v2480 = vpop.f32.mrb[0].mxu0
        %v2481 = vadd.f32 0.0, %v2480
        %v2482 = vpop.f32.mrb[0].mxu0
        %v2483 = vpop.f32.mrb[0].mxu0
        %v2484 = vadd.f32 0.0, %v2483
        %v2485 = vpop.f32.mrb[0].mxu0
        %2486 = vmatprep.mubr.bf16.mxu0 %v1499
        %2487 = vmatmul.mubr.bf16.gmra.mrb[0].mxu0 %v1498
        %v2488 = vpop.f32.mrb[0].mxu0
        %v2489 = vadd.f32 0.0, %v2488
        %v2490 = vpop.f32.mrb[0].mxu0
        %v2491 = vpop.f32.mrb[0].mxu0
        %v2492 = vadd.f32 0.0, %v2491
        %v2493 = vpop.f32.mrb[0].mxu0
        %2494 = vmatprep.mubr.bf16.mxu0 %v1501
        %2495 = vmatmul.mubr.bf16.gmra.mrb[0].mxu0 %v1500
        %v2496 = vpop.f32.mrb[0].mxu0
        %v2497 = vadd.f32 0.0, %v2496
        %v2498 = vpop.f32.mrb[0].mxu0
        %v2499 = vpop.f32.mrb[0].mxu0
        %v2500 = vadd.f32 0.0, %v2499
        %v2501 = vpop.f32.mrb[0].mxu0
        %2502 = vmatprep.mubr.bf16.mxu0 %v1503
        %2503 = vmatmul.mubr.bf16.gmra.mrb[0].mxu0 %v1502
        %v2504 = vpop.f32.mrb[0].mxu0
        %v2505 = vadd.f32 0.0, %v2504
        %v2506 = vpop.f32.mrb[0].mxu0
        %v2507 = vpop.f32.mrb[0].mxu0
        %v2508 = vadd.f32 0.0, %v2507
        %v2509 = vpop.f32.mrb[0].mxu0
        %2510 = vmatprep.mubr.bf16.mxu0 %v1505
        %2511 = vmatmul.mubr.bf16.gmra.mrb[0].mxu0 %v1504
        %v2512 = vpop.f32.mrb[0].mxu0
        %v2513 = vadd.f32 0.0, %v2512
        %v2514 = vpop.f32.mrb[0].mxu0
        %v2515 = vpop.f32.mrb[0].mxu0
        %v2516 = vadd.f32 0.0, %v2515
        %v2517 = vpop.f32.mrb[0].mxu0
        %2518 = vmatprep.mubr.bf16.mxu0 %v1507
        %2519 = vmatmul.mubr.bf16.gmra.mrb[0].mxu0 %v1506
        %v2520 = vpop.f32.mrb[0].mxu0
        %v2521 = vadd.f32 0.0, %v2520
        %v2522 = vpop.f32.mrb[0].mxu0
        %v2523 = vpop.f32.mrb[0].mxu0
        %v2524 = vadd.f32 0.0, %v2523
        %v2525 = vpop.f32.mrb[0].mxu0
        %2526 = vmatprep.mubr.bf16.mxu0 %v1509
        %2527 = vmatmul.mubr.bf16.gmra.mrb[0].mxu0 %v1508
        %v2528 = vpop.f32.mrb[0].mxu0
        %v2529 = vadd.f32 0.0, %v2528
        %v2530 = vpop.f32.mrb[0].mxu0
        %v2531 = vpop.f32.mrb[0].mxu0
        %v2532 = vadd.f32 0.0, %v2531
        %v2533 = vpop.f32.mrb[0].mxu0
        %2534 = vmatprep.mubr.bf16.mxu0 %v1511
        %2535 = vmatmul.mubr.bf16.gmra.mrb[0].mxu0 %v1510
        %v2536 = vpop.f32.mrb[0].mxu0
        %v2537 = vadd.f32 0.0, %v2536
        %v2538 = vpop.f32.mrb[0].mxu0
        %v2539 = vpop.f32.mrb[0].mxu0
        %v2540 = vadd.f32 0.0, %v2539
        %v2541 = vpop.f32.mrb[0].mxu0
        %2542 = vmatprep.mubr.bf16.mxu0 %v1513
        %2543 = vmatmul.mubr.bf16.gmra.mrb[0].mxu0 %v1512
        %v2544 = vpop.f32.mrb[0].mxu0
        %v2545 = vadd.f32 0.0, %v2544
        %v2546 = vpop.f32.mrb[0].mxu0
        %v2547 = vpop.f32.mrb[0].mxu0
        %v2548 = vadd.f32 0.0, %v2547
        %v2549 = vpop.f32.mrb[0].mxu0
        %2550 = vmatprep.mubr.bf16.mxu0 %v1515
        %2551 = vmatmul.mubr.bf16.gmra.mrb[0].mxu0 %v1514
        %v2552 = vpop.f32.mrb[0].mxu0
        %v2553 = vadd.f32 0.0, %v2552
        %v2554 = vpop.f32.mrb[0].mxu0
        %v2555 = vpop.f32.mrb[0].mxu0
        %v2556 = vadd.f32 0.0, %v2555
        %v2557 = vpop.f32.mrb[0].mxu0
        %2558 = vmatprep.mubr.bf16.mxu0 %v1517
        %2559 = vmatmul.mubr.bf16.gmra.mrb[0].mxu0 %v1516
        %v2560 = vpop.f32.mrb[0].mxu0
        %v2561 = vadd.f32 0.0, %v2560
        %v2562 = vpop.f32.mrb[0].mxu0
        %v2563 = vpop.f32.mrb[0].mxu0
        %v2564 = vadd.f32 0.0, %v2563
        %v2565 = vpop.f32.mrb[0].mxu0
        %2566 = vmatprep.mubr.bf16.mxu0 %v1519
        %2567 = vmatmul.mubr.bf16.gmra.mrb[0].mxu0 %v1518
        %v2568 = vpop.f32.mrb[0].mxu0
        %v2569 = vadd.f32 0.0, %v2568
        %v2570 = vpop.f32.mrb[0].mxu0
        %v2571 = vpop.f32.mrb[0].mxu0
        %v2572 = vadd.f32 0.0, %v2571
        %v2573 = vpop.f32.mrb[0].mxu0
        %2574 = vmatprep.mubr.bf16.mxu0 %v1521
        %2575 = vmatmul.mubr.bf16.gmra.mrb[0].mxu0 %v1520
        %v2576 = vpop.f32.mrb[0].mxu0
        %v2577 = vadd.f32 0.0, %v2576
        %v2578 = vpop.f32.mrb[0].mxu0
        %v2579 = vpop.f32.mrb[0].mxu0
        %v2580 = vadd.f32 0.0, %v2579
        %v2581 = vpop.f32.mrb[0].mxu0
        %2582 = vmatprep.mubr.bf16.mxu0 %v1523
        %2583 = vmatmul.mubr.bf16.gmra.mrb[0].mxu0 %v1522
        %v2584 = vpop.f32.mrb[0].mxu0
        %v2585 = vadd.f32 0.0, %v2584
        %v2586 = vpop.f32.mrb[0].mxu0
        %v2587 = vpop.f32.mrb[0].mxu0
        %v2588 = vadd.f32 0.0, %v2587
        %v2589 = vpop.f32.mrb[0].mxu0
        %2590 = vmatprep.mubr.bf16.mxu0 %v1525
        %2591 = vmatmul.mubr.bf16.gmra.mrb[0].mxu0 %v1524
        %v2592 = vpop.f32.mrb[0].mxu0
        %v2593 = vadd.f32 0.0, %v2592
        %v2594 = vpop.f32.mrb[0].mxu0
        %v2595 = vpop.f32.mrb[0].mxu0
        %v2596 = vadd.f32 0.0, %v2595
        %v2597 = vpop.f32.mrb[0].mxu0
        %2598 = vmatprep.mubr.bf16.mxu0 %v1527
        %2599 = vmatmul.mubr.bf16.gmra.mrb[0].mxu0 %v1526
        %v2600 = vpop.f32.mrb[0].mxu0
        %v2601 = vadd.f32 0.0, %v2600
        %v2602 = vpop.f32.mrb[0].mxu0
        %v2603 = vpop.f32.mrb[0].mxu0
        %v2604 = vadd.f32 0.0, %v2603
        %v2605 = vpop.f32.mrb[0].mxu0
        %2606 = vmatprep.mubr.bf16.mxu0 %v1529
        %2607 = vmatmul.mubr.bf16.gmra.mrb[0].mxu0 %v1528
        %v2608 = vpop.f32.mrb[0].mxu0
        %v2609 = vadd.f32 0.0, %v2608
        %v2610 = vpop.f32.mrb[0].mxu0
        %v2611 = vpop.f32.mrb[0].mxu0
        %v2612 = vadd.f32 0.0, %v2611
        %v2613 = vpop.f32.mrb[0].mxu0
        %2614 = vmatprep.mubr.bf16.mxu0 %v1531
        %2615 = vmatmul.mubr.bf16.gmra.mrb[0].mxu0 %v1530
        %v2616 = vpop.f32.mrb[0].mxu0
        %v2617 = vadd.f32 0.0, %v2616
        %v2618 = vpop.f32.mrb[0].mxu0
        %v2619 = vpop.f32.mrb[0].mxu0
        %v2620 = vadd.f32 0.0, %v2619
        %v2621 = vpop.f32.mrb[0].mxu0
        %2622 = vmatprep.mubr.bf16.mxu0 %v1533
        %2623 = vmatmul.mubr.bf16.gmra.mrb[0].mxu0 %v1532
        %v2624 = vpop.f32.mrb[0].mxu0
        %v2625 = vadd.f32 0.0, %v2624
        %v2626 = vpop.f32.mrb[0].mxu0
        %v2627 = vpop.f32.mrb[0].mxu0
        %v2628 = vadd.f32 0.0, %v2627
        %v2629 = vpop.f32.mrb[0].mxu0
        %2630 = vmatprep.mubr.bf16.mxu0 %v1535
        %2631 = vmatmul.mubr.bf16.gmra.mrb[0].mxu0 %v1534
        %v2632 = vpop.f32.mrb[0].mxu0
        %v2633 = vadd.f32 0.0, %v2632
        %v2634 = vpop.f32.mrb[0].mxu0
        %v2635 = vpop.f32.mrb[0].mxu0
        %v2636 = vadd.f32 0.0, %v2635
        %v2637 = vpop.f32.mrb[0].mxu0
        %2638 = vmatprep.mubr.bf16.mxu0 %v1537
        %2639 = vmatmul.mubr.bf16.gmra.mrb[0].mxu0 %v1536
        %v2640 = vpop.f32.mrb[0].mxu0
        %v2641 = vadd.f32 0.0, %v2640
        %v2642 = vpop.f32.mrb[0].mxu0
        %v2643 = vpop.f32.mrb[0].mxu0
        %v2644 = vadd.f32 0.0, %v2643
        %v2645 = vpop.f32.mrb[0].mxu0
        %2646 = vmatprep.mubr.bf16.mxu0 %v1539
        %2647 = vmatmul.mubr.bf16.gmra.mrb[0].mxu0 %v1538
        %v2648 = vpop.f32.mrb[0].mxu0
        %v2649 = vadd.f32 0.0, %v2648
        %v2650 = vpop.f32.mrb[0].mxu0
        %v2651 = vpop.f32.mrb[0].mxu0
        %v2652 = vadd.f32 0.0, %v2651
        %v2653 = vpop.f32.mrb[0].mxu0
        %2654 = vmatprep.mubr.bf16.mxu0 %v1541
        %2655 = vmatmul.mubr.bf16.gmra.mrb[0].mxu0 %v1540
        %v2656 = vpop.f32.mrb[0].mxu0
        %v2657 = vadd.f32 0.0, %v2656
        %v2658 = vpop.f32.mrb[0].mxu0
        %v2659 = vpop.f32.mrb[0].mxu0
        %v2660 = vadd.f32 0.0, %v2659
        %v2661 = vpop.f32.mrb[0].mxu0
        %2662 = vmatprep.mubr.bf16.mxu0 %v1543
        %2663 = vmatmul.mubr.bf16.gmra.mrb[0].mxu0 %v1542
        %v2664 = vpop.f32.mrb[0].mxu0
        %v2665 = vadd.f32 0.0, %v2664
        %v2666 = vpop.f32.mrb[0].mxu0
        %v2667 = vpop.f32.mrb[0].mxu0
        %v2668 = vadd.f32 0.0, %v2667
        %v2669 = vpop.f32.mrb[0].mxu0
        %2670 = vmatprep.mubr.bf16.mxu0 %v1545
        %2671 = vmatmul.mubr.bf16.gmra.mrb[0].mxu0 %v1544
        %v2672 = vpop.f32.mrb[0].mxu0
        %v2673 = vadd.f32 0.0, %v2672
        %v2674 = vpop.f32.mrb[0].mxu0
        %v2675 = vpop.f32.mrb[0].mxu0
        %v2676 = vadd.f32 0.0, %v2675
        %v2677 = vpop.f32.mrb[0].mxu0
        %2678 = vmatprep.mubr.bf16.mxu0 %v1547
        %2679 = vmatmul.mubr.bf16.gmra.mrb[0].mxu0 %v1546
        %v2680 = vpop.f32.mrb[0].mxu0
        %v2681 = vadd.f32 0.0, %v2680
        %v2682 = vpop.f32.mrb[0].mxu0
        %v2683 = vpop.f32.mrb[0].mxu0
        %v2684 = vadd.f32 0.0, %v2683
        %v2685 = vpop.f32.mrb[0].mxu0
        %2686 = vmatprep.mubr.bf16.mxu0 %v1549
        %2687 = vmatmul.mubr.bf16.gmra.mrb[0].mxu0 %v1548
        %v2688 = vpop.f32.mrb[0].mxu0
        %v2689 = vadd.f32 0.0, %v2688
        %v2690 = vpop.f32.mrb[0].mxu0
        %v2691 = vpop.f32.mrb[0].mxu0
        %v2692 = vadd.f32 0.0, %v2691
        %v2693 = vpop.f32.mrb[0].mxu0
        %2694 = vmatprep.mubr.bf16.mxu0 %v1551
        %2695 = vmatmul.mubr.bf16.gmra.mrb[0].mxu0 %v1550
        %v2696 = vpop.f32.mrb[0].mxu0
        %v2697 = vadd.f32 0.0, %v2696
        %v2698 = vpop.f32.mrb[0].mxu0
        %v2699 = vpop.f32.mrb[0].mxu0
        %v2700 = vadd.f32 0.0, %v2699
        %v2701 = vpop.f32.mrb[0].mxu0
        %2702 = vmatprep.mubr.bf16.mxu0 %v1553
        %2703 = vmatmul.mubr.bf16.gmra.mrb[0].mxu0 %v1552
        %v2704 = vpop.f32.mrb[0].mxu0
        %v2705 = vadd.f32 0.0, %v2704
        %v2706 = vpop.f32.mrb[0].mxu0
        %v2707 = vpop.f32.mrb[0].mxu0
        %v2708 = vadd.f32 0.0, %v2707
        %v2709 = vpop.f32.mrb[0].mxu0
        %2710 = vmatprep.mubr.bf16.mxu0 %v1555
        %2711 = vmatmul.mubr.bf16.gmra.mrb[0].mxu0 %v1554
        %v2712 = vpop.f32.mrb[0].mxu0
        %v2713 = vadd.f32 0.0, %v2712
        %v2714 = vpop.f32.mrb[0].mxu0
        %v2715 = vpop.f32.mrb[0].mxu0
        %v2716 = vadd.f32 0.0, %v2715
        %v2717 = vpop.f32.mrb[0].mxu0
        %2718 = vmatprep.mubr.bf16.mxu0 %v1557
        %2719 = vmatmul.mubr.bf16.gmra.mrb[0].mxu0 %v1556
        %v2720 = vpop.f32.mrb[0].mxu0
        %v2721 = vadd.f32 0.0, %v2720
        %v2722 = vpop.f32.mrb[0].mxu0
        %v2723 = vpop.f32.mrb[0].mxu0
        %v2724 = vadd.f32 0.0, %v2723
        %v2725 = vpop.f32.mrb[0].mxu0
        %2726 = vmatprep.mubr.bf16.mxu0 %v1559
        %2727 = vmatmul.mubr.bf16.gmra.mrb[0].mxu0 %v1558
        %v2728 = vpop.f32.mrb[0].mxu0
        %v2729 = vadd.f32 0.0, %v2728
        %v2730 = vpop.f32.mrb[0].mxu0
        %v2731 = vpop.f32.mrb[0].mxu0
        %v2732 = vadd.f32 0.0, %v2731
        %v2733 = vpop.f32.mrb[0].mxu0
        %2734 = vmatprep.mubr.bf16.mxu0 %v1561
        %2735 = vmatmul.mubr.bf16.gmra.mrb[0].mxu0 %v1560
        %v2736 = vpop.f32.mrb[0].mxu0
        %v2737 = vadd.f32 0.0, %v2736
        %v2738 = vpop.f32.mrb[0].mxu0
        %v2739 = vpop.f32.mrb[0].mxu0
        %v2740 = vadd.f32 0.0, %v2739
        %v2741 = vpop.f32.mrb[0].mxu0
        %2742 = vmatprep.mubr.bf16.mxu0 %v1563
        %2743 = vmatmul.mubr.bf16.gmra.mrb[0].mxu0 %v1562
        %v2744 = vpop.f32.mrb[0].mxu0
        %v2745 = vadd.f32 0.0, %v2744
        %v2746 = vpop.f32.mrb[0].mxu0
        %v2747 = vpop.f32.mrb[0].mxu0
        %v2748 = vadd.f32 0.0, %v2747
        %v2749 = vpop.f32.mrb[0].mxu0
        %2750 = vmatprep.mubr.bf16.mxu0 %v1565
        %2751 = vmatmul.mubr.bf16.gmra.mrb[0].mxu0 %v1564
        %v2752 = vpop.f32.mrb[0].mxu0
        %v2753 = vadd.f32 0.0, %v2752
        %v2754 = vpop.f32.mrb[0].mxu0
        %v2755 = vpop.f32.mrb[0].mxu0
        %v2756 = vadd.f32 0.0, %v2755
        %v2757 = vpop.f32.mrb[0].mxu0
        %2758 = vmatprep.mubr.bf16.mxu0 %v1567
        %2759 = vmatmul.mubr.bf16.gmra.mrb[0].mxu0 %v1566
        %v2760 = vpop.f32.mrb[0].mxu0
        %v2761 = vadd.f32 0.0, %v2760
        %v2762 = vpop.f32.mrb[0].mxu0
        %v2763 = vpop.f32.mrb[0].mxu0
        %v2764 = vadd.f32 0.0, %v2763
        %v2765 = vpop.f32.mrb[0].mxu0
        %2766 = vmatprep.mubr.bf16.mxu0 %v1569
        %2767 = vmatmul.mubr.bf16.gmra.mrb[0].mxu0 %v1568
        %v2768 = vpop.f32.mrb[0].mxu0
        %v2769 = vadd.f32 0.0, %v2768
        %v2770 = vpop.f32.mrb[0].mxu0
        %v2771 = vpop.f32.mrb[0].mxu0
        %v2772 = vadd.f32 0.0, %v2771
        %v2773 = vpop.f32.mrb[0].mxu0
        %2774 = vmatprep.mubr.bf16.mxu0 %v1571
        %2775 = vmatmul.mubr.bf16.gmra.mrb[0].mxu0 %v1570
        %v2776 = vpop.f32.mrb[0].mxu0
        %v2777 = vadd.f32 0.0, %v2776
        %v2778 = vpop.f32.mrb[0].mxu0
        %v2779 = vpop.f32.mrb[0].mxu0
        %v2780 = vadd.f32 0.0, %v2779
        %v2781 = vpop.f32.mrb[0].mxu0
        %2782 = vmatprep.mubr.bf16.mxu0 %v1573
        %2783 = vmatmul.mubr.bf16.gmra.mrb[0].mxu0 %v1572
        %v2784 = vpop.f32.mrb[0].mxu0
        %v2785 = vadd.f32 0.0, %v2784
        %v2786 = vpop.f32.mrb[0].mxu0
        %v2787 = vpop.f32.mrb[0].mxu0
        %v2788 = vadd.f32 0.0, %v2787
        %v2789 = vpop.f32.mrb[0].mxu0
        %2790 = vmatprep.mubr.bf16.mxu0 %v1575
        %2791 = vmatmul.mubr.bf16.gmra.mrb[0].mxu0 %v1574
        %v2792 = vpop.f32.mrb[0].mxu0
        %v2793 = vadd.f32 0.0, %v2792
        %v2794 = vpop.f32.mrb[0].mxu0
        %v2795 = vpop.f32.mrb[0].mxu0
        %v2796 = vadd.f32 0.0, %v2795
        %v2797 = vpop.f32.mrb[0].mxu0
        %2798 = vmatprep.mubr.bf16.mxu0 %v1577
        %2799 = vmatmul.mubr.bf16.gmra.mrb[0].mxu0 %v1576
        %v2800 = vpop.f32.mrb[0].mxu0
        %v2801 = vadd.f32 0.0, %v2800
        %v2802 = vpop.f32.mrb[0].mxu0
        %v2803 = vpop.f32.mrb[0].mxu0
        %v2804 = vadd.f32 0.0, %v2803
        %v2805 = vpop.f32.mrb[0].mxu0
        %2806 = vmatprep.mubr.bf16.mxu0 %v1579
        %2807 = vmatmul.mubr.bf16.gmra.mrb[0].mxu0 %v1578
        %v2808 = vpop.f32.mrb[0].mxu0
        %v2809 = vadd.f32 0.0, %v2808
        %v2810 = vpop.f32.mrb[0].mxu0
        %v2811 = vpop.f32.mrb[0].mxu0
        %v2812 = vadd.f32 0.0, %v2811
        %v2813 = vpop.f32.mrb[0].mxu0
        %2814 = vmatprep.mubr.bf16.mxu0 %v1581
        %2815 = vmatmul.mubr.bf16.gmra.mrb[0].mxu0 %v1580
        %v2816 = vpop.f32.mrb[0].mxu0
        %v2817 = vadd.f32 0.0, %v2816
        %v2818 = vpop.f32.mrb[0].mxu0
        %v2819 = vpop.f32.mrb[0].mxu0
        %v2820 = vadd.f32 0.0, %v2819
        %v2821 = vpop.f32.mrb[0].mxu0
        %2822 = vmatprep.mubr.bf16.mxu0 %v1583
        %2823 = vmatmul.mubr.bf16.gmra.mrb[0].mxu0 %v1582
        %v2824 = vpop.f32.mrb[0].mxu0
        %v2825 = vadd.f32 0.0, %v2824
        %v2826 = vpop.f32.mrb[0].mxu0
        %v2827 = vpop.f32.mrb[0].mxu0
        %v2828 = vadd.f32 0.0, %v2827
        %v2829 = vpop.f32.mrb[0].mxu0
        %2830 = vmatprep.mubr.bf16.mxu0 %v1585
        %2831 = vmatmul.mubr.bf16.gmra.mrb[0].mxu0 %v1584
        %v2832 = vpop.f32.mrb[0].mxu0
        %v2833 = vadd.f32 0.0, %v2832
        %v2834 = vpop.f32.mrb[0].mxu0
        %v2835 = vpop.f32.mrb[0].mxu0
        %v2836 = vadd.f32 0.0, %v2835
        %v2837 = vpop.f32.mrb[0].mxu0
        %2838 = vmatprep.mubr.bf16.mxu0 %v1587
        %2839 = vmatmul.mubr.bf16.gmra.mrb[0].mxu0 %v1586
        %v2840 = vpop.f32.mrb[0].mxu0
        %v2841 = vadd.f32 0.0, %v2840
        %v2842 = vpop.f32.mrb[0].mxu0
        %v2843 = vpop.f32.mrb[0].mxu0
        %v2844 = vadd.f32 0.0, %v2843
        %v2845 = vpop.f32.mrb[0].mxu0
        %2846 = vmatprep.mubr.bf16.mxu0 %v1589
        %2847 = vmatmul.mubr.bf16.gmra.mrb[0].mxu0 %v1588
        %v2848 = vpop.f32.mrb[0].mxu0
        %v2849 = vadd.f32 0.0, %v2848
        %v2850 = vpop.f32.mrb[0].mxu0
        %v2851 = vpop.f32.mrb[0].mxu0
        %v2852 = vadd.f32 0.0, %v2851
        %v2853 = vpop.f32.mrb[0].mxu0
        %2854 = vmatprep.mubr.bf16.mxu0 %v1591
        %2855 = vmatmul.mubr.bf16.gmra.mrb[0].mxu0 %v1590
        %v2856 = vpop.f32.mrb[0].mxu0
        %v2857 = vadd.f32 0.0, %v2856
        %v2858 = vpop.f32.mrb[0].mxu0
        %v2859 = vpop.f32.mrb[0].mxu0
        %v2860 = vadd.f32 0.0, %v2859
        %v2861 = vpop.f32.mrb[0].mxu0
        %2862 = vmatprep.mubr.bf16.mxu0 %v1593
        %2863 = vmatmul.mubr.bf16.gmra.mrb[0].mxu0 %v1592
        %v2864 = vpop.f32.mrb[0].mxu0
        %v2865 = vadd.f32 0.0, %v2864
        %v2866 = vpop.f32.mrb[0].mxu0
        %v2867 = vpop.f32.mrb[0].mxu0
        %v2868 = vadd.f32 0.0, %v2867
        %v2869 = vpop.f32.mrb[0].mxu0
        %2870 = vmatprep.mubr.bf16.mxu0 %v1595
        %2871 = vmatmul.mubr.bf16.gmra.mrb[0].mxu0 %v1594
        %v2872 = vpop.f32.mrb[0].mxu0
        %v2873 = vadd.f32 0.0, %v2872
        %v2874 = vpop.f32.mrb[0].mxu0
        %v2875 = vpop.f32.mrb[0].mxu0
        %v2876 = vadd.f32 0.0, %v2875
        %v2877 = vpop.f32.mrb[0].mxu0
        %2878 = vmatprep.mubr.bf16.mxu0 %v1597
        %2879 = vmatmul.mubr.bf16.gmra.mrb[0].mxu0 %v1596
        %v2880 = vpop.f32.mrb[0].mxu0
        %v2881 = vadd.f32 0.0, %v2880
        %v2882 = vpop.f32.mrb[0].mxu0
        %v2883 = vpop.f32.mrb[0].mxu0
        %v2884 = vadd.f32 0.0, %v2883
        %v2885 = vpop.f32.mrb[0].mxu0
        %2886 = vmatprep.mubr.bf16.mxu0 %v1599
        %2887 = vmatmul.mubr.bf16.gmra.mrb[0].mxu0 %v1598
        %v2888 = vpop.f32.mrb[0].mxu0
        %v2889 = vadd.f32 0.0, %v2888
        %v2890 = vpop.f32.mrb[0].mxu0
        %v2891 = vpop.f32.mrb[0].mxu0
        %v2892 = vadd.f32 0.0, %v2891
        %v2893 = vpop.f32.mrb[0].mxu0
        %2894 = vmatprep.mubr.bf16.mxu0 %v1601
        %2895 = vmatmul.mubr.bf16.gmra.mrb[0].mxu0 %v1600
        %v2896 = vpop.f32.mrb[0].mxu0
        %v2897 = vadd.f32 0.0, %v2896
        %v2898 = vpop.f32.mrb[0].mxu0
        %v2899 = vpop.f32.mrb[0].mxu0
        %v2900 = vadd.f32 0.0, %v2899
        %v2901 = vpop.f32.mrb[0].mxu0
        %2902 = vmatprep.mubr.bf16.mxu0 %v1603
        %2903 = vmatmul.mubr.bf16.gmra.mrb[0].mxu0 %v1602
        %v2904 = vpop.f32.mrb[0].mxu0
        %v2905 = vadd.f32 0.0, %v2904
        %v2906 = vpop.f32.mrb[0].mxu0
        %v2907 = vpop.f32.mrb[0].mxu0
        %v2908 = vadd.f32 0.0, %v2907
        %v2909 = vpop.f32.mrb[0].mxu0
        %2910 = vmatprep.mubr.bf16.mxu0 %v1605
        %2911 = vmatmul.mubr.bf16.gmra.mrb[0].mxu0 %v1604
        %v2912 = vpop.f32.mrb[0].mxu0
        %v2913 = vadd.f32 0.0, %v2912
        %v2914 = vpop.f32.mrb[0].mxu0
        %v2915 = vpop.f32.mrb[0].mxu0
        %v2916 = vadd.f32 0.0, %v2915
        %v2917 = vpop.f32.mrb[0].mxu0
        %2918 = vmatprep.mubr.bf16.mxu0 %v1607
        %2919 = vmatmul.mubr.bf16.gmra.mrb[0].mxu0 %v1606
        %v2920 = vpop.f32.mrb[0].mxu0
        %v2921 = vadd.f32 0.0, %v2920
        %v2922 = vpop.f32.mrb[0].mxu0
        %v2923 = vpop.f32.mrb[0].mxu0
        %v2924 = vadd.f32 0.0, %v2923
        %v2925 = vpop.f32.mrb[0].mxu0
        %2926 = vmatprep.mubr.bf16.mxu0 %v1609
        %2927 = vmatmul.mubr.bf16.gmra.mrb[0].mxu0 %v1608
        %v2928 = vpop.f32.mrb[0].mxu0
        %v2929 = vadd.f32 0.0, %v2928
        %v2930 = vpop.f32.mrb[0].mxu0
        %v2931 = vpop.f32.mrb[0].mxu0
        %v2932 = vadd.f32 0.0, %v2931
        %v2933 = vpop.f32.mrb[0].mxu0
        %2934 = vmatprep.mubr.bf16.mxu0 %v1611
        %2935 = vmatmul.mubr.bf16.gmra.mrb[0].mxu0 %v1610
        %v2936 = vpop.f32.mrb[0].mxu0
        %v2937 = vadd.f32 0.0, %v2936
        %v2938 = vpop.f32.mrb[0].mxu0
        %v2939 = vpop.f32.mrb[0].mxu0
        %v2940 = vadd.f32 0.0, %v2939
        %v2941 = vpop.f32.mrb[0].mxu0
        %2942 = vmatprep.mubr.bf16.mxu0 %v1613
        %2943 = vmatmul.mubr.bf16.gmra.mrb[0].mxu0 %v1612
        %v2944 = vpop.f32.mrb[0].mxu0
        %v2945 = vadd.f32 0.0, %v2944
        %v2946 = vpop.f32.mrb[0].mxu0
        %v2947 = vpop.f32.mrb[0].mxu0
        %v2948 = vadd.f32 0.0, %v2947
        %v2949 = vpop.f32.mrb[0].mxu0
        %2950 = vmatprep.mubr.bf16.mxu0 %v1615
        %2951 = vmatmul.mubr.bf16.gmra.mrb[0].mxu0 %v1614
        %v2952 = vpop.f32.mrb[0].mxu0
        %v2953 = vadd.f32 0.0, %v2952
        %v2954 = vpop.f32.mrb[0].mxu0
        %v2955 = vpop.f32.mrb[0].mxu0
        %v2956 = vadd.f32 0.0, %v2955
        %v2957 = vpop.f32.mrb[0].mxu0
        %2958 = vmatprep.mubr.bf16.mxu0 %v1617
        %2959 = vmatmul.mubr.bf16.gmra.mrb[0].mxu0 %v1616
        %v2960 = vpop.f32.mrb[0].mxu0
        %v2961 = vadd.f32 0.0, %v2960
        %v2962 = vpop.f32.mrb[0].mxu0
        %v2963 = vpop.f32.mrb[0].mxu0
        %v2964 = vadd.f32 0.0, %v2963
        %v2965 = vpop.f32.mrb[0].mxu0
        %2966 = vmatprep.mubr.bf16.mxu0 %v1619
        %2967 = vmatmul.mubr.bf16.gmra.mrb[0].mxu0 %v1618
        %v2968 = vpop.f32.mrb[0].mxu0
        %v2969 = vadd.f32 0.0, %v2968
        %v2970 = vpop.f32.mrb[0].mxu0
        %v2971 = vpop.f32.mrb[0].mxu0
        %v2972 = vadd.f32 0.0, %v2971
        %v2973 = vpop.f32.mrb[0].mxu0
        %2974 = vmatprep.mubr.bf16.mxu0 %v1621
        %2975 = vmatmul.mubr.bf16.gmra.mrb[0].mxu0 %v1620
        %v2976 = vpop.f32.mrb[0].mxu0
        %v2977 = vadd.f32 0.0, %v2976
        %v2978 = vpop.f32.mrb[0].mxu0
        %v2979 = vpop.f32.mrb[0].mxu0
        %v2980 = vadd.f32 0.0, %v2979
        %v2981 = vpop.f32.mrb[0].mxu0
        %2982 = vmatprep.mubr.bf16.mxu0 %v1623
        %2983 = vmatmul.mubr.bf16.gmra.mrb[0].mxu0 %v1622
        %v2984 = vpop.f32.mrb[0].mxu0
        %v2985 = vadd.f32 0.0, %v2984
        %v2986 = vpop.f32.mrb[0].mxu0
        %v2987 = vpop.f32.mrb[0].mxu0
        %v2988 = vadd.f32 0.0, %v2987
        %v2989 = vpop.f32.mrb[0].mxu0
        %2990 = vmatprep.mubr.bf16.mxu0 %v1625
        %2991 = vmatmul.mubr.bf16.gmra.mrb[0].mxu0 %v1624
        %v2992 = vpop.f32.mrb[0].mxu0
        %v2993 = vadd.f32 0.0, %v2992
        %v2994 = vpop.f32.mrb[0].mxu0
        %v2995 = vpop.f32.mrb[0].mxu0
        %v2996 = vadd.f32 0.0, %v2995
        %v2997 = vpop.f32.mrb[0].mxu0
        %2998 = vmatprep.mubr.bf16.mxu0 %v1627
        %2999 = vmatmul.mubr.bf16.gmra.mrb[0].mxu0 %v1626
        %v3000 = vpop.f32.mrb[0].mxu0
        %v3001 = vadd.f32 0.0, %v3000
        %v3002 = vpop.f32.mrb[0].mxu0
        %v3003 = vpop.f32.mrb[0].mxu0
        %v3004 = vadd.f32 0.0, %v3003
        %v3005 = vpop.f32.mrb[0].mxu0
        %3006 = vmatprep.mubr.bf16.mxu0 %v1629
        %3007 = vmatmul.mubr.bf16.gmra.mrb[0].mxu0 %v1628
        %v3008 = vpop.f32.mrb[0].mxu0
        %v3009 = vadd.f32 0.0, %v3008
        %v3010 = vpop.f32.mrb[0].mxu0
        %v3011 = vpop.f32.mrb[0].mxu0
        %v3012 = vadd.f32 0.0, %v3011
        %v3013 = vpop.f32.mrb[0].mxu0
        %3014 = vmatprep.mubr.bf16.mxu0 %v1631
        %3015 = vmatmul.mubr.bf16.gmra.mrb[0].mxu0 %v1630
        %v3016 = vpop.f32.mrb[0].mxu0
        %v3017 = vadd.f32 0.0, %v3016
        %v3018 = vpop.f32.mrb[0].mxu0
        %v3019 = vpop.f32.mrb[0].mxu0
        %v3020 = vadd.f32 0.0, %v3019
        %v3021 = vpop.f32.mrb[0].mxu0
        %3022 = vmatprep.mubr.bf16.mxu0 %v1633
        %3023 = vmatmul.mubr.bf16.gmra.mrb[0].mxu0 %v1632
        %v3024 = vpop.f32.mrb[0].mxu0
        %v3025 = vadd.f32 0.0, %v3024
        %v3026 = vpop.f32.mrb[0].mxu0
        %v3027 = vpop.f32.mrb[0].mxu0
        %v3028 = vadd.f32 0.0, %v3027
        %v3029 = vpop.f32.mrb[0].mxu0
        %3030 = vmatprep.mubr.bf16.mxu0 %v1635
        %3031 = vmatmul.mubr.bf16.gmra.mrb[0].mxu0 %v1634
        %v3032 = vpop.f32.mrb[0].mxu0
        %v3033 = vadd.f32 0.0, %v3032
        %v3034 = vpop.f32.mrb[0].mxu0
        %v3035 = vpop.f32.mrb[0].mxu0
        %v3036 = vadd.f32 0.0, %v3035
        %v3037 = vpop.f32.mrb[0].mxu0
        %3038 = vmatprep.mubr.bf16.mxu0 %v1637
        %3039 = vmatmul.mubr.bf16.gmra.mrb[0].mxu0 %v1636
        %v3040 = vpop.f32.mrb[0].mxu0
        %v3041 = vadd.f32 0.0, %v3040
        %v3042 = vpop.f32.mrb[0].mxu0
        %v3043 = vpop.f32.mrb[0].mxu0
        %v3044 = vadd.f32 0.0, %v3043
        %v3045 = vpop.f32.mrb[0].mxu0
        %3046 = vdwg.mxu0
        %v3047 = vld [vmem:[%s316] sm:$0x1]
        %v3049 = vlaneseq
        %v3050 = vshrl.u32 %v3049, 7
        %v3051 = vsub.s32 0, %v3050
        %v3052 = vrot.slane %v3047, %v3051
        %v3054 = vmul.f32 %v2025, %v3052
        %v3055 = vmul.f32 %v2028, %v3052
        %v3056 = vmul.f32 %v2033, %v3052
        %v3057 = vmul.f32 %v2036, %v3052
        %v3058 = vmul.f32 %v2041, %v3052
        %v3059 = vmul.f32 %v2044, %v3052
        %v3060 = vmul.f32 %v2049, %v3052
        %v3061 = vmul.f32 %v2052, %v3052
        %v3062 = vmul.f32 %v2057, %v3052
        %v3063 = vmul.f32 %v2060, %v3052
        %v3064 = vmul.f32 %v2065, %v3052
        %v3065 = vmul.f32 %v2068, %v3052
        %v3066 = vmul.f32 %v2073, %v3052
        %v3067 = vmul.f32 %v2076, %v3052
        %v3068 = vmul.f32 %v2081, %v3052
        %v3069 = vmul.f32 %v2084, %v3052
        %v3070 = vmul.f32 %v2089, %v3052
        %v3071 = vmul.f32 %v2092, %v3052
        %v3072 = vmul.f32 %v2097, %v3052
        %v3073 = vmul.f32 %v2100, %v3052
        %v3074 = vmul.f32 %v2105, %v3052
        %v3075 = vmul.f32 %v2108, %v3052
        %v3076 = vmul.f32 %v2113, %v3052
        %v3077 = vmul.f32 %v2116, %v3052
        %v3078 = vmul.f32 %v2121, %v3052
        %v3079 = vmul.f32 %v2124, %v3052
        %v3080 = vmul.f32 %v2129, %v3052
        %v3081 = vmul.f32 %v2132, %v3052
        %v3082 = vmul.f32 %v2137, %v3052
        %v3083 = vmul.f32 %v2140, %v3052
        %v3084 = vmul.f32 %v2145, %v3052
        %v3085 = vmul.f32 %v2148, %v3052
        %v3086 = vmul.f32 %v2153, %v3052
        %v3087 = vmul.f32 %v2156, %v3052
        %v3088 = vmul.f32 %v2161, %v3052
        %v3089 = vmul.f32 %v2164, %v3052
        %v3090 = vmul.f32 %v2169, %v3052
        %v3091 = vmul.f32 %v2172, %v3052
        %v3092 = vmul.f32 %v2177, %v3052
        %v3093 = vmul.f32 %v2180, %v3052
        %v3094 = vmul.f32 %v2185, %v3052
        %v3095 = vmul.f32 %v2188, %v3052
        %v3096 = vmul.f32 %v2193, %v3052
        %v3097 = vmul.f32 %v2196, %v3052
        %v3098 = vmul.f32 %v2201, %v3052
        %v3099 = vmul.f32 %v2204, %v3052
        %v3100 = vmul.f32 %v2209, %v3052
        %v3101 = vmul.f32 %v2212, %v3052
        %v3102 = vmul.f32 %v2217, %v3052
        %v3103 = vmul.f32 %v2220, %v3052
        %v3104 = vmul.f32 %v2225, %v3052
        %v3105 = vmul.f32 %v2228, %v3052
        %v3106 = vmul.f32 %v2233, %v3052
        %v3107 = vmul.f32 %v2236, %v3052
        %v3108 = vmul.f32 %v2241, %v3052
        %v3109 = vmul.f32 %v2244, %v3052
        %v3110 = vmul.f32 %v2249, %v3052
        %v3111 = vmul.f32 %v2252, %v3052
        %v3112 = vmul.f32 %v2257, %v3052
        %v3113 = vmul.f32 %v2260, %v3052
        %v3114 = vmul.f32 %v2265, %v3052
        %v3115 = vmul.f32 %v2268, %v3052
        %v3116 = vmul.f32 %v2273, %v3052
        %v3117 = vmul.f32 %v2276, %v3052
        %v3118 = vmul.f32 %v2281, %v3052
        %v3119 = vmul.f32 %v2284, %v3052
        %v3120 = vmul.f32 %v2289, %v3052
        %v3121 = vmul.f32 %v2292, %v3052
        %v3122 = vmul.f32 %v2297, %v3052
        %v3123 = vmul.f32 %v2300, %v3052
        %v3124 = vmul.f32 %v2305, %v3052
        %v3125 = vmul.f32 %v2308, %v3052
        %v3126 = vmul.f32 %v2313, %v3052
        %v3127 = vmul.f32 %v2316, %v3052
        %v3128 = vmul.f32 %v2321, %v3052
        %v3129 = vmul.f32 %v2324, %v3052
        %v3130 = vmul.f32 %v2329, %v3052
        %v3131 = vmul.f32 %v2332, %v3052
        %v3132 = vmul.f32 %v2337, %v3052
        %v3133 = vmul.f32 %v2340, %v3052
        %v3134 = vmul.f32 %v2345, %v3052
        %v3135 = vmul.f32 %v2348, %v3052
        %v3136 = vmul.f32 %v2353, %v3052
        %v3137 = vmul.f32 %v2356, %v3052
        %v3138 = vmul.f32 %v2361, %v3052
        %v3139 = vmul.f32 %v2364, %v3052
        %v3140 = vmul.f32 %v2369, %v3052
        %v3141 = vmul.f32 %v2372, %v3052
        %v3142 = vmul.f32 %v2377, %v3052
        %v3143 = vmul.f32 %v2380, %v3052
        %v3144 = vmul.f32 %v2385, %v3052
        %v3145 = vmul.f32 %v2388, %v3052
        %v3146 = vmul.f32 %v2393, %v3052
        %v3147 = vmul.f32 %v2396, %v3052
        %v3148 = vmul.f32 %v2401, %v3052
        %v3149 = vmul.f32 %v2404, %v3052
        %v3150 = vmul.f32 %v2409, %v3052
        %v3151 = vmul.f32 %v2412, %v3052
        %v3152 = vmul.f32 %v2417, %v3052
        %v3153 = vmul.f32 %v2420, %v3052
        %v3154 = vmul.f32 %v2425, %v3052
        %v3155 = vmul.f32 %v2428, %v3052
        %v3156 = vmul.f32 %v2433, %v3052
        %v3157 = vmul.f32 %v2436, %v3052
        %v3158 = vmul.f32 %v2441, %v3052
        %v3159 = vmul.f32 %v2444, %v3052
        %v3160 = vmul.f32 %v2449, %v3052
        %v3161 = vmul.f32 %v2452, %v3052
        %v3162 = vmul.f32 %v2457, %v3052
        %v3163 = vmul.f32 %v2460, %v3052
        %v3164 = vmul.f32 %v2465, %v3052
        %v3165 = vmul.f32 %v2468, %v3052
        %v3166 = vmul.f32 %v2473, %v3052
        %v3167 = vmul.f32 %v2476, %v3052
        %v3168 = vmul.f32 %v2481, %v3052
        %v3169 = vmul.f32 %v2484, %v3052
        %v3170 = vmul.f32 %v2489, %v3052
        %v3171 = vmul.f32 %v2492, %v3052
        %v3172 = vmul.f32 %v2497, %v3052
        %v3173 = vmul.f32 %v2500, %v3052
        %v3174 = vmul.f32 %v2505, %v3052
        %v3175 = vmul.f32 %v2508, %v3052
        %v3176 = vmul.f32 %v2513, %v3052
        %v3177 = vmul.f32 %v2516, %v3052
        %v3178 = vmul.f32 %v2521, %v3052
        %v3179 = vmul.f32 %v2524, %v3052
        %v3180 = vmul.f32 %v2529, %v3052
        %v3181 = vmul.f32 %v2532, %v3052
        %v3182 = vmul.f32 %v2537, %v3052
        %v3183 = vmul.f32 %v2540, %v3052
        %v3184 = vmul.f32 %v2545, %v3052
        %v3185 = vmul.f32 %v2548, %v3052
        %v3186 = vmul.f32 %v2553, %v3052
        %v3187 = vmul.f32 %v2556, %v3052
        %v3188 = vmul.f32 %v2561, %v3052
        %v3189 = vmul.f32 %v2564, %v3052
        %v3190 = vmul.f32 %v2569, %v3052
        %v3191 = vmul.f32 %v2572, %v3052
        %v3192 = vmul.f32 %v2577, %v3052
        %v3193 = vmul.f32 %v2580, %v3052
        %v3194 = vmul.f32 %v2585, %v3052
        %v3195 = vmul.f32 %v2588, %v3052
        %v3196 = vmul.f32 %v2593, %v3052
        %v3197 = vmul.f32 %v2596, %v3052
        %v3198 = vmul.f32 %v2601, %v3052
        %v3199 = vmul.f32 %v2604, %v3052
        %v3200 = vmul.f32 %v2609, %v3052
        %v3201 = vmul.f32 %v2612, %v3052
        %v3202 = vmul.f32 %v2617, %v3052
        %v3203 = vmul.f32 %v2620, %v3052
        %v3204 = vmul.f32 %v2625, %v3052
        %v3205 = vmul.f32 %v2628, %v3052
        %v3206 = vmul.f32 %v2633, %v3052
        %v3207 = vmul.f32 %v2636, %v3052
        %v3208 = vmul.f32 %v2641, %v3052
        %v3209 = vmul.f32 %v2644, %v3052
        %v3210 = vmul.f32 %v2649, %v3052
        %v3211 = vmul.f32 %v2652, %v3052
        %v3212 = vmul.f32 %v2657, %v3052
        %v3213 = vmul.f32 %v2660, %v3052
        %v3214 = vmul.f32 %v2665, %v3052
        %v3215 = vmul.f32 %v2668, %v3052
        %v3216 = vmul.f32 %v2673, %v3052
        %v3217 = vmul.f32 %v2676, %v3052
        %v3218 = vmul.f32 %v2681, %v3052
        %v3219 = vmul.f32 %v2684, %v3052
        %v3220 = vmul.f32 %v2689, %v3052
        %v3221 = vmul.f32 %v2692, %v3052
        %v3222 = vmul.f32 %v2697, %v3052
        %v3223 = vmul.f32 %v2700, %v3052
        %v3224 = vmul.f32 %v2705, %v3052
        %v3225 = vmul.f32 %v2708, %v3052
        %v3226 = vmul.f32 %v2713, %v3052
        %v3227 = vmul.f32 %v2716, %v3052
        %v3228 = vmul.f32 %v2721, %v3052
        %v3229 = vmul.f32 %v2724, %v3052
        %v3230 = vmul.f32 %v2729, %v3052
        %v3231 = vmul.f32 %v2732, %v3052
        %v3232 = vmul.f32 %v2737, %v3052
        %v3233 = vmul.f32 %v2740, %v3052
        %v3234 = vmul.f32 %v2745, %v3052
        %v3235 = vmul.f32 %v2748, %v3052
        %v3236 = vmul.f32 %v2753, %v3052
        %v3237 = vmul.f32 %v2756, %v3052
        %v3238 = vmul.f32 %v2761, %v3052
        %v3239 = vmul.f32 %v2764, %v3052
        %v3240 = vmul.f32 %v2769, %v3052
        %v3241 = vmul.f32 %v2772, %v3052
        %v3242 = vmul.f32 %v2777, %v3052
        %v3243 = vmul.f32 %v2780, %v3052
        %v3244 = vmul.f32 %v2785, %v3052
        %v3245 = vmul.f32 %v2788, %v3052
        %v3246 = vmul.f32 %v2793, %v3052
        %v3247 = vmul.f32 %v2796, %v3052
        %v3248 = vmul.f32 %v2801, %v3052
        %v3249 = vmul.f32 %v2804, %v3052
        %v3250 = vmul.f32 %v2809, %v3052
        %v3251 = vmul.f32 %v2812, %v3052
        %v3252 = vmul.f32 %v2817, %v3052
        %v3253 = vmul.f32 %v2820, %v3052
        %v3254 = vmul.f32 %v2825, %v3052
        %v3255 = vmul.f32 %v2828, %v3052
        %v3256 = vmul.f32 %v2833, %v3052
        %v3257 = vmul.f32 %v2836, %v3052
        %v3258 = vmul.f32 %v2841, %v3052
        %v3259 = vmul.f32 %v2844, %v3052
        %v3260 = vmul.f32 %v2849, %v3052
        %v3261 = vmul.f32 %v2852, %v3052
        %v3262 = vmul.f32 %v2857, %v3052
        %v3263 = vmul.f32 %v2860, %v3052
        %v3264 = vmul.f32 %v2865, %v3052
        %v3265 = vmul.f32 %v2868, %v3052
        %v3266 = vmul.f32 %v2873, %v3052
        %v3267 = vmul.f32 %v2876, %v3052
        %v3268 = vmul.f32 %v2881, %v3052
        %v3269 = vmul.f32 %v2884, %v3052
        %v3270 = vmul.f32 %v2889, %v3052
        %v3271 = vmul.f32 %v2892, %v3052
        %v3272 = vmul.f32 %v2897, %v3052
        %v3273 = vmul.f32 %v2900, %v3052
        %v3274 = vmul.f32 %v2905, %v3052
        %v3275 = vmul.f32 %v2908, %v3052
        %v3276 = vmul.f32 %v2913, %v3052
        %v3277 = vmul.f32 %v2916, %v3052
        %v3278 = vmul.f32 %v2921, %v3052
        %v3279 = vmul.f32 %v2924, %v3052
        %v3280 = vmul.f32 %v2929, %v3052
        %v3281 = vmul.f32 %v2932, %v3052
        %v3282 = vmul.f32 %v2937, %v3052
        %v3283 = vmul.f32 %v2940, %v3052
        %v3284 = vmul.f32 %v2945, %v3052
        %v3285 = vmul.f32 %v2948, %v3052
        %v3286 = vmul.f32 %v2953, %v3052
        %v3287 = vmul.f32 %v2956, %v3052
        %v3288 = vmul.f32 %v2961, %v3052
        %v3289 = vmul.f32 %v2964, %v3052
        %v3290 = vmul.f32 %v2969, %v3052
        %v3291 = vmul.f32 %v2972, %v3052
        %v3292 = vmul.f32 %v2977, %v3052
        %v3293 = vmul.f32 %v2980, %v3052
        %v3294 = vmul.f32 %v2985, %v3052
        %v3295 = vmul.f32 %v2988, %v3052
        %v3296 = vmul.f32 %v2993, %v3052
        %v3297 = vmul.f32 %v2996, %v3052
        %v3298 = vmul.f32 %v3001, %v3052
        %v3299 = vmul.f32 %v3004, %v3052
        %v3300 = vmul.f32 %v3009, %v3052
        %v3301 = vmul.f32 %v3012, %v3052
        %v3302 = vmul.f32 %v3017, %v3052
        %v3303 = vmul.f32 %v3020, %v3052
        %v3304 = vmul.f32 %v3025, %v3052
        %v3305 = vmul.f32 %v3028, %v3052
        %v3306 = vmul.f32 %v3033, %v3052
        %v3307 = vmul.f32 %v3036, %v3052
        %v3308 = vmul.f32 %v3041, %v3052
        %v3309 = vmul.f32 %v3044, %v3052
        %v3310 = vld [vmem:[%s319] sm:$0x1]
        %v3312 = vlaneseq
        %v3313 = vshrl.u32 %v3312, 7
        %v3314 = vsub.s32 0, %v3313
        %v3315 = vrot.slane %v3310, %v3314
        %v3317 = vadd.f32 %v3054, %v3315
        %v3318 = vadd.f32 %v3055, %v3315
        %v3319 = vadd.f32 %v3056, %v3315
        %v3320 = vadd.f32 %v3057, %v3315
        %v3321 = vadd.f32 %v3058, %v3315
        %v3322 = vadd.f32 %v3059, %v3315
        %v3323 = vadd.f32 %v3060, %v3315
        %v3324 = vadd.f32 %v3061, %v3315
        %v3325 = vadd.f32 %v3062, %v3315
        %v3326 = vadd.f32 %v3063, %v3315
        %v3327 = vadd.f32 %v3064, %v3315
        %v3328 = vadd.f32 %v3065, %v3315
        %v3329 = vadd.f32 %v3066, %v3315
        %v3330 = vadd.f32 %v3067, %v3315
        %v3331 = vadd.f32 %v3068, %v3315
        %v3332 = vadd.f32 %v3069, %v3315
        %v3333 = vadd.f32 %v3070, %v3315
        %v3334 = vadd.f32 %v3071, %v3315
        %v3335 = vadd.f32 %v3072, %v3315
        %v3336 = vadd.f32 %v3073, %v3315
        %v3337 = vadd.f32 %v3074, %v3315
        %v3338 = vadd.f32 %v3075, %v3315
        %v3339 = vadd.f32 %v3076, %v3315
        %v3340 = vadd.f32 %v3077, %v3315
        %v3341 = vadd.f32 %v3078, %v3315
        %v3342 = vadd.f32 %v3079, %v3315
        %v3343 = vadd.f32 %v3080, %v3315
        %v3344 = vadd.f32 %v3081, %v3315
        %v3345 = vadd.f32 %v3082, %v3315
        %v3346 = vadd.f32 %v3083, %v3315
        %v3347 = vadd.f32 %v3084, %v3315
        %v3348 = vadd.f32 %v3085, %v3315
        %v3349 = vadd.f32 %v3086, %v3315
        %v3350 = vadd.f32 %v3087, %v3315
        %v3351 = vadd.f32 %v3088, %v3315
        %v3352 = vadd.f32 %v3089, %v3315
        %v3353 = vadd.f32 %v3090, %v3315
        %v3354 = vadd.f32 %v3091, %v3315
        %v3355 = vadd.f32 %v3092, %v3315
        %v3356 = vadd.f32 %v3093, %v3315
        %v3357 = vadd.f32 %v3094, %v3315
        %v3358 = vadd.f32 %v3095, %v3315
        %v3359 = vadd.f32 %v3096, %v3315
        %v3360 = vadd.f32 %v3097, %v3315
        %v3361 = vadd.f32 %v3098, %v3315
        %v3362 = vadd.f32 %v3099, %v3315
        %v3363 = vadd.f32 %v3100, %v3315
        %v3364 = vadd.f32 %v3101, %v3315
        %v3365 = vadd.f32 %v3102, %v3315
        %v3366 = vadd.f32 %v3103, %v3315
        %v3367 = vadd.f32 %v3104, %v3315
        %v3368 = vadd.f32 %v3105, %v3315
        %v3369 = vadd.f32 %v3106, %v3315
        %v3370 = vadd.f32 %v3107, %v3315
        %v3371 = vadd.f32 %v3108, %v3315
        %v3372 = vadd.f32 %v3109, %v3315
        %v3373 = vadd.f32 %v3110, %v3315
        %v3374 = vadd.f32 %v3111, %v3315
        %v3375 = vadd.f32 %v3112, %v3315
        %v3376 = vadd.f32 %v3113, %v3315
        %v3377 = vadd.f32 %v3114, %v3315
        %v3378 = vadd.f32 %v3115, %v3315
        %v3379 = vadd.f32 %v3116, %v3315
        %v3380 = vadd.f32 %v3117, %v3315
        %v3381 = vadd.f32 %v3118, %v3315
        %v3382 = vadd.f32 %v3119, %v3315
        %v3383 = vadd.f32 %v3120, %v3315
        %v3384 = vadd.f32 %v3121, %v3315
        %v3385 = vadd.f32 %v3122, %v3315
        %v3386 = vadd.f32 %v3123, %v3315
        %v3387 = vadd.f32 %v3124, %v3315
        %v3388 = vadd.f32 %v3125, %v3315
        %v3389 = vadd.f32 %v3126, %v3315
        %v3390 = vadd.f32 %v3127, %v3315
        %v3391 = vadd.f32 %v3128, %v3315
        %v3392 = vadd.f32 %v3129, %v3315
        %v3393 = vadd.f32 %v3130, %v3315
        %v3394 = vadd.f32 %v3131, %v3315
        %v3395 = vadd.f32 %v3132, %v3315
        %v3396 = vadd.f32 %v3133, %v3315
        %v3397 = vadd.f32 %v3134, %v3315
        %v3398 = vadd.f32 %v3135, %v3315
        %v3399 = vadd.f32 %v3136, %v3315
        %v3400 = vadd.f32 %v3137, %v3315
        %v3401 = vadd.f32 %v3138, %v3315
        %v3402 = vadd.f32 %v3139, %v3315
        %v3403 = vadd.f32 %v3140, %v3315
        %v3404 = vadd.f32 %v3141, %v3315
        %v3405 = vadd.f32 %v3142, %v3315
        %v3406 = vadd.f32 %v3143, %v3315
        %v3407 = vadd.f32 %v3144, %v3315
        %v3408 = vadd.f32 %v3145, %v3315
        %v3409 = vadd.f32 %v3146, %v3315
        %v3410 = vadd.f32 %v3147, %v3315
        %v3411 = vadd.f32 %v3148, %v3315
        %v3412 = vadd.f32 %v3149, %v3315
        %v3413 = vadd.f32 %v3150, %v3315
        %v3414 = vadd.f32 %v3151, %v3315
        %v3415 = vadd.f32 %v3152, %v3315
        %v3416 = vadd.f32 %v3153, %v3315
        %v3417 = vadd.f32 %v3154, %v3315
        %v3418 = vadd.f32 %v3155, %v3315
        %v3419 = vadd.f32 %v3156, %v3315
        %v3420 = vadd.f32 %v3157, %v3315
        %v3421 = vadd.f32 %v3158, %v3315
        %v3422 = vadd.f32 %v3159, %v3315
        %v3423 = vadd.f32 %v3160, %v3315
        %v3424 = vadd.f32 %v3161, %v3315
        %v3425 = vadd.f32 %v3162, %v3315
        %v3426 = vadd.f32 %v3163, %v3315
        %v3427 = vadd.f32 %v3164, %v3315
        %v3428 = vadd.f32 %v3165, %v3315
        %v3429 = vadd.f32 %v3166, %v3315
        %v3430 = vadd.f32 %v3167, %v3315
        %v3431 = vadd.f32 %v3168, %v3315
        %v3432 = vadd.f32 %v3169, %v3315
        %v3433 = vadd.f32 %v3170, %v3315
        %v3434 = vadd.f32 %v3171, %v3315
        %v3435 = vadd.f32 %v3172, %v3315
        %v3436 = vadd.f32 %v3173, %v3315
        %v3437 = vadd.f32 %v3174, %v3315
        %v3438 = vadd.f32 %v3175, %v3315
        %v3439 = vadd.f32 %v3176, %v3315
        %v3440 = vadd.f32 %v3177, %v3315
        %v3441 = vadd.f32 %v3178, %v3315
        %v3442 = vadd.f32 %v3179, %v3315
        %v3443 = vadd.f32 %v3180, %v3315
        %v3444 = vadd.f32 %v3181, %v3315
        %v3445 = vadd.f32 %v3182, %v3315
        %v3446 = vadd.f32 %v3183, %v3315
        %v3447 = vadd.f32 %v3184, %v3315
        %v3448 = vadd.f32 %v3185, %v3315
        %v3449 = vadd.f32 %v3186, %v3315
        %v3450 = vadd.f32 %v3187, %v3315
        %v3451 = vadd.f32 %v3188, %v3315
        %v3452 = vadd.f32 %v3189, %v3315
        %v3453 = vadd.f32 %v3190, %v3315
        %v3454 = vadd.f32 %v3191, %v3315
        %v3455 = vadd.f32 %v3192, %v3315
        %v3456 = vadd.f32 %v3193, %v3315
        %v3457 = vadd.f32 %v3194, %v3315
        %v3458 = vadd.f32 %v3195, %v3315
        %v3459 = vadd.f32 %v3196, %v3315
        %v3460 = vadd.f32 %v3197, %v3315
        %v3461 = vadd.f32 %v3198, %v3315
        %v3462 = vadd.f32 %v3199, %v3315
        %v3463 = vadd.f32 %v3200, %v3315
        %v3464 = vadd.f32 %v3201, %v3315
        %v3465 = vadd.f32 %v3202, %v3315
        %v3466 = vadd.f32 %v3203, %v3315
        %v3467 = vadd.f32 %v3204, %v3315
        %v3468 = vadd.f32 %v3205, %v3315
        %v3469 = vadd.f32 %v3206, %v3315
        %v3470 = vadd.f32 %v3207, %v3315
        %v3471 = vadd.f32 %v3208, %v3315
        %v3472 = vadd.f32 %v3209, %v3315
        %v3473 = vadd.f32 %v3210, %v3315
        %v3474 = vadd.f32 %v3211, %v3315
        %v3475 = vadd.f32 %v3212, %v3315
        %v3476 = vadd.f32 %v3213, %v3315
        %v3477 = vadd.f32 %v3214, %v3315
        %v3478 = vadd.f32 %v3215, %v3315
        %v3479 = vadd.f32 %v3216, %v3315
        %v3480 = vadd.f32 %v3217, %v3315
        %v3481 = vadd.f32 %v3218, %v3315
        %v3482 = vadd.f32 %v3219, %v3315
        %v3483 = vadd.f32 %v3220, %v3315
        %v3484 = vadd.f32 %v3221, %v3315
        %v3485 = vadd.f32 %v3222, %v3315
        %v3486 = vadd.f32 %v3223, %v3315
        %v3487 = vadd.f32 %v3224, %v3315
        %v3488 = vadd.f32 %v3225, %v3315
        %v3489 = vadd.f32 %v3226, %v3315
        %v3490 = vadd.f32 %v3227, %v3315
        %v3491 = vadd.f32 %v3228, %v3315
        %v3492 = vadd.f32 %v3229, %v3315
        %v3493 = vadd.f32 %v3230, %v3315
        %v3494 = vadd.f32 %v3231, %v3315
        %v3495 = vadd.f32 %v3232, %v3315
        %v3496 = vadd.f32 %v3233, %v3315
        %v3497 = vadd.f32 %v3234, %v3315
        %v3498 = vadd.f32 %v3235, %v3315
        %v3499 = vadd.f32 %v3236, %v3315
        %v3500 = vadd.f32 %v3237, %v3315
        %v3501 = vadd.f32 %v3238, %v3315
        %v3502 = vadd.f32 %v3239, %v3315
        %v3503 = vadd.f32 %v3240, %v3315
        %v3504 = vadd.f32 %v3241, %v3315
        %v3505 = vadd.f32 %v3242, %v3315
        %v3506 = vadd.f32 %v3243, %v3315
        %v3507 = vadd.f32 %v3244, %v3315
        %v3508 = vadd.f32 %v3245, %v3315
        %v3509 = vadd.f32 %v3246, %v3315
        %v3510 = vadd.f32 %v3247, %v3315
        %v3511 = vadd.f32 %v3248, %v3315
        %v3512 = vadd.f32 %v3249, %v3315
        %v3513 = vadd.f32 %v3250, %v3315
        %v3514 = vadd.f32 %v3251, %v3315
        %v3515 = vadd.f32 %v3252, %v3315
        %v3516 = vadd.f32 %v3253, %v3315
        %v3517 = vadd.f32 %v3254, %v3315
        %v3518 = vadd.f32 %v3255, %v3315
        %v3519 = vadd.f32 %v3256, %v3315
        %v3520 = vadd.f32 %v3257, %v3315
        %v3521 = vadd.f32 %v3258, %v3315
        %v3522 = vadd.f32 %v3259, %v3315
        %v3523 = vadd.f32 %v3260, %v3315
        %v3524 = vadd.f32 %v3261, %v3315
        %v3525 = vadd.f32 %v3262, %v3315
        %v3526 = vadd.f32 %v3263, %v3315
        %v3527 = vadd.f32 %v3264, %v3315
        %v3528 = vadd.f32 %v3265, %v3315
        %v3529 = vadd.f32 %v3266, %v3315
        %v3530 = vadd.f32 %v3267, %v3315
        %v3531 = vadd.f32 %v3268, %v3315
        %v3532 = vadd.f32 %v3269, %v3315
        %v3533 = vadd.f32 %v3270, %v3315
        %v3534 = vadd.f32 %v3271, %v3315
        %v3535 = vadd.f32 %v3272, %v3315
        %v3536 = vadd.f32 %v3273, %v3315
        %v3537 = vadd.f32 %v3274, %v3315
        %v3538 = vadd.f32 %v3275, %v3315
        %v3539 = vadd.f32 %v3276, %v3315
        %v3540 = vadd.f32 %v3277, %v3315
        %v3541 = vadd.f32 %v3278, %v3315
        %v3542 = vadd.f32 %v3279, %v3315
        %v3543 = vadd.f32 %v3280, %v3315
        %v3544 = vadd.f32 %v3281, %v3315
        %v3545 = vadd.f32 %v3282, %v3315
        %v3546 = vadd.f32 %v3283, %v3315
        %v3547 = vadd.f32 %v3284, %v3315
        %v3548 = vadd.f32 %v3285, %v3315
        %v3549 = vadd.f32 %v3286, %v3315
        %v3550 = vadd.f32 %v3287, %v3315
        %v3551 = vadd.f32 %v3288, %v3315
        %v3552 = vadd.f32 %v3289, %v3315
        %v3553 = vadd.f32 %v3290, %v3315
        %v3554 = vadd.f32 %v3291, %v3315
        %v3555 = vadd.f32 %v3292, %v3315
        %v3556 = vadd.f32 %v3293, %v3315
        %v3557 = vadd.f32 %v3294, %v3315
        %v3558 = vadd.f32 %v3295, %v3315
        %v3559 = vadd.f32 %v3296, %v3315
        %v3560 = vadd.f32 %v3297, %v3315
        %v3561 = vadd.f32 %v3298, %v3315
        %v3562 = vadd.f32 %v3299, %v3315
        %v3563 = vadd.f32 %v3300, %v3315
        %v3564 = vadd.f32 %v3301, %v3315
        %v3565 = vadd.f32 %v3302, %v3315
        %v3566 = vadd.f32 %v3303, %v3315
        %v3567 = vadd.f32 %v3304, %v3315
        %v3568 = vadd.f32 %v3305, %v3315
        %v3569 = vadd.f32 %v3306, %v3315
        %v3570 = vadd.f32 %v3307, %v3315
        %v3571 = vadd.f32 %v3308, %v3315
        %v3572 = vadd.f32 %v3309, %v3315
        %v3573 = vmax.f32 %v3317, 0.0
        %v3574 = vmax.f32 %v3318, 0.0
        %v3575 = vmax.f32 %v3319, 0.0
        %v3576 = vmax.f32 %v3320, 0.0
        %v3577 = vmax.f32 %v3321, 0.0
        %v3578 = vmax.f32 %v3322, 0.0
        %v3579 = vmax.f32 %v3323, 0.0
        %v3580 = vmax.f32 %v3324, 0.0
        %v3581 = vmax.f32 %v3325, 0.0
        %v3582 = vmax.f32 %v3326, 0.0
        %v3583 = vmax.f32 %v3327, 0.0
        %v3584 = vmax.f32 %v3328, 0.0
        %v3585 = vmax.f32 %v3329, 0.0
        %v3586 = vmax.f32 %v3330, 0.0
        %v3587 = vmax.f32 %v3331, 0.0
        %v3588 = vmax.f32 %v3332, 0.0
        %v3589 = vmax.f32 %v3333, 0.0
        %v3590 = vmax.f32 %v3334, 0.0
        %v3591 = vmax.f32 %v3335, 0.0
        %v3592 = vmax.f32 %v3336, 0.0
        %v3593 = vmax.f32 %v3337, 0.0
        %v3594 = vmax.f32 %v3338, 0.0
        %v3595 = vmax.f32 %v3339, 0.0
        %v3596 = vmax.f32 %v3340, 0.0
        %v3597 = vmax.f32 %v3341, 0.0
        %v3598 = vmax.f32 %v3342, 0.0
        %v3599 = vmax.f32 %v3343, 0.0
        %v3600 = vmax.f32 %v3344, 0.0
        %v3601 = vmax.f32 %v3345, 0.0
        %v3602 = vmax.f32 %v3346, 0.0
        %v3603 = vmax.f32 %v3347, 0.0
        %v3604 = vmax.f32 %v3348, 0.0
        %v3605 = vmax.f32 %v3349, 0.0
        %v3606 = vmax.f32 %v3350, 0.0
        %v3607 = vmax.f32 %v3351, 0.0
        %v3608 = vmax.f32 %v3352, 0.0
        %v3609 = vmax.f32 %v3353, 0.0
        %v3610 = vmax.f32 %v3354, 0.0
        %v3611 = vmax.f32 %v3355, 0.0
        %v3612 = vmax.f32 %v3356, 0.0
        %v3613 = vmax.f32 %v3357, 0.0
        %v3614 = vmax.f32 %v3358, 0.0
        %v3615 = vmax.f32 %v3359, 0.0
        %v3616 = vmax.f32 %v3360, 0.0
        %v3617 = vmax.f32 %v3361, 0.0
        %v3618 = vmax.f32 %v3362, 0.0
        %v3619 = vmax.f32 %v3363, 0.0
        %v3620 = vmax.f32 %v3364, 0.0
        %v3621 = vmax.f32 %v3365, 0.0
        %v3622 = vmax.f32 %v3366, 0.0
        %v3623 = vmax.f32 %v3367, 0.0
        %v3624 = vmax.f32 %v3368, 0.0
        %v3625 = vmax.f32 %v3369, 0.0
        %v3626 = vmax.f32 %v3370, 0.0
        %v3627 = vmax.f32 %v3371, 0.0
        %v3628 = vmax.f32 %v3372, 0.0
        %v3629 = vmax.f32 %v3373, 0.0
        %v3630 = vmax.f32 %v3374, 0.0
        %v3631 = vmax.f32 %v3375, 0.0
        %v3632 = vmax.f32 %v3376, 0.0
        %v3633 = vmax.f32 %v3377, 0.0
        %v3634 = vmax.f32 %v3378, 0.0
        %v3635 = vmax.f32 %v3379, 0.0
        %v3636 = vmax.f32 %v3380, 0.0
        %v3637 = vmax.f32 %v3381, 0.0
        %v3638 = vmax.f32 %v3382, 0.0
        %v3639 = vmax.f32 %v3383, 0.0
        %v3640 = vmax.f32 %v3384, 0.0
        %v3641 = vmax.f32 %v3385, 0.0
        %v3642 = vmax.f32 %v3386, 0.0
        %v3643 = vmax.f32 %v3387, 0.0
        %v3644 = vmax.f32 %v3388, 0.0
        %v3645 = vmax.f32 %v3389, 0.0
        %v3646 = vmax.f32 %v3390, 0.0
        %v3647 = vmax.f32 %v3391, 0.0
        %v3648 = vmax.f32 %v3392, 0.0
        %v3649 = vmax.f32 %v3393, 0.0
        %v3650 = vmax.f32 %v3394, 0.0
        %v3651 = vmax.f32 %v3395, 0.0
        %v3652 = vmax.f32 %v3396, 0.0
        %v3653 = vmax.f32 %v3397, 0.0
        %v3654 = vmax.f32 %v3398, 0.0
        %v3655 = vmax.f32 %v3399, 0.0
        %v3656 = vmax.f32 %v3400, 0.0
        %v3657 = vmax.f32 %v3401, 0.0
        %v3658 = vmax.f32 %v3402, 0.0
        %v3659 = vmax.f32 %v3403, 0.0
        %v3660 = vmax.f32 %v3404, 0.0
        %v3661 = vmax.f32 %v3405, 0.0
        %v3662 = vmax.f32 %v3406, 0.0
        %v3663 = vmax.f32 %v3407, 0.0
        %v3664 = vmax.f32 %v3408, 0.0
        %v3665 = vmax.f32 %v3409, 0.0
        %v3666 = vmax.f32 %v3410, 0.0
        %v3667 = vmax.f32 %v3411, 0.0
        %v3668 = vmax.f32 %v3412, 0.0
        %v3669 = vmax.f32 %v3413, 0.0
        %v3670 = vmax.f32 %v3414, 0.0
        %v3671 = vmax.f32 %v3415, 0.0
        %v3672 = vmax.f32 %v3416, 0.0
        %v3673 = vmax.f32 %v3417, 0.0
        %v3674 = vmax.f32 %v3418, 0.0
        %v3675 = vmax.f32 %v3419, 0.0
        %v3676 = vmax.f32 %v3420, 0.0
        %v3677 = vmax.f32 %v3421, 0.0
        %v3678 = vmax.f32 %v3422, 0.0
        %v3679 = vmax.f32 %v3423, 0.0
        %v3680 = vmax.f32 %v3424, 0.0
        %v3681 = vmax.f32 %v3425, 0.0
        %v3682 = vmax.f32 %v3426, 0.0
        %v3683 = vmax.f32 %v3427, 0.0
        %v3684 = vmax.f32 %v3428, 0.0
        %v3685 = vmax.f32 %v3429, 0.0
        %v3686 = vmax.f32 %v3430, 0.0
        %v3687 = vmax.f32 %v3431, 0.0
        %v3688 = vmax.f32 %v3432, 0.0
        %v3689 = vmax.f32 %v3433, 0.0
        %v3690 = vmax.f32 %v3434, 0.0
        %v3691 = vmax.f32 %v3435, 0.0
        %v3692 = vmax.f32 %v3436, 0.0
        %v3693 = vmax.f32 %v3437, 0.0
        %v3694 = vmax.f32 %v3438, 0.0
        %v3695 = vmax.f32 %v3439, 0.0
        %v3696 = vmax.f32 %v3440, 0.0
        %v3697 = vmax.f32 %v3441, 0.0
        %v3698 = vmax.f32 %v3442, 0.0
        %v3699 = vmax.f32 %v3443, 0.0
        %v3700 = vmax.f32 %v3444, 0.0
        %v3701 = vmax.f32 %v3445, 0.0
        %v3702 = vmax.f32 %v3446, 0.0
        %v3703 = vmax.f32 %v3447, 0.0
        %v3704 = vmax.f32 %v3448, 0.0
        %v3705 = vmax.f32 %v3449, 0.0
        %v3706 = vmax.f32 %v3450, 0.0
        %v3707 = vmax.f32 %v3451, 0.0
        %v3708 = vmax.f32 %v3452, 0.0
        %v3709 = vmax.f32 %v3453, 0.0
        %v3710 = vmax.f32 %v3454, 0.0
        %v3711 = vmax.f32 %v3455, 0.0
        %v3712 = vmax.f32 %v3456, 0.0
        %v3713 = vmax.f32 %v3457, 0.0
        %v3714 = vmax.f32 %v3458, 0.0
        %v3715 = vmax.f32 %v3459, 0.0
        %v3716 = vmax.f32 %v3460, 0.0
        %v3717 = vmax.f32 %v3461, 0.0
        %v3718 = vmax.f32 %v3462, 0.0
        %v3719 = vmax.f32 %v3463, 0.0
        %v3720 = vmax.f32 %v3464, 0.0
        %v3721 = vmax.f32 %v3465, 0.0
        %v3722 = vmax.f32 %v3466, 0.0
        %v3723 = vmax.f32 %v3467, 0.0
        %v3724 = vmax.f32 %v3468, 0.0
        %v3725 = vmax.f32 %v3469, 0.0
        %v3726 = vmax.f32 %v3470, 0.0
        %v3727 = vmax.f32 %v3471, 0.0
        %v3728 = vmax.f32 %v3472, 0.0
        %v3729 = vmax.f32 %v3473, 0.0
        %v3730 = vmax.f32 %v3474, 0.0
        %v3731 = vmax.f32 %v3475, 0.0
        %v3732 = vmax.f32 %v3476, 0.0
        %v3733 = vmax.f32 %v3477, 0.0
        %v3734 = vmax.f32 %v3478, 0.0
        %v3735 = vmax.f32 %v3479, 0.0
        %v3736 = vmax.f32 %v3480, 0.0
        %v3737 = vmax.f32 %v3481, 0.0
        %v3738 = vmax.f32 %v3482, 0.0
        %v3739 = vmax.f32 %v3483, 0.0
        %v3740 = vmax.f32 %v3484, 0.0
        %v3741 = vmax.f32 %v3485, 0.0
        %v3742 = vmax.f32 %v3486, 0.0
        %v3743 = vmax.f32 %v3487, 0.0
        %v3744 = vmax.f32 %v3488, 0.0
        %v3745 = vmax.f32 %v3489, 0.0
        %v3746 = vmax.f32 %v3490, 0.0
        %v3747 = vmax.f32 %v3491, 0.0
        %v3748 = vmax.f32 %v3492, 0.0
        %v3749 = vmax.f32 %v3493, 0.0
        %v3750 = vmax.f32 %v3494, 0.0
        %v3751 = vmax.f32 %v3495, 0.0
        %v3752 = vmax.f32 %v3496, 0.0
        %v3753 = vmax.f32 %v3497, 0.0
        %v3754 = vmax.f32 %v3498, 0.0
        %v3755 = vmax.f32 %v3499, 0.0
        %v3756 = vmax.f32 %v3500, 0.0
        %v3757 = vmax.f32 %v3501, 0.0
        %v3758 = vmax.f32 %v3502, 0.0
        %v3759 = vmax.f32 %v3503, 0.0
        %v3760 = vmax.f32 %v3504, 0.0
        %v3761 = vmax.f32 %v3505, 0.0
        %v3762 = vmax.f32 %v3506, 0.0
        %v3763 = vmax.f32 %v3507, 0.0
        %v3764 = vmax.f32 %v3508, 0.0
        %v3765 = vmax.f32 %v3509, 0.0
        %v3766 = vmax.f32 %v3510, 0.0
        %v3767 = vmax.f32 %v3511, 0.0
        %v3768 = vmax.f32 %v3512, 0.0
        %v3769 = vmax.f32 %v3513, 0.0
        %v3770 = vmax.f32 %v3514, 0.0
        %v3771 = vmax.f32 %v3515, 0.0
        %v3772 = vmax.f32 %v3516, 0.0
        %v3773 = vmax.f32 %v3517, 0.0
        %v3774 = vmax.f32 %v3518, 0.0
        %v3775 = vmax.f32 %v3519, 0.0
        %v3776 = vmax.f32 %v3520, 0.0
        %v3777 = vmax.f32 %v3521, 0.0
        %v3778 = vmax.f32 %v3522, 0.0
        %v3779 = vmax.f32 %v3523, 0.0
        %v3780 = vmax.f32 %v3524, 0.0
        %v3781 = vmax.f32 %v3525, 0.0
        %v3782 = vmax.f32 %v3526, 0.0
        %v3783 = vmax.f32 %v3527, 0.0
        %v3784 = vmax.f32 %v3528, 0.0
        %v3785 = vmax.f32 %v3529, 0.0
        %v3786 = vmax.f32 %v3530, 0.0
        %v3787 = vmax.f32 %v3531, 0.0
        %v3788 = vmax.f32 %v3532, 0.0
        %v3789 = vmax.f32 %v3533, 0.0
        %v3790 = vmax.f32 %v3534, 0.0
        %v3791 = vmax.f32 %v3535, 0.0
        %v3792 = vmax.f32 %v3536, 0.0
        %v3793 = vmax.f32 %v3537, 0.0
        %v3794 = vmax.f32 %v3538, 0.0
        %v3795 = vmax.f32 %v3539, 0.0
        %v3796 = vmax.f32 %v3540, 0.0
        %v3797 = vmax.f32 %v3541, 0.0
        %v3798 = vmax.f32 %v3542, 0.0
        %v3799 = vmax.f32 %v3543, 0.0
        %v3800 = vmax.f32 %v3544, 0.0
        %v3801 = vmax.f32 %v3545, 0.0
        %v3802 = vmax.f32 %v3546, 0.0
        %v3803 = vmax.f32 %v3547, 0.0
        %v3804 = vmax.f32 %v3548, 0.0
        %v3805 = vmax.f32 %v3549, 0.0
        %v3806 = vmax.f32 %v3550, 0.0
        %v3807 = vmax.f32 %v3551, 0.0
        %v3808 = vmax.f32 %v3552, 0.0
        %v3809 = vmax.f32 %v3553, 0.0
        %v3810 = vmax.f32 %v3554, 0.0
        %v3811 = vmax.f32 %v3555, 0.0
        %v3812 = vmax.f32 %v3556, 0.0
        %v3813 = vmax.f32 %v3557, 0.0
        %v3814 = vmax.f32 %v3558, 0.0
        %v3815 = vmax.f32 %v3559, 0.0
        %v3816 = vmax.f32 %v3560, 0.0
        %v3817 = vmax.f32 %v3561, 0.0
        %v3818 = vmax.f32 %v3562, 0.0
        %v3819 = vmax.f32 %v3563, 0.0
        %v3820 = vmax.f32 %v3564, 0.0
        %v3821 = vmax.f32 %v3565, 0.0
        %v3822 = vmax.f32 %v3566, 0.0
        %v3823 = vmax.f32 %v3567, 0.0
        %v3824 = vmax.f32 %v3568, 0.0
        %v3825 = vmax.f32 %v3569, 0.0
        %v3826 = vmax.f32 %v3570, 0.0
        %v3827 = vmax.f32 %v3571, 0.0
        %v3828 = vmax.f32 %v3572, 0.0
        %v3829 = vpack.c.bf16 %v3574, %v3573
        %v3830 = vpack.c.bf16 %v3576, %v3575
        %v3831 = vpack.c.bf16 %v3578, %v3577
        %v3832 = vpack.c.bf16 %v3580, %v3579
        %v3833 = vpack.c.bf16 %v3582, %v3581
        %v3834 = vpack.c.bf16 %v3584, %v3583
        %v3835 = vpack.c.bf16 %v3586, %v3585
        %v3836 = vpack.c.bf16 %v3588, %v3587
        %v3837 = vpack.c.bf16 %v3590, %v3589
        %v3838 = vpack.c.bf16 %v3592, %v3591
        %v3839 = vpack.c.bf16 %v3594, %v3593
        %v3840 = vpack.c.bf16 %v3596, %v3595
        %v3841 = vpack.c.bf16 %v3598, %v3597
        %v3842 = vpack.c.bf16 %v3600, %v3599
        %v3843 = vpack.c.bf16 %v3602, %v3601
        %v3844 = vpack.c.bf16 %v3604, %v3603
        %v3845 = vpack.c.bf16 %v3606, %v3605
        %v3846 = vpack.c.bf16 %v3608, %v3607
        %v3847 = vpack.c.bf16 %v3610, %v3609
        %v3848 = vpack.c.bf16 %v3612, %v3611
        %v3849 = vpack.c.bf16 %v3614, %v3613
        %v3850 = vpack.c.bf16 %v3616, %v3615
        %v3851 = vpack.c.bf16 %v3618, %v3617
        %v3852 = vpack.c.bf16 %v3620, %v3619
        %v3853 = vpack.c.bf16 %v3622, %v3621
        %v3854 = vpack.c.bf16 %v3624, %v3623
        %v3855 = vpack.c.bf16 %v3626, %v3625
        %v3856 = vpack.c.bf16 %v3628, %v3627
        %v3857 = vpack.c.bf16 %v3630, %v3629
        %v3858 = vpack.c.bf16 %v3632, %v3631
        %v3859 = vpack.c.bf16 %v3634, %v3633
        %v3860 = vpack.c.bf16 %v3636, %v3635
        %v3861 = vpack.c.bf16 %v3638, %v3637
        %v3862 = vpack.c.bf16 %v3640, %v3639
        %v3863 = vpack.c.bf16 %v3642, %v3641
        %v3864 = vpack.c.bf16 %v3644, %v3643
        %v3865 = vpack.c.bf16 %v3646, %v3645
        %v3866 = vpack.c.bf16 %v3648, %v3647
        %v3867 = vpack.c.bf16 %v3650, %v3649
        %v3868 = vpack.c.bf16 %v3652, %v3651
        %v3869 = vpack.c.bf16 %v3654, %v3653
        %v3870 = vpack.c.bf16 %v3656, %v3655
        %v3871 = vpack.c.bf16 %v3658, %v3657
        %v3872 = vpack.c.bf16 %v3660, %v3659
        %v3873 = vpack.c.bf16 %v3662, %v3661
        %v3874 = vpack.c.bf16 %v3664, %v3663
        %v3875 = vpack.c.bf16 %v3666, %v3665
        %v3876 = vpack.c.bf16 %v3668, %v3667
        %v3877 = vpack.c.bf16 %v3670, %v3669
        %v3878 = vpack.c.bf16 %v3672, %v3671
        %v3879 = vpack.c.bf16 %v3674, %v3673
        %v3880 = vpack.c.bf16 %v3676, %v3675
        %v3881 = vpack.c.bf16 %v3678, %v3677
        %v3882 = vpack.c.bf16 %v3680, %v3679
        %v3883 = vpack.c.bf16 %v3682, %v3681
        %v3884 = vpack.c.bf16 %v3684, %v3683
        %v3885 = vpack.c.bf16 %v3686, %v3685
        %v3886 = vpack.c.bf16 %v3688, %v3687
        %v3887 = vpack.c.bf16 %v3690, %v3689
        %v3888 = vpack.c.bf16 %v3692, %v3691
        %v3889 = vpack.c.bf16 %v3694, %v3693
        %v3890 = vpack.c.bf16 %v3696, %v3695
        %v3891 = vpack.c.bf16 %v3698, %v3697
        %v3892 = vpack.c.bf16 %v3700, %v3699
        %v3893 = vpack.c.bf16 %v3702, %v3701
        %v3894 = vpack.c.bf16 %v3704, %v3703
        %v3895 = vpack.c.bf16 %v3706, %v3705
        %v3896 = vpack.c.bf16 %v3708, %v3707
        %v3897 = vpack.c.bf16 %v3710, %v3709
        %v3898 = vpack.c.bf16 %v3712, %v3711
        %v3899 = vpack.c.bf16 %v3714, %v3713
        %v3900 = vpack.c.bf16 %v3716, %v3715
        %v3901 = vpack.c.bf16 %v3718, %v3717
        %v3902 = vpack.c.bf16 %v3720, %v3719
        %v3903 = vpack.c.bf16 %v3722, %v3721
        %v3904 = vpack.c.bf16 %v3724, %v3723
        %v3905 = vpack.c.bf16 %v3726, %v3725
        %v3906 = vpack.c.bf16 %v3728, %v3727
        %v3907 = vpack.c.bf16 %v3730, %v3729
        %v3908 = vpack.c.bf16 %v3732, %v3731
        %v3909 = vpack.c.bf16 %v3734, %v3733
        %v3910 = vpack.c.bf16 %v3736, %v3735
        %v3911 = vpack.c.bf16 %v3738, %v3737
        %v3912 = vpack.c.bf16 %v3740, %v3739
        %v3913 = vpack.c.bf16 %v3742, %v3741
        %v3914 = vpack.c.bf16 %v3744, %v3743
        %v3915 = vpack.c.bf16 %v3746, %v3745
        %v3916 = vpack.c.bf16 %v3748, %v3747
        %v3917 = vpack.c.bf16 %v3750, %v3749
        %v3918 = vpack.c.bf16 %v3752, %v3751
        %v3919 = vpack.c.bf16 %v3754, %v3753
        %v3920 = vpack.c.bf16 %v3756, %v3755
        %v3921 = vpack.c.bf16 %v3758, %v3757
        %v3922 = vpack.c.bf16 %v3760, %v3759
        %v3923 = vpack.c.bf16 %v3762, %v3761
        %v3924 = vpack.c.bf16 %v3764, %v3763
        %v3925 = vpack.c.bf16 %v3766, %v3765
        %v3926 = vpack.c.bf16 %v3768, %v3767
        %v3927 = vpack.c.bf16 %v3770, %v3769
        %v3928 = vpack.c.bf16 %v3772, %v3771
        %v3929 = vpack.c.bf16 %v3774, %v3773
        %v3930 = vpack.c.bf16 %v3776, %v3775
        %v3931 = vpack.c.bf16 %v3778, %v3777
        %v3932 = vpack.c.bf16 %v3780, %v3779
        %v3933 = vpack.c.bf16 %v3782, %v3781
        %v3934 = vpack.c.bf16 %v3784, %v3783
        %v3935 = vpack.c.bf16 %v3786, %v3785
        %v3936 = vpack.c.bf16 %v3788, %v3787
        %v3937 = vpack.c.bf16 %v3790, %v3789
        %v3938 = vpack.c.bf16 %v3792, %v3791
        %v3939 = vpack.c.bf16 %v3794, %v3793
        %v3940 = vpack.c.bf16 %v3796, %v3795
        %v3941 = vpack.c.bf16 %v3798, %v3797
        %v3942 = vpack.c.bf16 %v3800, %v3799
        %v3943 = vpack.c.bf16 %v3802, %v3801
        %v3944 = vpack.c.bf16 %v3804, %v3803
        %v3945 = vpack.c.bf16 %v3806, %v3805
        %v3946 = vpack.c.bf16 %v3808, %v3807
        %v3947 = vpack.c.bf16 %v3810, %v3809
        %v3948 = vpack.c.bf16 %v3812, %v3811
        %v3949 = vpack.c.bf16 %v3814, %v3813
        %v3950 = vpack.c.bf16 %v3816, %v3815
        %v3951 = vpack.c.bf16 %v3818, %v3817
        %v3952 = vpack.c.bf16 %v3820, %v3819
        %v3953 = vpack.c.bf16 %v3822, %v3821
        %v3954 = vpack.c.bf16 %v3824, %v3823
        %v3955 = vpack.c.bf16 %v3826, %v3825
        %v3956 = vpack.c.bf16 %v3828, %v3827
        %v4085 = vunpack.c.l.b16 %v3829
        %v4086 = vunpack.c.h.b16 %v3829
        %v4087 = vunpack.c.l.b16 %v3830
        %v4088 = vunpack.c.h.b16 %v3830
        %v4089 = vunpack.c.l.b16 %v3831
        %v4090 = vunpack.c.h.b16 %v3831
        %v4091 = vunpack.c.l.b16 %v3832
        %v4092 = vunpack.c.h.b16 %v3832
        %v4093 = vunpack.c.l.b16 %v3833
        %v4094 = vunpack.c.h.b16 %v3833
        %v4095 = vunpack.c.l.b16 %v3834
        %v4096 = vunpack.c.h.b16 %v3834
        %v4097 = vunpack.c.l.b16 %v3835
        %v4098 = vunpack.c.h.b16 %v3835
        %v4099 = vunpack.c.l.b16 %v3836
        %v4100 = vunpack.c.h.b16 %v3836
        %v4101 = vunpack.c.l.b16 %v3837
        %v4102 = vunpack.c.h.b16 %v3837
        %v4103 = vunpack.c.l.b16 %v3838
        %v4104 = vunpack.c.h.b16 %v3838
        %v4105 = vunpack.c.l.b16 %v3839
        %v4106 = vunpack.c.h.b16 %v3839
        %v4107 = vunpack.c.l.b16 %v3840
        %v4108 = vunpack.c.h.b16 %v3840
        %v4109 = vunpack.c.l.b16 %v3841
        %v4110 = vunpack.c.h.b16 %v3841
        %v4111 = vunpack.c.l.b16 %v3842
        %v4112 = vunpack.c.h.b16 %v3842
        %v4113 = vunpack.c.l.b16 %v3843
        %v4114 = vunpack.c.h.b16 %v3843
        %v4115 = vunpack.c.l.b16 %v3844
        %v4116 = vunpack.c.h.b16 %v3844
        %v4117 = vunpack.c.l.b16 %v3845
        %v4118 = vunpack.c.h.b16 %v3845
        %v4119 = vunpack.c.l.b16 %v3846
        %v4120 = vunpack.c.h.b16 %v3846
        %v4121 = vunpack.c.l.b16 %v3847
        %v4122 = vunpack.c.h.b16 %v3847
        %v4123 = vunpack.c.l.b16 %v3848
        %v4124 = vunpack.c.h.b16 %v3848
        %v4125 = vunpack.c.l.b16 %v3849
        %v4126 = vunpack.c.h.b16 %v3849
        %v4127 = vunpack.c.l.b16 %v3850
        %v4128 = vunpack.c.h.b16 %v3850
        %v4129 = vunpack.c.l.b16 %v3851
        %v4130 = vunpack.c.h.b16 %v3851
        %v4131 = vunpack.c.l.b16 %v3852
        %v4132 = vunpack.c.h.b16 %v3852
        %v4133 = vunpack.c.l.b16 %v3853
        %v4134 = vunpack.c.h.b16 %v3853
        %v4135 = vunpack.c.l.b16 %v3854
        %v4136 = vunpack.c.h.b16 %v3854
        %v4137 = vunpack.c.l.b16 %v3855
        %v4138 = vunpack.c.h.b16 %v3855
        %v4139 = vunpack.c.l.b16 %v3856
        %v4140 = vunpack.c.h.b16 %v3856
        %v4141 = vunpack.c.l.b16 %v3857
        %v4142 = vunpack.c.h.b16 %v3857
        %v4143 = vunpack.c.l.b16 %v3858
        %v4144 = vunpack.c.h.b16 %v3858
        %v4145 = vunpack.c.l.b16 %v3859
        %v4146 = vunpack.c.h.b16 %v3859
        %v4147 = vunpack.c.l.b16 %v3860
        %v4148 = vunpack.c.h.b16 %v3860
        %v4149 = vunpack.c.l.b16 %v3861
        %v4150 = vunpack.c.h.b16 %v3861
        %v4151 = vunpack.c.l.b16 %v3862
        %v4152 = vunpack.c.h.b16 %v3862
        %v4153 = vunpack.c.l.b16 %v3863
        %v4154 = vunpack.c.h.b16 %v3863
        %v4155 = vunpack.c.l.b16 %v3864
        %v4156 = vunpack.c.h.b16 %v3864
        %v4157 = vunpack.c.l.b16 %v3865
        %v4158 = vunpack.c.h.b16 %v3865
        %v4159 = vunpack.c.l.b16 %v3866
        %v4160 = vunpack.c.h.b16 %v3866
        %v4161 = vunpack.c.l.b16 %v3867
        %v4162 = vunpack.c.h.b16 %v3867
        %v4163 = vunpack.c.l.b16 %v3868
        %v4164 = vunpack.c.h.b16 %v3868
        %v4165 = vunpack.c.l.b16 %v3869
        %v4166 = vunpack.c.h.b16 %v3869
        %v4167 = vunpack.c.l.b16 %v3870
        %v4168 = vunpack.c.h.b16 %v3870
        %v4169 = vunpack.c.l.b16 %v3871
        %v4170 = vunpack.c.h.b16 %v3871
        %v4171 = vunpack.c.l.b16 %v3872
        %v4172 = vunpack.c.h.b16 %v3872
        %v4173 = vunpack.c.l.b16 %v3873
        %v4174 = vunpack.c.h.b16 %v3873
        %v4175 = vunpack.c.l.b16 %v3874
        %v4176 = vunpack.c.h.b16 %v3874
        %v4177 = vunpack.c.l.b16 %v3875
        %v4178 = vunpack.c.h.b16 %v3875
        %v4179 = vunpack.c.l.b16 %v3876
        %v4180 = vunpack.c.h.b16 %v3876
        %v4181 = vunpack.c.l.b16 %v3877
        %v4182 = vunpack.c.h.b16 %v3877
        %v4183 = vunpack.c.l.b16 %v3878
        %v4184 = vunpack.c.h.b16 %v3878
        %v4185 = vunpack.c.l.b16 %v3879
        %v4186 = vunpack.c.h.b16 %v3879
        %v4187 = vunpack.c.l.b16 %v3880
        %v4188 = vunpack.c.h.b16 %v3880
        %v4189 = vunpack.c.l.b16 %v3881
        %v4190 = vunpack.c.h.b16 %v3881
        %v4191 = vunpack.c.l.b16 %v3882
        %v4192 = vunpack.c.h.b16 %v3882
        %v4193 = vunpack.c.l.b16 %v3883
        %v4194 = vunpack.c.h.b16 %v3883
        %v4195 = vunpack.c.l.b16 %v3884
        %v4196 = vunpack.c.h.b16 %v3884
        %v4197 = vunpack.c.l.b16 %v3885
        %v4198 = vunpack.c.h.b16 %v3885
        %v4199 = vunpack.c.l.b16 %v3886
        %v4200 = vunpack.c.h.b16 %v3886
        %v4201 = vunpack.c.l.b16 %v3887
        %v4202 = vunpack.c.h.b16 %v3887
        %v4203 = vunpack.c.l.b16 %v3888
        %v4204 = vunpack.c.h.b16 %v3888
        %v4205 = vunpack.c.l.b16 %v3889
        %v4206 = vunpack.c.h.b16 %v3889
        %v4207 = vunpack.c.l.b16 %v3890
        %v4208 = vunpack.c.h.b16 %v3890
        %v4209 = vunpack.c.l.b16 %v3891
        %v4210 = vunpack.c.h.b16 %v3891
        %v4211 = vunpack.c.l.b16 %v3892
        %v4212 = vunpack.c.h.b16 %v3892
        %v4213 = vunpack.c.l.b16 %v3893
        %v4214 = vunpack.c.h.b16 %v3893
        %v4215 = vunpack.c.l.b16 %v3894
        %v4216 = vunpack.c.h.b16 %v3894
        %v4217 = vunpack.c.l.b16 %v3895
        %v4218 = vunpack.c.h.b16 %v3895
        %v4219 = vunpack.c.l.b16 %v3896
        %v4220 = vunpack.c.h.b16 %v3896
        %v4221 = vunpack.c.l.b16 %v3897
        %v4222 = vunpack.c.h.b16 %v3897
        %v4223 = vunpack.c.l.b16 %v3898
        %v4224 = vunpack.c.h.b16 %v3898
        %v4225 = vunpack.c.l.b16 %v3899
        %v4226 = vunpack.c.h.b16 %v3899
        %v4227 = vunpack.c.l.b16 %v3900
        %v4228 = vunpack.c.h.b16 %v3900
        %v4229 = vunpack.c.l.b16 %v3901
        %v4230 = vunpack.c.h.b16 %v3901
        %v4231 = vunpack.c.l.b16 %v3902
        %v4232 = vunpack.c.h.b16 %v3902
        %v4233 = vunpack.c.l.b16 %v3903
        %v4234 = vunpack.c.h.b16 %v3903
        %v4235 = vunpack.c.l.b16 %v3904
        %v4236 = vunpack.c.h.b16 %v3904
        %v4237 = vunpack.c.l.b16 %v3905
        %v4238 = vunpack.c.h.b16 %v3905
        %v4239 = vunpack.c.l.b16 %v3906
        %v4240 = vunpack.c.h.b16 %v3906
        %v4241 = vunpack.c.l.b16 %v3907
        %v4242 = vunpack.c.h.b16 %v3907
        %v4243 = vunpack.c.l.b16 %v3908
        %v4244 = vunpack.c.h.b16 %v3908
        %v4245 = vunpack.c.l.b16 %v3909
        %v4246 = vunpack.c.h.b16 %v3909
        %v4247 = vunpack.c.l.b16 %v3910
        %v4248 = vunpack.c.h.b16 %v3910
        %v4249 = vunpack.c.l.b16 %v3911
        %v4250 = vunpack.c.h.b16 %v3911
        %v4251 = vunpack.c.l.b16 %v3912
        %v4252 = vunpack.c.h.b16 %v3912
        %v4253 = vunpack.c.l.b16 %v3913
        %v4254 = vunpack.c.h.b16 %v3913
        %v4255 = vunpack.c.l.b16 %v3914
        %v4256 = vunpack.c.h.b16 %v3914
        %v4257 = vunpack.c.l.b16 %v3915
        %v4258 = vunpack.c.h.b16 %v3915
        %v4259 = vunpack.c.l.b16 %v3916
        %v4260 = vunpack.c.h.b16 %v3916
        %v4261 = vunpack.c.l.b16 %v3917
        %v4262 = vunpack.c.h.b16 %v3917
        %v4263 = vunpack.c.l.b16 %v3918
        %v4264 = vunpack.c.h.b16 %v3918
        %v4265 = vunpack.c.l.b16 %v3919
        %v4266 = vunpack.c.h.b16 %v3919
        %v4267 = vunpack.c.l.b16 %v3920
        %v4268 = vunpack.c.h.b16 %v3920
        %v4269 = vunpack.c.l.b16 %v3921
        %v4270 = vunpack.c.h.b16 %v3921
        %v4271 = vunpack.c.l.b16 %v3922
        %v4272 = vunpack.c.h.b16 %v3922
        %v4273 = vunpack.c.l.b16 %v3923
        %v4274 = vunpack.c.h.b16 %v3923
        %v4275 = vunpack.c.l.b16 %v3924
        %v4276 = vunpack.c.h.b16 %v3924
        %v4277 = vunpack.c.l.b16 %v3925
        %v4278 = vunpack.c.h.b16 %v3925
        %v4279 = vunpack.c.l.b16 %v3926
        %v4280 = vunpack.c.h.b16 %v3926
        %v4281 = vunpack.c.l.b16 %v3927
        %v4282 = vunpack.c.h.b16 %v3927
        %v4283 = vunpack.c.l.b16 %v3928
        %v4284 = vunpack.c.h.b16 %v3928
        %v4285 = vunpack.c.l.b16 %v3929
        %v4286 = vunpack.c.h.b16 %v3929
        %v4287 = vunpack.c.l.b16 %v3930
        %v4288 = vunpack.c.h.b16 %v3930
        %v4289 = vunpack.c.l.b16 %v3931
        %v4290 = vunpack.c.h.b16 %v3931
        %v4291 = vunpack.c.l.b16 %v3932
        %v4292 = vunpack.c.h.b16 %v3932
        %v4293 = vunpack.c.l.b16 %v3933
        %v4294 = vunpack.c.h.b16 %v3933
        %v4295 = vunpack.c.l.b16 %v3934
        %v4296 = vunpack.c.h.b16 %v3934
        %v4297 = vunpack.c.l.b16 %v3935
        %v4298 = vunpack.c.h.b16 %v3935
        %v4299 = vunpack.c.l.b16 %v3936
        %v4300 = vunpack.c.h.b16 %v3936
        %v4301 = vunpack.c.l.b16 %v3937
        %v4302 = vunpack.c.h.b16 %v3937
        %v4303 = vunpack.c.l.b16 %v3938
        %v4304 = vunpack.c.h.b16 %v3938
        %v4305 = vunpack.c.l.b16 %v3939
        %v4306 = vunpack.c.h.b16 %v3939
        %v4307 = vunpack.c.l.b16 %v3940
        %v4308 = vunpack.c.h.b16 %v3940
        %v4309 = vunpack.c.l.b16 %v3941
        %v4310 = vunpack.c.h.b16 %v3941
        %v4311 = vunpack.c.l.b16 %v3942
        %v4312 = vunpack.c.h.b16 %v3942
        %v4313 = vunpack.c.l.b16 %v3943
        %v4314 = vunpack.c.h.b16 %v3943
        %v4315 = vunpack.c.l.b16 %v3944
        %v4316 = vunpack.c.h.b16 %v3944
        %v4317 = vunpack.c.l.b16 %v3945
        %v4318 = vunpack.c.h.b16 %v3945
        %v4319 = vunpack.c.l.b16 %v3946
        %v4320 = vunpack.c.h.b16 %v3946
        %v4321 = vunpack.c.l.b16 %v3947
        %v4322 = vunpack.c.h.b16 %v3947
        %v4323 = vunpack.c.l.b16 %v3948
        %v4324 = vunpack.c.h.b16 %v3948
        %v4325 = vunpack.c.l.b16 %v3949
        %v4326 = vunpack.c.h.b16 %v3949
        %v4327 = vunpack.c.l.b16 %v3950
        %v4328 = vunpack.c.h.b16 %v3950
        %v4329 = vunpack.c.l.b16 %v3951
        %v4330 = vunpack.c.h.b16 %v3951
        %v4331 = vunpack.c.l.b16 %v3952
        %v4332 = vunpack.c.h.b16 %v3952
        %v4333 = vunpack.c.l.b16 %v3953
        %v4334 = vunpack.c.h.b16 %v3953
        %v4335 = vunpack.c.l.b16 %v3954
        %v4336 = vunpack.c.h.b16 %v3954
        %v4337 = vunpack.c.l.b16 %v3955
        %v4338 = vunpack.c.h.b16 %v3955
        %v4339 = vunpack.c.l.b16 %v3956
        %v4340 = vunpack.c.h.b16 %v3956
        %v4341 = vpack.c.b16 %v4085, %v4085
        %v4342 = vpack.c.b16 %v4086, %v4086
        %v4343 = vpack.c.b16 %v4087, %v4087
        %v4344 = vpack.c.b16 %v4088, %v4088
        %v4345 = vpack.c.b16 %v4089, %v4089
        %v4346 = vpack.c.b16 %v4090, %v4090
        %v4347 = vpack.c.b16 %v4091, %v4091
        %v4348 = vpack.c.b16 %v4092, %v4092
        %v4349 = vpack.c.b16 %v4093, %v4093
        %v4350 = vpack.c.b16 %v4094, %v4094
        %v4351 = vpack.c.b16 %v4095, %v4095
        %v4352 = vpack.c.b16 %v4096, %v4096
        %v4353 = vpack.c.b16 %v4097, %v4097
        %v4354 = vpack.c.b16 %v4098, %v4098
        %v4355 = vpack.c.b16 %v4099, %v4099
        %v4356 = vpack.c.b16 %v4100, %v4100
        %v4357 = vpack.c.b16 %v4101, %v4101
        %v4358 = vpack.c.b16 %v4102, %v4102
        %v4359 = vpack.c.b16 %v4103, %v4103
        %v4360 = vpack.c.b16 %v4104, %v4104
        %v4361 = vpack.c.b16 %v4105, %v4105
        %v4362 = vpack.c.b16 %v4106, %v4106
        %v4363 = vpack.c.b16 %v4107, %v4107
        %v4364 = vpack.c.b16 %v4108, %v4108
        %v4365 = vpack.c.b16 %v4109, %v4109
        %v4366 = vpack.c.b16 %v4110, %v4110
        %v4367 = vpack.c.b16 %v4111, %v4111
        %v4368 = vpack.c.b16 %v4112, %v4112
        %v4369 = vpack.c.b16 %v4113, %v4113
        %v4370 = vpack.c.b16 %v4114, %v4114
        %v4371 = vpack.c.b16 %v4115, %v4115
        %v4372 = vpack.c.b16 %v4116, %v4116
        %v4373 = vpack.c.b16 %v4117, %v4117
        %v4374 = vpack.c.b16 %v4118, %v4118
        %v4375 = vpack.c.b16 %v4119, %v4119
        %v4376 = vpack.c.b16 %v4120, %v4120
        %v4377 = vpack.c.b16 %v4121, %v4121
        %v4378 = vpack.c.b16 %v4122, %v4122
        %v4379 = vpack.c.b16 %v4123, %v4123
        %v4380 = vpack.c.b16 %v4124, %v4124
        %v4381 = vpack.c.b16 %v4125, %v4125
        %v4382 = vpack.c.b16 %v4126, %v4126
        %v4383 = vpack.c.b16 %v4127, %v4127
        %v4384 = vpack.c.b16 %v4128, %v4128
        %v4385 = vpack.c.b16 %v4129, %v4129
        %v4386 = vpack.c.b16 %v4130, %v4130
        %v4387 = vpack.c.b16 %v4131, %v4131
        %v4388 = vpack.c.b16 %v4132, %v4132
        %v4389 = vpack.c.b16 %v4133, %v4133
        %v4390 = vpack.c.b16 %v4134, %v4134
        %v4391 = vpack.c.b16 %v4135, %v4135
        %v4392 = vpack.c.b16 %v4136, %v4136
        %v4393 = vpack.c.b16 %v4137, %v4137
        %v4394 = vpack.c.b16 %v4138, %v4138
        %v4395 = vpack.c.b16 %v4139, %v4139
        %v4396 = vpack.c.b16 %v4140, %v4140
        %v4397 = vpack.c.b16 %v4141, %v4141
        %v4398 = vpack.c.b16 %v4142, %v4142
        %v4399 = vpack.c.b16 %v4143, %v4143
        %v4400 = vpack.c.b16 %v4144, %v4144
        %v4401 = vpack.c.b16 %v4145, %v4145
        %v4402 = vpack.c.b16 %v4146, %v4146
        %v4403 = vpack.c.b16 %v4147, %v4147
        %v4404 = vpack.c.b16 %v4148, %v4148
        %v4405 = vpack.c.b16 %v4149, %v4149
        %v4406 = vpack.c.b16 %v4150, %v4150
        %v4407 = vpack.c.b16 %v4151, %v4151
        %v4408 = vpack.c.b16 %v4152, %v4152
        %v4409 = vpack.c.b16 %v4153, %v4153
        %v4410 = vpack.c.b16 %v4154, %v4154
        %v4411 = vpack.c.b16 %v4155, %v4155
        %v4412 = vpack.c.b16 %v4156, %v4156
        %v4413 = vpack.c.b16 %v4157, %v4157
        %v4414 = vpack.c.b16 %v4158, %v4158
        %v4415 = vpack.c.b16 %v4159, %v4159
        %v4416 = vpack.c.b16 %v4160, %v4160
        %v4417 = vpack.c.b16 %v4161, %v4161
        %v4418 = vpack.c.b16 %v4162, %v4162
        %v4419 = vpack.c.b16 %v4163, %v4163
        %v4420 = vpack.c.b16 %v4164, %v4164
        %v4421 = vpack.c.b16 %v4165, %v4165
        %v4422 = vpack.c.b16 %v4166, %v4166
        %v4423 = vpack.c.b16 %v4167, %v4167
        %v4424 = vpack.c.b16 %v4168, %v4168
        %v4425 = vpack.c.b16 %v4169, %v4169
        %v4426 = vpack.c.b16 %v4170, %v4170
        %v4427 = vpack.c.b16 %v4171, %v4171
        %v4428 = vpack.c.b16 %v4172, %v4172
        %v4429 = vpack.c.b16 %v4173, %v4173
        %v4430 = vpack.c.b16 %v4174, %v4174
        %v4431 = vpack.c.b16 %v4175, %v4175
        %v4432 = vpack.c.b16 %v4176, %v4176
        %v4433 = vpack.c.b16 %v4177, %v4177
        %v4434 = vpack.c.b16 %v4178, %v4178
        %v4435 = vpack.c.b16 %v4179, %v4179
        %v4436 = vpack.c.b16 %v4180, %v4180
        %v4437 = vpack.c.b16 %v4181, %v4181
        %v4438 = vpack.c.b16 %v4182, %v4182
        %v4439 = vpack.c.b16 %v4183, %v4183
        %v4440 = vpack.c.b16 %v4184, %v4184
        %v4441 = vpack.c.b16 %v4185, %v4185
        %v4442 = vpack.c.b16 %v4186, %v4186
        %v4443 = vpack.c.b16 %v4187, %v4187
        %v4444 = vpack.c.b16 %v4188, %v4188
        %v4445 = vpack.c.b16 %v4189, %v4189
        %v4446 = vpack.c.b16 %v4190, %v4190
        %v4447 = vpack.c.b16 %v4191, %v4191
        %v4448 = vpack.c.b16 %v4192, %v4192
        %v4449 = vpack.c.b16 %v4193, %v4193
        %v4450 = vpack.c.b16 %v4194, %v4194
        %v4451 = vpack.c.b16 %v4195, %v4195
        %v4452 = vpack.c.b16 %v4196, %v4196
        %v4453 = vpack.c.b16 %v4197, %v4197
        %v4454 = vpack.c.b16 %v4198, %v4198
        %v4455 = vpack.c.b16 %v4199, %v4199
        %v4456 = vpack.c.b16 %v4200, %v4200
        %v4457 = vpack.c.b16 %v4201, %v4201
        %v4458 = vpack.c.b16 %v4202, %v4202
        %v4459 = vpack.c.b16 %v4203, %v4203
        %v4460 = vpack.c.b16 %v4204, %v4204
        %v4461 = vpack.c.b16 %v4205, %v4205
        %v4462 = vpack.c.b16 %v4206, %v4206
        %v4463 = vpack.c.b16 %v4207, %v4207
        %v4464 = vpack.c.b16 %v4208, %v4208
        %v4465 = vpack.c.b16 %v4209, %v4209
        %v4466 = vpack.c.b16 %v4210, %v4210
        %v4467 = vpack.c.b16 %v4211, %v4211
        %v4468 = vpack.c.b16 %v4212, %v4212
        %v4469 = vpack.c.b16 %v4213, %v4213
        %v4470 = vpack.c.b16 %v4214, %v4214
        %v4471 = vpack.c.b16 %v4215, %v4215
        %v4472 = vpack.c.b16 %v4216, %v4216
        %v4473 = vpack.c.b16 %v4217, %v4217
        %v4474 = vpack.c.b16 %v4218, %v4218
        %v4475 = vpack.c.b16 %v4219, %v4219
        %v4476 = vpack.c.b16 %v4220, %v4220
        %v4477 = vpack.c.b16 %v4221, %v4221
        %v4478 = vpack.c.b16 %v4222, %v4222
        %v4479 = vpack.c.b16 %v4223, %v4223
        %v4480 = vpack.c.b16 %v4224, %v4224
        %v4481 = vpack.c.b16 %v4225, %v4225
        %v4482 = vpack.c.b16 %v4226, %v4226
        %v4483 = vpack.c.b16 %v4227, %v4227
        %v4484 = vpack.c.b16 %v4228, %v4228
        %v4485 = vpack.c.b16 %v4229, %v4229
        %v4486 = vpack.c.b16 %v4230, %v4230
        %v4487 = vpack.c.b16 %v4231, %v4231
        %v4488 = vpack.c.b16 %v4232, %v4232
        %v4489 = vpack.c.b16 %v4233, %v4233
        %v4490 = vpack.c.b16 %v4234, %v4234
        %v4491 = vpack.c.b16 %v4235, %v4235
        %v4492 = vpack.c.b16 %v4236, %v4236
        %v4493 = vpack.c.b16 %v4237, %v4237
        %v4494 = vpack.c.b16 %v4238, %v4238
        %v4495 = vpack.c.b16 %v4239, %v4239
        %v4496 = vpack.c.b16 %v4240, %v4240
        %v4497 = vpack.c.b16 %v4241, %v4241
        %v4498 = vpack.c.b16 %v4242, %v4242
        %v4499 = vpack.c.b16 %v4243, %v4243
        %v4500 = vpack.c.b16 %v4244, %v4244
        %v4501 = vpack.c.b16 %v4245, %v4245
        %v4502 = vpack.c.b16 %v4246, %v4246
        %v4503 = vpack.c.b16 %v4247, %v4247
        %v4504 = vpack.c.b16 %v4248, %v4248
        %v4505 = vpack.c.b16 %v4249, %v4249
        %v4506 = vpack.c.b16 %v4250, %v4250
        %v4507 = vpack.c.b16 %v4251, %v4251
        %v4508 = vpack.c.b16 %v4252, %v4252
        %v4509 = vpack.c.b16 %v4253, %v4253
        %v4510 = vpack.c.b16 %v4254, %v4254
        %v4511 = vpack.c.b16 %v4255, %v4255
        %v4512 = vpack.c.b16 %v4256, %v4256
        %v4513 = vpack.c.b16 %v4257, %v4257
        %v4514 = vpack.c.b16 %v4258, %v4258
        %v4515 = vpack.c.b16 %v4259, %v4259
        %v4516 = vpack.c.b16 %v4260, %v4260
        %v4517 = vpack.c.b16 %v4261, %v4261
        %v4518 = vpack.c.b16 %v4262, %v4262
        %v4519 = vpack.c.b16 %v4263, %v4263
        %v4520 = vpack.c.b16 %v4264, %v4264
        %v4521 = vpack.c.b16 %v4265, %v4265
        %v4522 = vpack.c.b16 %v4266, %v4266
        %v4523 = vpack.c.b16 %v4267, %v4267
        %v4524 = vpack.c.b16 %v4268, %v4268
        %v4525 = vpack.c.b16 %v4269, %v4269
        %v4526 = vpack.c.b16 %v4270, %v4270
        %v4527 = vpack.c.b16 %v4271, %v4271
        %v4528 = vpack.c.b16 %v4272, %v4272
        %v4529 = vpack.c.b16 %v4273, %v4273
        %v4530 = vpack.c.b16 %v4274, %v4274
        %v4531 = vpack.c.b16 %v4275, %v4275
        %v4532 = vpack.c.b16 %v4276, %v4276
        %v4533 = vpack.c.b16 %v4277, %v4277
        %v4534 = vpack.c.b16 %v4278, %v4278
        %v4535 = vpack.c.b16 %v4279, %v4279
        %v4536 = vpack.c.b16 %v4280, %v4280
        %v4537 = vpack.c.b16 %v4281, %v4281
        %v4538 = vpack.c.b16 %v4282, %v4282
        %v4539 = vpack.c.b16 %v4283, %v4283
        %v4540 = vpack.c.b16 %v4284, %v4284
        %v4541 = vpack.c.b16 %v4285, %v4285
        %v4542 = vpack.c.b16 %v4286, %v4286
        %v4543 = vpack.c.b16 %v4287, %v4287
        %v4544 = vpack.c.b16 %v4288, %v4288
        %v4545 = vpack.c.b16 %v4289, %v4289
        %v4546 = vpack.c.b16 %v4290, %v4290
        %v4547 = vpack.c.b16 %v4291, %v4291
        %v4548 = vpack.c.b16 %v4292, %v4292
        %v4549 = vpack.c.b16 %v4293, %v4293
        %v4550 = vpack.c.b16 %v4294, %v4294
        %v4551 = vpack.c.b16 %v4295, %v4295
        %v4552 = vpack.c.b16 %v4296, %v4296
        %v4553 = vpack.c.b16 %v4297, %v4297
        %v4554 = vpack.c.b16 %v4298, %v4298
        %v4555 = vpack.c.b16 %v4299, %v4299
        %v4556 = vpack.c.b16 %v4300, %v4300
        %v4557 = vpack.c.b16 %v4301, %v4301
        %v4558 = vpack.c.b16 %v4302, %v4302
        %v4559 = vpack.c.b16 %v4303, %v4303
        %v4560 = vpack.c.b16 %v4304, %v4304
        %v4561 = vpack.c.b16 %v4305, %v4305
        %v4562 = vpack.c.b16 %v4306, %v4306
        %v4563 = vpack.c.b16 %v4307, %v4307
        %v4564 = vpack.c.b16 %v4308, %v4308
        %v4565 = vpack.c.b16 %v4309, %v4309
        %v4566 = vpack.c.b16 %v4310, %v4310
        %v4567 = vpack.c.b16 %v4311, %v4311
        %v4568 = vpack.c.b16 %v4312, %v4312
        %v4569 = vpack.c.b16 %v4313, %v4313
        %v4570 = vpack.c.b16 %v4314, %v4314
        %v4571 = vpack.c.b16 %v4315, %v4315
        %v4572 = vpack.c.b16 %v4316, %v4316
        %v4573 = vpack.c.b16 %v4317, %v4317
        %v4574 = vpack.c.b16 %v4318, %v4318
        %v4575 = vpack.c.b16 %v4319, %v4319
        %v4576 = vpack.c.b16 %v4320, %v4320
        %v4577 = vpack.c.b16 %v4321, %v4321
        %v4578 = vpack.c.b16 %v4322, %v4322
        %v4579 = vpack.c.b16 %v4323, %v4323
        %v4580 = vpack.c.b16 %v4324, %v4324
        %v4581 = vpack.c.b16 %v4325, %v4325
        %v4582 = vpack.c.b16 %v4326, %v4326
        %v4583 = vpack.c.b16 %v4327, %v4327
        %v4584 = vpack.c.b16 %v4328, %v4328
        %v4585 = vpack.c.b16 %v4329, %v4329
        %v4586 = vpack.c.b16 %v4330, %v4330
        %v4587 = vpack.c.b16 %v4331, %v4331
        %v4588 = vpack.c.b16 %v4332, %v4332
        %v4589 = vpack.c.b16 %v4333, %v4333
        %v4590 = vpack.c.b16 %v4334, %v4334
        %v4591 = vpack.c.b16 %v4335, %v4335
        %v4592 = vpack.c.b16 %v4336, %v4336
        %v4593 = vpack.c.b16 %v4337, %v4337
        %v4594 = vpack.c.b16 %v4338, %v4338
        %v4595 = vpack.c.b16 %v4339, %v4339
        %v4596 = vpack.c.b16 %v4340, %v4340
        %vm4853 = vcmask 519168
        %4854 = vst.msk [vmem:[%s282] sm:$0xf] %vm4853, %v4341
        %4855 = vst.msk [vmem:[%s282 + $0x4] sm:$0xf] %vm4853, %v4342
        %4856 = vst.msk [vmem:[%s282 + $0x8] sm:$0xf] %vm4853, %v4343
        %4857 = vst.msk [vmem:[%s282 + $0xc] sm:$0xf] %vm4853, %v4344
        %4858 = vst.msk [vmem:[%s282 + $0x10] sm:$0xf] %vm4853, %v4345
        %4859 = vst.msk [vmem:[%s282 + $0x14] sm:$0xf] %vm4853, %v4346
        %4860 = vst.msk [vmem:[%s282 + $0x18] sm:$0xf] %vm4853, %v4347
        %4861 = vst.msk [vmem:[%s282 + $0x1c] sm:$0xf] %vm4853, %v4348
        %4862 = vst.msk [vmem:[%s282 + $0x20] sm:$0xf] %vm4853, %v4349
        %4863 = vst.msk [vmem:[%s282 + $0x24] sm:$0xf] %vm4853, %v4350
        %4864 = vst.msk [vmem:[%s282 + $0x28] sm:$0xf] %vm4853, %v4351
        %4865 = vst.msk [vmem:[%s282 + $0x2c] sm:$0xf] %vm4853, %v4352
        %4866 = vst.msk [vmem:[%s282 + $0x30] sm:$0xf] %vm4853, %v4353
        %4867 = vst.msk [vmem:[%s282 + $0x34] sm:$0xf] %vm4853, %v4354
        %4868 = vst.msk [vmem:[%s282 + $0x38] sm:$0xf] %vm4853, %v4355
        %4869 = vst.msk [vmem:[%s282 + $0x3c] sm:$0xf] %vm4853, %v4356
        %4870 = vst.msk [vmem:[%s282 + $0x40] sm:$0xf] %vm4853, %v4357
        %4871 = vst.msk [vmem:[%s282 + $0x44] sm:$0xf] %vm4853, %v4358
        %4872 = vst.msk [vmem:[%s282 + $0x48] sm:$0xf] %vm4853, %v4359
        %4873 = vst.msk [vmem:[%s282 + $0x4c] sm:$0xf] %vm4853, %v4360
        %4874 = vst.msk [vmem:[%s282 + $0x50] sm:$0xf] %vm4853, %v4361
        %4875 = vst.msk [vmem:[%s282 + $0x54] sm:$0xf] %vm4853, %v4362
        %4876 = vst.msk [vmem:[%s282 + $0x58] sm:$0xf] %vm4853, %v4363
        %4877 = vst.msk [vmem:[%s282 + $0x5c] sm:$0xf] %vm4853, %v4364
        %4878 = vst.msk [vmem:[%s282 + $0x60] sm:$0xf] %vm4853, %v4365
        %4879 = vst.msk [vmem:[%s282 + $0x64] sm:$0xf] %vm4853, %v4366
        %4880 = vst.msk [vmem:[%s282 + $0x68] sm:$0xf] %vm4853, %v4367
        %4881 = vst.msk [vmem:[%s282 + $0x6c] sm:$0xf] %vm4853, %v4368
        %4882 = vst.msk [vmem:[%s282 + $0x70] sm:$0xf] %vm4853, %v4369
        %4883 = vst.msk [vmem:[%s282 + $0x74] sm:$0xf] %vm4853, %v4370
        %4884 = vst.msk [vmem:[%s282 + $0x78] sm:$0xf] %vm4853, %v4371
        %4885 = vst.msk [vmem:[%s282 + $0x7c] sm:$0xf] %vm4853, %v4372
        %4886 = vst.msk [vmem:[%s282 + $0x80] sm:$0xf] %vm4853, %v4373
        %4887 = vst.msk [vmem:[%s282 + $0x84] sm:$0xf] %vm4853, %v4374
        %4888 = vst.msk [vmem:[%s282 + $0x88] sm:$0xf] %vm4853, %v4375
        %4889 = vst.msk [vmem:[%s282 + $0x8c] sm:$0xf] %vm4853, %v4376
        %4890 = vst.msk [vmem:[%s282 + $0x90] sm:$0xf] %vm4853, %v4377
        %4891 = vst.msk [vmem:[%s282 + $0x94] sm:$0xf] %vm4853, %v4378
        %4892 = vst.msk [vmem:[%s282 + $0x98] sm:$0xf] %vm4853, %v4379
        %4893 = vst.msk [vmem:[%s282 + $0x9c] sm:$0xf] %vm4853, %v4380
        %4894 = vst.msk [vmem:[%s282 + $0xa0] sm:$0xf] %vm4853, %v4381
        %4895 = vst.msk [vmem:[%s282 + $0xa4] sm:$0xf] %vm4853, %v4382
        %4896 = vst.msk [vmem:[%s282 + $0xa8] sm:$0xf] %vm4853, %v4383
        %4897 = vst.msk [vmem:[%s282 + $0xac] sm:$0xf] %vm4853, %v4384
        %4898 = vst.msk [vmem:[%s282 + $0xb0] sm:$0xf] %vm4853, %v4385
        %4899 = vst.msk [vmem:[%s282 + $0xb4] sm:$0xf] %vm4853, %v4386
        %4900 = vst.msk [vmem:[%s282 + $0xb8] sm:$0xf] %vm4853, %v4387
        %4901 = vst.msk [vmem:[%s282 + $0xbc] sm:$0xf] %vm4853, %v4388
        %4902 = vst.msk [vmem:[%s282 + $0xc0] sm:$0xf] %vm4853, %v4389
        %4903 = vst.msk [vmem:[%s282 + $0xc4] sm:$0xf] %vm4853, %v4390
        %4904 = vst.msk [vmem:[%s282 + $0xc8] sm:$0xf] %vm4853, %v4391
        %4905 = vst.msk [vmem:[%s282 + $0xcc] sm:$0xf] %vm4853, %v4392
        %4906 = vst.msk [vmem:[%s282 + $0xd0] sm:$0xf] %vm4853, %v4393
        %4907 = vst.msk [vmem:[%s282 + $0xd4] sm:$0xf] %vm4853, %v4394
        %4908 = vst.msk [vmem:[%s282 + $0xd8] sm:$0xf] %vm4853, %v4395
        %4909 = vst.msk [vmem:[%s282 + $0xdc] sm:$0xf] %vm4853, %v4396
        %4910 = vst.msk [vmem:[%s282 + $0xe0] sm:$0xf] %vm4853, %v4397
        %4911 = vst.msk [vmem:[%s282 + $0xe4] sm:$0xf] %vm4853, %v4398
        %4912 = vst.msk [vmem:[%s282 + $0xe8] sm:$0xf] %vm4853, %v4399
        %4913 = vst.msk [vmem:[%s282 + $0xec] sm:$0xf] %vm4853, %v4400
        %4914 = vst.msk [vmem:[%s282 + $0xf0] sm:$0xf] %vm4853, %v4401
        %4915 = vst.msk [vmem:[%s282 + $0xf4] sm:$0xf] %vm4853, %v4402
        %4916 = vst.msk [vmem:[%s282 + $0xf8] sm:$0xf] %vm4853, %v4403
        %4917 = vst.msk [vmem:[%s282 + $0xfc] sm:$0xf] %vm4853, %v4404
        %4918 = vst.msk [vmem:[%s282 + $0x100] sm:$0xf] %vm4853, %v4405
        %4919 = vst.msk [vmem:[%s282 + $0x104] sm:$0xf] %vm4853, %v4406
        %4920 = vst.msk [vmem:[%s282 + $0x108] sm:$0xf] %vm4853, %v4407
        %4921 = vst.msk [vmem:[%s282 + $0x10c] sm:$0xf] %vm4853, %v4408
        %4922 = vst.msk [vmem:[%s282 + $0x110] sm:$0xf] %vm4853, %v4409
        %4923 = vst.msk [vmem:[%s282 + $0x114] sm:$0xf] %vm4853, %v4410
        %4924 = vst.msk [vmem:[%s282 + $0x118] sm:$0xf] %vm4853, %v4411
        %4925 = vst.msk [vmem:[%s282 + $0x11c] sm:$0xf] %vm4853, %v4412
        %4926 = vst.msk [vmem:[%s282 + $0x120] sm:$0xf] %vm4853, %v4413
        %4927 = vst.msk [vmem:[%s282 + $0x124] sm:$0xf] %vm4853, %v4414
        %4928 = vst.msk [vmem:[%s282 + $0x128] sm:$0xf] %vm4853, %v4415
        %4929 = vst.msk [vmem:[%s282 + $0x12c] sm:$0xf] %vm4853, %v4416
        %4930 = vst.msk [vmem:[%s282 + $0x130] sm:$0xf] %vm4853, %v4417
        %4931 = vst.msk [vmem:[%s282 + $0x134] sm:$0xf] %vm4853, %v4418
        %4932 = vst.msk [vmem:[%s282 + $0x138] sm:$0xf] %vm4853, %v4419
        %4933 = vst.msk [vmem:[%s282 + $0x13c] sm:$0xf] %vm4853, %v4420
        %4934 = vst.msk [vmem:[%s282 + $0x140] sm:$0xf] %vm4853, %v4421
        %4935 = vst.msk [vmem:[%s282 + $0x144] sm:$0xf] %vm4853, %v4422
        %4936 = vst.msk [vmem:[%s282 + $0x148] sm:$0xf] %vm4853, %v4423
        %4937 = vst.msk [vmem:[%s282 + $0x14c] sm:$0xf] %vm4853, %v4424
        %4938 = vst.msk [vmem:[%s282 + $0x150] sm:$0xf] %vm4853, %v4425
        %4939 = vst.msk [vmem:[%s282 + $0x154] sm:$0xf] %vm4853, %v4426
        %4940 = vst.msk [vmem:[%s282 + $0x158] sm:$0xf] %vm4853, %v4427
        %4941 = vst.msk [vmem:[%s282 + $0x15c] sm:$0xf] %vm4853, %v4428
        %4942 = vst.msk [vmem:[%s282 + $0x160] sm:$0xf] %vm4853, %v4429
        %4943 = vst.msk [vmem:[%s282 + $0x164] sm:$0xf] %vm4853, %v4430
        %4944 = vst.msk [vmem:[%s282 + $0x168] sm:$0xf] %vm4853, %v4431
        %4945 = vst.msk [vmem:[%s282 + $0x16c] sm:$0xf] %vm4853, %v4432
        %4946 = vst.msk [vmem:[%s282 + $0x170] sm:$0xf] %vm4853, %v4433
        %4947 = vst.msk [vmem:[%s282 + $0x174] sm:$0xf] %vm4853, %v4434
        %4948 = vst.msk [vmem:[%s282 + $0x178] sm:$0xf] %vm4853, %v4435
        %4949 = vst.msk [vmem:[%s282 + $0x17c] sm:$0xf] %vm4853, %v4436
        %4950 = vst.msk [vmem:[%s282 + $0x180] sm:$0xf] %vm4853, %v4437
        %4951 = vst.msk [vmem:[%s282 + $0x184] sm:$0xf] %vm4853, %v4438
        %4952 = vst.msk [vmem:[%s282 + $0x188] sm:$0xf] %vm4853, %v4439
        %4953 = vst.msk [vmem:[%s282 + $0x18c] sm:$0xf] %vm4853, %v4440
        %4954 = vst.msk [vmem:[%s282 + $0x190] sm:$0xf] %vm4853, %v4441
        %4955 = vst.msk [vmem:[%s282 + $0x194] sm:$0xf] %vm4853, %v4442
        %4956 = vst.msk [vmem:[%s282 + $0x198] sm:$0xf] %vm4853, %v4443
        %4957 = vst.msk [vmem:[%s282 + $0x19c] sm:$0xf] %vm4853, %v4444
        %4958 = vst.msk [vmem:[%s282 + $0x1a0] sm:$0xf] %vm4853, %v4445
        %4959 = vst.msk [vmem:[%s282 + $0x1a4] sm:$0xf] %vm4853, %v4446
        %4960 = vst.msk [vmem:[%s282 + $0x1a8] sm:$0xf] %vm4853, %v4447
        %4961 = vst.msk [vmem:[%s282 + $0x1ac] sm:$0xf] %vm4853, %v4448
        %4962 = vst.msk [vmem:[%s282 + $0x1b0] sm:$0xf] %vm4853, %v4449
        %4963 = vst.msk [vmem:[%s282 + $0x1b4] sm:$0xf] %vm4853, %v4450
        %4964 = vst.msk [vmem:[%s282 + $0x1b8] sm:$0xf] %vm4853, %v4451
        %4965 = vst.msk [vmem:[%s282 + $0x1bc] sm:$0xf] %vm4853, %v4452
        %4966 = vst.msk [vmem:[%s282 + $0x1c0] sm:$0xf] %vm4853, %v4453
        %4967 = vst.msk [vmem:[%s282 + $0x1c4] sm:$0xf] %vm4853, %v4454
        %4968 = vst.msk [vmem:[%s282 + $0x1c8] sm:$0xf] %vm4853, %v4455
        %4969 = vst.msk [vmem:[%s282 + $0x1cc] sm:$0xf] %vm4853, %v4456
        %4970 = vst.msk [vmem:[%s282 + $0x1d0] sm:$0xf] %vm4853, %v4457
        %4971 = vst.msk [vmem:[%s282 + $0x1d4] sm:$0xf] %vm4853, %v4458
        %4972 = vst.msk [vmem:[%s282 + $0x1d8] sm:$0xf] %vm4853, %v4459
        %4973 = vst.msk [vmem:[%s282 + $0x1dc] sm:$0xf] %vm4853, %v4460
        %4974 = vst.msk [vmem:[%s282 + $0x1e0] sm:$0xf] %vm4853, %v4461
        %4975 = vst.msk [vmem:[%s282 + $0x1e4] sm:$0xf] %vm4853, %v4462
        %4976 = vst.msk [vmem:[%s282 + $0x1e8] sm:$0xf] %vm4853, %v4463
        %4977 = vst.msk [vmem:[%s282 + $0x1ec] sm:$0xf] %vm4853, %v4464
        %4978 = vst.msk [vmem:[%s282 + $0x1f0] sm:$0xf] %vm4853, %v4465
        %4979 = vst.msk [vmem:[%s282 + $0x1f4] sm:$0xf] %vm4853, %v4466
        %4980 = vst.msk [vmem:[%s282 + $0x1f8] sm:$0xf] %vm4853, %v4467
        %4981 = vst.msk [vmem:[%s282 + $0x1fc] sm:$0xf] %vm4853, %v4468
        %4982 = vst.msk [vmem:[%s282 + $0x200] sm:$0xf] %vm4853, %v4469
        %4983 = vst.msk [vmem:[%s282 + $0x204] sm:$0xf] %vm4853, %v4470
        %4984 = vst.msk [vmem:[%s282 + $0x208] sm:$0xf] %vm4853, %v4471
        %4985 = vst.msk [vmem:[%s282 + $0x20c] sm:$0xf] %vm4853, %v4472
        %4986 = vst.msk [vmem:[%s282 + $0x210] sm:$0xf] %vm4853, %v4473
        %4987 = vst.msk [vmem:[%s282 + $0x214] sm:$0xf] %vm4853, %v4474
        %4988 = vst.msk [vmem:[%s282 + $0x218] sm:$0xf] %vm4853, %v4475
        %4989 = vst.msk [vmem:[%s282 + $0x21c] sm:$0xf] %vm4853, %v4476
        %4990 = vst.msk [vmem:[%s282 + $0x220] sm:$0xf] %vm4853, %v4477
        %4991 = vst.msk [vmem:[%s282 + $0x224] sm:$0xf] %vm4853, %v4478
        %4992 = vst.msk [vmem:[%s282 + $0x228] sm:$0xf] %vm4853, %v4479
        %4993 = vst.msk [vmem:[%s282 + $0x22c] sm:$0xf] %vm4853, %v4480
        %4994 = vst.msk [vmem:[%s282 + $0x230] sm:$0xf] %vm4853, %v4481
        %4995 = vst.msk [vmem:[%s282 + $0x234] sm:$0xf] %vm4853, %v4482
        %4996 = vst.msk [vmem:[%s282 + $0x238] sm:$0xf] %vm4853, %v4483
        %4997 = vst.msk [vmem:[%s282 + $0x23c] sm:$0xf] %vm4853, %v4484
        %4998 = vst.msk [vmem:[%s282 + $0x240] sm:$0xf] %vm4853, %v4485
        %4999 = vst.msk [vmem:[%s282 + $0x244] sm:$0xf] %vm4853, %v4486
        %5000 = vst.msk [vmem:[%s282 + $0x248] sm:$0xf] %vm4853, %v4487
        %5001 = vst.msk [vmem:[%s282 + $0x24c] sm:$0xf] %vm4853, %v4488
        %5002 = vst.msk [vmem:[%s282 + $0x250] sm:$0xf] %vm4853, %v4489
        %5003 = vst.msk [vmem:[%s282 + $0x254] sm:$0xf] %vm4853, %v4490
        %5004 = vst.msk [vmem:[%s282 + $0x258] sm:$0xf] %vm4853, %v4491
        %5005 = vst.msk [vmem:[%s282 + $0x25c] sm:$0xf] %vm4853, %v4492
        %5006 = vst.msk [vmem:[%s282 + $0x260] sm:$0xf] %vm4853, %v4493
        %5007 = vst.msk [vmem:[%s282 + $0x264] sm:$0xf] %vm4853, %v4494
        %5008 = vst.msk [vmem:[%s282 + $0x268] sm:$0xf] %vm4853, %v4495
        %5009 = vst.msk [vmem:[%s282 + $0x26c] sm:$0xf] %vm4853, %v4496
        %5010 = vst.msk [vmem:[%s282 + $0x270] sm:$0xf] %vm4853, %v4497
        %5011 = vst.msk [vmem:[%s282 + $0x274] sm:$0xf] %vm4853, %v4498
        %5012 = vst.msk [vmem:[%s282 + $0x278] sm:$0xf] %vm4853, %v4499
        %5013 = vst.msk [vmem:[%s282 + $0x27c] sm:$0xf] %vm4853, %v4500
        %5014 = vst.msk [vmem:[%s282 + $0x280] sm:$0xf] %vm4853, %v4501
        %5015 = vst.msk [vmem:[%s282 + $0x284] sm:$0xf] %vm4853, %v4502
        %5016 = vst.msk [vmem:[%s282 + $0x288] sm:$0xf] %vm4853, %v4503
        %5017 = vst.msk [vmem:[%s282 + $0x28c] sm:$0xf] %vm4853, %v4504
        %5018 = vst.msk [vmem:[%s282 + $0x290] sm:$0xf] %vm4853, %v4505
        %5019 = vst.msk [vmem:[%s282 + $0x294] sm:$0xf] %vm4853, %v4506
        %5020 = vst.msk [vmem:[%s282 + $0x298] sm:$0xf] %vm4853, %v4507
        %5021 = vst.msk [vmem:[%s282 + $0x29c] sm:$0xf] %vm4853, %v4508
        %5022 = vst.msk [vmem:[%s282 + $0x2a0] sm:$0xf] %vm4853, %v4509
        %5023 = vst.msk [vmem:[%s282 + $0x2a4] sm:$0xf] %vm4853, %v4510
        %5024 = vst.msk [vmem:[%s282 + $0x2a8] sm:$0xf] %vm4853, %v4511
        %5025 = vst.msk [vmem:[%s282 + $0x2ac] sm:$0xf] %vm4853, %v4512
        %5026 = vst.msk [vmem:[%s282 + $0x2b0] sm:$0xf] %vm4853, %v4513
        %5027 = vst.msk [vmem:[%s282 + $0x2b4] sm:$0xf] %vm4853, %v4514
        %5028 = vst.msk [vmem:[%s282 + $0x2b8] sm:$0xf] %vm4853, %v4515
        %5029 = vst.msk [vmem:[%s282 + $0x2bc] sm:$0xf] %vm4853, %v4516
        %5030 = vst.msk [vmem:[%s282 + $0x2c0] sm:$0xf] %vm4853, %v4517
        %5031 = vst.msk [vmem:[%s282 + $0x2c4] sm:$0xf] %vm4853, %v4518
        %5032 = vst.msk [vmem:[%s282 + $0x2c8] sm:$0xf] %vm4853, %v4519
        %5033 = vst.msk [vmem:[%s282 + $0x2cc] sm:$0xf] %vm4853, %v4520
        %5034 = vst.msk [vmem:[%s282 + $0x2d0] sm:$0xf] %vm4853, %v4521
        %5035 = vst.msk [vmem:[%s282 + $0x2d4] sm:$0xf] %vm4853, %v4522
        %5036 = vst.msk [vmem:[%s282 + $0x2d8] sm:$0xf] %vm4853, %v4523
        %5037 = vst.msk [vmem:[%s282 + $0x2dc] sm:$0xf] %vm4853, %v4524
        %5038 = vst.msk [vmem:[%s282 + $0x2e0] sm:$0xf] %vm4853, %v4525
        %5039 = vst.msk [vmem:[%s282 + $0x2e4] sm:$0xf] %vm4853, %v4526
        %5040 = vst.msk [vmem:[%s282 + $0x2e8] sm:$0xf] %vm4853, %v4527
        %5041 = vst.msk [vmem:[%s282 + $0x2ec] sm:$0xf] %vm4853, %v4528
        %5042 = vst.msk [vmem:[%s282 + $0x2f0] sm:$0xf] %vm4853, %v4529
        %5043 = vst.msk [vmem:[%s282 + $0x2f4] sm:$0xf] %vm4853, %v4530
        %5044 = vst.msk [vmem:[%s282 + $0x2f8] sm:$0xf] %vm4853, %v4531
        %5045 = vst.msk [vmem:[%s282 + $0x2fc] sm:$0xf] %vm4853, %v4532
        %5046 = vst.msk [vmem:[%s282 + $0x300] sm:$0xf] %vm4853, %v4533
        %5047 = vst.msk [vmem:[%s282 + $0x304] sm:$0xf] %vm4853, %v4534
        %5048 = vst.msk [vmem:[%s282 + $0x308] sm:$0xf] %vm4853, %v4535
        %5049 = vst.msk [vmem:[%s282 + $0x30c] sm:$0xf] %vm4853, %v4536
        %5050 = vst.msk [vmem:[%s282 + $0x310] sm:$0xf] %vm4853, %v4537
        %5051 = vst.msk [vmem:[%s282 + $0x314] sm:$0xf] %vm4853, %v4538
        %5052 = vst.msk [vmem:[%s282 + $0x318] sm:$0xf] %vm4853, %v4539
        %5053 = vst.msk [vmem:[%s282 + $0x31c] sm:$0xf] %vm4853, %v4540
        %5054 = vst.msk [vmem:[%s282 + $0x320] sm:$0xf] %vm4853, %v4541
        %5055 = vst.msk [vmem:[%s282 + $0x324] sm:$0xf] %vm4853, %v4542
        %5056 = vst.msk [vmem:[%s282 + $0x328] sm:$0xf] %vm4853, %v4543
        %5057 = vst.msk [vmem:[%s282 + $0x32c] sm:$0xf] %vm4853, %v4544
        %5058 = vst.msk [vmem:[%s282 + $0x330] sm:$0xf] %vm4853, %v4545
        %5059 = vst.msk [vmem:[%s282 + $0x334] sm:$0xf] %vm4853, %v4546
        %5060 = vst.msk [vmem:[%s282 + $0x338] sm:$0xf] %vm4853, %v4547
        %5061 = vst.msk [vmem:[%s282 + $0x33c] sm:$0xf] %vm4853, %v4548
        %5062 = vst.msk [vmem:[%s282 + $0x340] sm:$0xf] %vm4853, %v4549
        %5063 = vst.msk [vmem:[%s282 + $0x344] sm:$0xf] %vm4853, %v4550
        %5064 = vst.msk [vmem:[%s282 + $0x348] sm:$0xf] %vm4853, %v4551
        %5065 = vst.msk [vmem:[%s282 + $0x34c] sm:$0xf] %vm4853, %v4552
        %5066 = vst.msk [vmem:[%s282 + $0x350] sm:$0xf] %vm4853, %v4553
        %5067 = vst.msk [vmem:[%s282 + $0x354] sm:$0xf] %vm4853, %v4554
        %5068 = vst.msk [vmem:[%s282 + $0x358] sm:$0xf] %vm4853, %v4555
        %5069 = vst.msk [vmem:[%s282 + $0x35c] sm:$0xf] %vm4853, %v4556
        %5070 = vst.msk [vmem:[%s282 + $0x360] sm:$0xf] %vm4853, %v4557
        %5071 = vst.msk [vmem:[%s282 + $0x364] sm:$0xf] %vm4853, %v4558
        %5072 = vst.msk [vmem:[%s282 + $0x368] sm:$0xf] %vm4853, %v4559
        %5073 = vst.msk [vmem:[%s282 + $0x36c] sm:$0xf] %vm4853, %v4560
        %5074 = vst.msk [vmem:[%s282 + $0x370] sm:$0xf] %vm4853, %v4561
        %5075 = vst.msk [vmem:[%s282 + $0x374] sm:$0xf] %vm4853, %v4562
        %5076 = vst.msk [vmem:[%s282 + $0x378] sm:$0xf] %vm4853, %v4563
        %5077 = vst.msk [vmem:[%s282 + $0x37c] sm:$0xf] %vm4853, %v4564
        %5078 = vst.msk [vmem:[%s282 + $0x380] sm:$0xf] %vm4853, %v4565
        %5079 = vst.msk [vmem:[%s282 + $0x384] sm:$0xf] %vm4853, %v4566
        %5080 = vst.msk [vmem:[%s282 + $0x388] sm:$0xf] %vm4853, %v4567
        %5081 = vst.msk [vmem:[%s282 + $0x38c] sm:$0xf] %vm4853, %v4568
        %5082 = vst.msk [vmem:[%s282 + $0x390] sm:$0xf] %vm4853, %v4569
        %5083 = vst.msk [vmem:[%s282 + $0x394] sm:$0xf] %vm4853, %v4570
        %5084 = vst.msk [vmem:[%s282 + $0x398] sm:$0xf] %vm4853, %v4571
        %5085 = vst.msk [vmem:[%s282 + $0x39c] sm:$0xf] %vm4853, %v4572
        %5086 = vst.msk [vmem:[%s282 + $0x3a0] sm:$0xf] %vm4853, %v4573
        %5087 = vst.msk [vmem:[%s282 + $0x3a4] sm:$0xf] %vm4853, %v4574
        %5088 = vst.msk [vmem:[%s282 + $0x3a8] sm:$0xf] %vm4853, %v4575
        %5089 = vst.msk [vmem:[%s282 + $0x3ac] sm:$0xf] %vm4853, %v4576
        %5090 = vst.msk [vmem:[%s282 + $0x3b0] sm:$0xf] %vm4853, %v4577
        %5091 = vst.msk [vmem:[%s282 + $0x3b4] sm:$0xf] %vm4853, %v4578
        %5092 = vst.msk [vmem:[%s282 + $0x3b8] sm:$0xf] %vm4853, %v4579
        %5093 = vst.msk [vmem:[%s282 + $0x3bc] sm:$0xf] %vm4853, %v4580
        %5094 = vst.msk [vmem:[%s282 + $0x3c0] sm:$0xf] %vm4853, %v4581
        %5095 = vst.msk [vmem:[%s282 + $0x3c4] sm:$0xf] %vm4853, %v4582
        %5096 = vst.msk [vmem:[%s282 + $0x3c8] sm:$0xf] %vm4853, %v4583
        %5097 = vst.msk [vmem:[%s282 + $0x3cc] sm:$0xf] %vm4853, %v4584
        %5098 = vst.msk [vmem:[%s282 + $0x3d0] sm:$0xf] %vm4853, %v4585
        %5099 = vst.msk [vmem:[%s282 + $0x3d4] sm:$0xf] %vm4853, %v4586
        %5100 = vst.msk [vmem:[%s282 + $0x3d8] sm:$0xf] %vm4853, %v4587
        %5101 = vst.msk [vmem:[%s282 + $0x3dc] sm:$0xf] %vm4853, %v4588
        %5102 = vst.msk [vmem:[%s282 + $0x3e0] sm:$0xf] %vm4853, %v4589
        %5103 = vst.msk [vmem:[%s282 + $0x3e4] sm:$0xf] %vm4853, %v4590
        %5104 = vst.msk [vmem:[%s282 + $0x3e8] sm:$0xf] %vm4853, %v4591
        %5105 = vst.msk [vmem:[%s282 + $0x3ec] sm:$0xf] %vm4853, %v4592
        %5106 = vst.msk [vmem:[%s282 + $0x3f0] sm:$0xf] %vm4853, %v4593
        %5107 = vst.msk [vmem:[%s282 + $0x3f4] sm:$0xf] %vm4853, %v4594
        %5108 = vst.msk [vmem:[%s282 + $0x3f8] sm:$0xf] %vm4853, %v4595
        %5109 = vst.msk [vmem:[%s282 + $0x3fc] sm:$0xf] %vm4853, %v4596
        %s5110 = sand.u32 %s152, 1
        %s5111 = sand.u32 %s152, 1
        %s5112 = smul.addr %s5111, 1024
        %s5113 = scalar_lea.vmem [#allocation2], %s5112
        // Predicated region
        $region37: #{pallas_matmul.1} parent=35 // pred_check
          %p5114 = pneg %p162
        $region38: #{pallas_matmul.1} parent=35 // pred_check_branch
          %5116 = sbr.rel (%p5114) target = $region40
        $region39: #{pallas_matmul.1} parent=35 // pred_region
          %s5117 = smul.u32 256, %s21
          %s5118 = ssub.s32 1568, %s5117
          %p5119 = scmp.lt.s32.totalorder %s5118, 256
          %s5120 = scalar_select %p5119, %s5118, 256
          %s5121 = smul.u32 64, %s5120
          %p5122 = scmp.ne.s32.totalorder 0, %s5121
          %s5123 = sadd.s32 %s20, %s5117
          %s5124 = smul.addr %s5123, 4
          %s5125 = scalar_lea.vmem %s4, %s5124
          // Predicated region
          $region41: #{pallas_matmul.1} parent=39 // pred_check
            %p5126 = pneg %p5122
          $region42: #{pallas_matmul.1} parent=39 // pred_check_branch
            %5128 = sbr.rel (%p5126) target = $region44
          $region43: #{pallas_matmul.1} parent=39 // pred_region
            // Predicated region
            $region45: #{pallas_matmul.1} parent=43 // pred_check
              _
            $region46: #{pallas_matmul.1} parent=43 // pred_check_branch
              %5130 = sbr.rel target = $region48
            $region47: #{pallas_matmul.1} parent=43 // pred_region
              // Predicated region
              $region67: #{pallas_matmul.1} parent=47 // pred_check
                _
              $region68: #{pallas_matmul.1} parent=47 // pred_check_branch
                %5305 = sbr.rel (0) target = $region70
              $region69: #{pallas_matmul.1} parent=47 // pred_region
                %s5307 = sshrl.u32 %s5120, 6
                // While loop
                $region71: #{pallas_matmul.1} parent=69 // loop_pre_header
                  _
                $region72: #{pallas_matmul.1} parent=69 // loop_header
                  %s5309 = sphi 0, %s5311
                  %p5310 = scmp.ge.s32.totalorder %s5309, %s5307
                  %s5314 = sphi 0, %s5447
                  %s5315 = sphi %s5113, %s5450
                  %s5316 = sphi %s5125, %s5451
                $region73: #{pallas_matmul.1} parent=69 // loop_header_branch
                  %5313 = sbr.rel (%p5310) target = $region77
                $region74: #{pallas_matmul.1} parent=69 // loop_body
                  %v5317 = vld [vmem:[%s5315] sm:$0xf]
                  %5318 = vst [vmem:[%s5316] sm:$0xf] %v5317
                  %v5319 = vld [vmem:[%s5315 + $0x4] sm:$0xf]
                  %5320 = vst [vmem:[%s5316 + $0x4] sm:$0xf] %v5319
                  %v5321 = vld [vmem:[%s5315 + $0x8] sm:$0xf]
                  %5322 = vst [vmem:[%s5316 + $0x8] sm:$0xf] %v5321
                  %v5323 = vld [vmem:[%s5315 + $0xc] sm:$0xf]
                  %5324 = vst [vmem:[%s5316 + $0xc] sm:$0xf] %v5323
                  %v5325 = vld [vmem:[%s5315 + $0x10] sm:$0xf]
                  %5326 = vst [vmem:[%s5316 + $0x10] sm:$0xf] %v5325
                  %v5327 = vld [vmem:[%s5315 + $0x14] sm:$0xf]
                  %5328 = vst [vmem:[%s5316 + $0x14] sm:$0xf] %v5327
                  %v5329 = vld [vmem:[%s5315 + $0x18] sm:$0xf]
                  %5330 = vst [vmem:[%s5316 + $0x18] sm:$0xf] %v5329
                  %v5331 = vld [vmem:[%s5315 + $0x1c] sm:$0xf]
                  %5332 = vst [vmem:[%s5316 + $0x1c] sm:$0xf] %v5331
                  %v5333 = vld [vmem:[%s5315 + $0x20] sm:$0xf]
                  %5334 = vst [vmem:[%s5316 + $0x20] sm:$0xf] %v5333
                  %v5335 = vld [vmem:[%s5315 + $0x24] sm:$0xf]
                  %5336 = vst [vmem:[%s5316 + $0x24] sm:$0xf] %v5335
                  %v5337 = vld [vmem:[%s5315 + $0x28] sm:$0xf]
                  %5338 = vst [vmem:[%s5316 + $0x28] sm:$0xf] %v5337
                  %v5339 = vld [vmem:[%s5315 + $0x2c] sm:$0xf]
                  %5340 = vst [vmem:[%s5316 + $0x2c] sm:$0xf] %v5339
                  %v5341 = vld [vmem:[%s5315 + $0x30] sm:$0xf]
                  %5342 = vst [vmem:[%s5316 + $0x30] sm:$0xf] %v5341
                  %v5343 = vld [vmem:[%s5315 + $0x34] sm:$0xf]
                  %5344 = vst [vmem:[%s5316 + $0x34] sm:$0xf] %v5343
                  %v5345 = vld [vmem:[%s5315 + $0x38] sm:$0xf]
                  %5346 = vst [vmem:[%s5316 + $0x38] sm:$0xf] %v5345
                  %v5347 = vld [vmem:[%s5315 + $0x3c] sm:$0xf]
                  %5348 = vst [vmem:[%s5316 + $0x3c] sm:$0xf] %v5347
                  %v5349 = vld [vmem:[%s5315 + $0x40] sm:$0xf]
                  %5350 = vst [vmem:[%s5316 + $0x40] sm:$0xf] %v5349
                  %v5351 = vld [vmem:[%s5315 + $0x44] sm:$0xf]
                  %5352 = vst [vmem:[%s5316 + $0x44] sm:$0xf] %v5351
                  %v5353 = vld [vmem:[%s5315 + $0x48] sm:$0xf]
                  %5354 = vst [vmem:[%s5316 + $0x48] sm:$0xf] %v5353
                  %v5355 = vld [vmem:[%s5315 + $0x4c] sm:$0xf]
                  %5356 = vst [vmem:[%s5316 + $0x4c] sm:$0xf] %v5355
                  %v5357 = vld [vmem:[%s5315 + $0x50] sm:$0xf]
                  %5358 = vst [vmem:[%s5316 + $0x50] sm:$0xf] %v5357
                  %v5359 = vld [vmem:[%s5315 + $0x54] sm:$0xf]
                  %5360 = vst [vmem:[%s5316 + $0x54] sm:$0xf] %v5359
                  %v5361 = vld [vmem:[%s5315 + $0x58] sm:$0xf]
                  %5362 = vst [vmem:[%s5316 + $0x58] sm:$0xf] %v5361
                  %v5363 = vld [vmem:[%s5315 + $0x5c] sm:$0xf]
                  %5364 = vst [vmem:[%s5316 + $0x5c] sm:$0xf] %v5363
                  %v5365 = vld [vmem:[%s5315 + $0x60] sm:$0xf]
                  %5366 = vst [vmem:[%s5316 + $0x60] sm:$0xf] %v5365
                  %v5367 = vld [vmem:[%s5315 + $0x64] sm:$0xf]
                  %5368 = vst [vmem:[%s5316 + $0x64] sm:$0xf] %v5367
                  %v5369 = vld [vmem:[%s5315 + $0x68] sm:$0xf]
                  %5370 = vst [vmem:[%s5316 + $0x68] sm:$0xf] %v5369
                  %v5371 = vld [vmem:[%s5315 + $0x6c] sm:$0xf]
                  %5372 = vst [vmem:[%s5316 + $0x6c] sm:$0xf] %v5371
                  %v5373 = vld [vmem:[%s5315 + $0x70] sm:$0xf]
                  %5374 = vst [vmem:[%s5316 + $0x70] sm:$0xf] %v5373
                  %v5375 = vld [vmem:[%s5315 + $0x74] sm:$0xf]
                  %5376 = vst [vmem:[%s5316 + $0x74] sm:$0xf] %v5375
                  %v5377 = vld [vmem:[%s5315 + $0x78] sm:$0xf]
                  %5378 = vst [vmem:[%s5316 + $0x78] sm:$0xf] %v5377
                  %v5379 = vld [vmem:[%s5315 + $0x7c] sm:$0xf]
                  %5380 = vst [vmem:[%s5316 + $0x7c] sm:$0xf] %v5379
                  %v5381 = vld [vmem:[%s5315 + $0x80] sm:$0xf]
                  %5382 = vst [vmem:[%s5316 + $0x80] sm:$0xf] %v5381
                  %v5383 = vld [vmem:[%s5315 + $0x84] sm:$0xf]
                  %5384 = vst [vmem:[%s5316 + $0x84] sm:$0xf] %v5383
                  %v5385 = vld [vmem:[%s5315 + $0x88] sm:$0xf]
                  %5386 = vst [vmem:[%s5316 + $0x88] sm:$0xf] %v5385
                  %v5387 = vld [vmem:[%s5315 + $0x8c] sm:$0xf]
                  %5388 = vst [vmem:[%s5316 + $0x8c] sm:$0xf] %v5387
                  %v5389 = vld [vmem:[%s5315 + $0x90] sm:$0xf]
                  %5390 = vst [vmem:[%s5316 + $0x90] sm:$0xf] %v5389
                  %v5391 = vld [vmem:[%s5315 + $0x94] sm:$0xf]
                  %5392 = vst [vmem:[%s5316 + $0x94] sm:$0xf] %v5391
                  %v5393 = vld [vmem:[%s5315 + $0x98] sm:$0xf]
                  %5394 = vst [vmem:[%s5316 + $0x98] sm:$0xf] %v5393
                  %v5395 = vld [vmem:[%s5315 + $0x9c] sm:$0xf]
                  %5396 = vst [vmem:[%s5316 + $0x9c] sm:$0xf] %v5395
                  %v5397 = vld [vmem:[%s5315 + $0xa0] sm:$0xf]
                  %5398 = vst [vmem:[%s5316 + $0xa0] sm:$0xf] %v5397
                  %v5399 = vld [vmem:[%s5315 + $0xa4] sm:$0xf]
                  %5400 = vst [vmem:[%s5316 + $0xa4] sm:$0xf] %v5399
                  %v5401 = vld [vmem:[%s5315 + $0xa8] sm:$0xf]
                  %5402 = vst [vmem:[%s5316 + $0xa8] sm:$0xf] %v5401
                  %v5403 = vld [vmem:[%s5315 + $0xac] sm:$0xf]
                  %5404 = vst [vmem:[%s5316 + $0xac] sm:$0xf] %v5403
                  %v5405 = vld [vmem:[%s5315 + $0xb0] sm:$0xf]
                  %5406 = vst [vmem:[%s5316 + $0xb0] sm:$0xf] %v5405
                  %v5407 = vld [vmem:[%s5315 + $0xb4] sm:$0xf]
                  %5408 = vst [vmem:[%s5316 + $0xb4] sm:$0xf] %v5407
                  %v5409 = vld [vmem:[%s5315 + $0xb8] sm:$0xf]
                  %5410 = vst [vmem:[%s5316 + $0xb8] sm:$0xf] %v5409
                  %v5411 = vld [vmem:[%s5315 + $0xbc] sm:$0xf]
                  %5412 = vst [vmem:[%s5316 + $0xbc] sm:$0xf] %v5411
                  %v5413 = vld [vmem:[%s5315 + $0xc0] sm:$0xf]
                  %5414 = vst [vmem:[%s5316 + $0xc0] sm:$0xf] %v5413
                  %v5415 = vld [vmem:[%s5315 + $0xc4] sm:$0xf]
                  %5416 = vst [vmem:[%s5316 + $0xc4] sm:$0xf] %v5415
                  %v5417 = vld [vmem:[%s5315 + $0xc8] sm:$0xf]
                  %5418 = vst [vmem:[%s5316 + $0xc8] sm:$0xf] %v5417
                  %v5419 = vld [vmem:[%s5315 + $0xcc] sm:$0xf]
                  %5420 = vst [vmem:[%s5316 + $0xcc] sm:$0xf] %v5419
                  %v5421 = vld [vmem:[%s5315 + $0xd0] sm:$0xf]
                  %5422 = vst [vmem:[%s5316 + $0xd0] sm:$0xf] %v5421
                  %v5423 = vld [vmem:[%s5315 + $0xd4] sm:$0xf]
                  %5424 = vst [vmem:[%s5316 + $0xd4] sm:$0xf] %v5423
                  %v5425 = vld [vmem:[%s5315 + $0xd8] sm:$0xf]
                  %5426 = vst [vmem:[%s5316 + $0xd8] sm:$0xf] %v5425
                  %v5427 = vld [vmem:[%s5315 + $0xdc] sm:$0xf]
                  %5428 = vst [vmem:[%s5316 + $0xdc] sm:$0xf] %v5427
                  %v5429 = vld [vmem:[%s5315 + $0xe0] sm:$0xf]
                  %5430 = vst [vmem:[%s5316 + $0xe0] sm:$0xf] %v5429
                  %v5431 = vld [vmem:[%s5315 + $0xe4] sm:$0xf]
                  %5432 = vst [vmem:[%s5316 + $0xe4] sm:$0xf] %v5431
                  %v5433 = vld [vmem:[%s5315 + $0xe8] sm:$0xf]
                  %5434 = vst [vmem:[%s5316 + $0xe8] sm:$0xf] %v5433
                  %v5435 = vld [vmem:[%s5315 + $0xec] sm:$0xf]
                  %5436 = vst [vmem:[%s5316 + $0xec] sm:$0xf] %v5435
                  %v5437 = vld [vmem:[%s5315 + $0xf0] sm:$0xf]
                  %5438 = vst [vmem:[%s5316 + $0xf0] sm:$0xf] %v5437
                  %v5439 = vld [vmem:[%s5315 + $0xf4] sm:$0xf]
                  %5440 = vst [vmem:[%s5316 + $0xf4] sm:$0xf] %v5439
                  %v5441 = vld [vmem:[%s5315 + $0xf8] sm:$0xf]
                  %5442 = vst [vmem:[%s5316 + $0xf8] sm:$0xf] %v5441
                  %v5443 = vld [vmem:[%s5315 + $0xfc] sm:$0xf]
                  %5444 = vst [vmem:[%s5316 + $0xfc] sm:$0xf] %v5443
                  %s5445 = sadd.s32 1, %s5314
                  %p5446 = scmp.ge.s32.totalorder %s5445, %s5307
                  %s5447 = scalar_select %p5446, 0, %s5445
                  %s5448 = smul.u32 %s5447, 256
                  %s5449 = smul.u32 %s5447, 256
                  %s5450 = scalar_lea.vmem %s5113, %s5448 [#allocation2]
                  %s5451 = scalar_lea.vmem %s5125, %s5449
                $region75: #{pallas_matmul.1} parent=69 // loop_footer
                  %s5311 = sadd.s32 %s5309, 1
                $region76: #{pallas_matmul.1} parent=69 // loop_footer_branch
                  %5308 = sbr.rel target = $region72
                $region77: #{pallas_matmul.1} parent=69 // loop_exit
                  _
                %s5452 = sshrl.u32 %s5120, 6
                %s5453 = sand.u32 %s5120, 63
                %s5454 = smul.u32 %s5452, 64
                %s5455 = smul.u32 4, %s5454
                %s5456 = scalar_lea.vmem %s5113, %s5455 [#allocation2]
                %s5457 = smul.u32 4, %s5454
                %s5458 = scalar_lea.vmem %s5125, %s5457
                // While loop
                $region78: #{pallas_matmul.1} parent=69 // loop_pre_header
                  _
                $region79: #{pallas_matmul.1} parent=69 // loop_header
                  %s5460 = sphi 0, %s5462
                  %p5461 = scmp.ge.s32.totalorder %s5460, %s5453
                  %s5465 = sphi 0, %s5472
                  %s5466 = sphi %s5456, %s5475
                  %s5467 = sphi %s5458, %s5476
                $region80: #{pallas_matmul.1} parent=69 // loop_header_branch
                  %5464 = sbr.rel (%p5461) target = $region84
                $region81: #{pallas_matmul.1} parent=69 // loop_body
                  %v5468 = vld [vmem:[%s5466] sm:$0xf]
                  %5469 = vst [vmem:[%s5467] sm:$0xf] %v5468
                  %s5470 = sadd.s32 1, %s5465
                  %p5471 = scmp.ge.s32.totalorder %s5470, %s5453
                  %s5472 = scalar_select %p5471, 0, %s5470
                  %s5473 = smul.u32 %s5472, 4
                  %s5474 = smul.u32 %s5472, 4
                  %s5475 = scalar_lea.vmem %s5456, %s5473 [#allocation2]
                  %s5476 = scalar_lea.vmem %s5458, %s5474
                $region82: #{pallas_matmul.1} parent=69 // loop_footer
                  %s5462 = sadd.s32 %s5460, 1
                $region83: #{pallas_matmul.1} parent=69 // loop_footer_branch
                  %5459 = sbr.rel target = $region79
                $region84: #{pallas_matmul.1} parent=69 // loop_exit
                  _
              $region70: #{pallas_matmul.1} parent=47 // pred_fallthru
                _
            $region48: #{pallas_matmul.1} parent=43 // pred_fallthru
              _
            // Predicated region
            $region49: #{pallas_matmul.1} parent=43 // pred_check
              _
            $region50: #{pallas_matmul.1} parent=43 // pred_check_branch
              %5132 = sbr.rel (0) target = $region52
            $region51: #{pallas_matmul.1} parent=43 // pred_region
              %s5134 = sshrl.u32 %s5120, 6
              // While loop
              $region53: #{pallas_matmul.1} parent=51 // loop_pre_header
                _
              $region54: #{pallas_matmul.1} parent=51 // loop_header
                %s5136 = sphi 0, %s5138
                %p5137 = scmp.ge.s32.totalorder %s5136, %s5134
                %s5141 = sphi 0, %s5274
                %s5142 = sphi %s5113, %s5277
                %s5143 = sphi %s5125, %s5278
              $region55: #{pallas_matmul.1} parent=51 // loop_header_branch
                %5140 = sbr.rel (%p5137) target = $region59
              $region56: #{pallas_matmul.1} parent=51 // loop_body
                %v5144 = vld [vmem:[%s5142] sm:$0xf]
                %5145 = vst [vmem:[%s5143] sm:$0xf] %v5144
                %v5146 = vld [vmem:[%s5142 + $0x4] sm:$0xf]
                %5147 = vst [vmem:[%s5143 + $0x4] sm:$0xf] %v5146
                %v5148 = vld [vmem:[%s5142 + $0x8] sm:$0xf]
                %5149 = vst [vmem:[%s5143 + $0x8] sm:$0xf] %v5148
                %v5150 = vld [vmem:[%s5142 + $0xc] sm:$0xf]
                %5151 = vst [vmem:[%s5143 + $0xc] sm:$0xf] %v5150
                %v5152 = vld [vmem:[%s5142 + $0x10] sm:$0xf]
                %5153 = vst [vmem:[%s5143 + $0x10] sm:$0xf] %v5152
                %v5154 = vld [vmem:[%s5142 + $0x14] sm:$0xf]
                %5155 = vst [vmem:[%s5143 + $0x14] sm:$0xf] %v5154
                %v5156 = vld [vmem:[%s5142 + $0x18] sm:$0xf]
                %5157 = vst [vmem:[%s5143 + $0x18] sm:$0xf] %v5156
                %v5158 = vld [vmem:[%s5142 + $0x1c] sm:$0xf]
                %5159 = vst [vmem:[%s5143 + $0x1c] sm:$0xf] %v5158
                %v5160 = vld [vmem:[%s5142 + $0x20] sm:$0xf]
                %5161 = vst [vmem:[%s5143 + $0x20] sm:$0xf] %v5160
                %v5162 = vld [vmem:[%s5142 + $0x24] sm:$0xf]
                %5163 = vst [vmem:[%s5143 + $0x24] sm:$0xf] %v5162
                %v5164 = vld [vmem:[%s5142 + $0x28] sm:$0xf]
                %5165 = vst [vmem:[%s5143 + $0x28] sm:$0xf] %v5164
                %v5166 = vld [vmem:[%s5142 + $0x2c] sm:$0xf]
                %5167 = vst [vmem:[%s5143 + $0x2c] sm:$0xf] %v5166
                %v5168 = vld [vmem:[%s5142 + $0x30] sm:$0xf]
                %5169 = vst [vmem:[%s5143 + $0x30] sm:$0xf] %v5168
                %v5170 = vld [vmem:[%s5142 + $0x34] sm:$0xf]
                %5171 = vst [vmem:[%s5143 + $0x34] sm:$0xf] %v5170
                %v5172 = vld [vmem:[%s5142 + $0x38] sm:$0xf]
                %5173 = vst [vmem:[%s5143 + $0x38] sm:$0xf] %v5172
                %v5174 = vld [vmem:[%s5142 + $0x3c] sm:$0xf]
                %5175 = vst [vmem:[%s5143 + $0x3c] sm:$0xf] %v5174
                %v5176 = vld [vmem:[%s5142 + $0x40] sm:$0xf]
                %5177 = vst [vmem:[%s5143 + $0x40] sm:$0xf] %v5176
                %v5178 = vld [vmem:[%s5142 + $0x44] sm:$0xf]
                %5179 = vst [vmem:[%s5143 + $0x44] sm:$0xf] %v5178
                %v5180 = vld [vmem:[%s5142 + $0x48] sm:$0xf]
                %5181 = vst [vmem:[%s5143 + $0x48] sm:$0xf] %v5180
                %v5182 = vld [vmem:[%s5142 + $0x4c] sm:$0xf]
                %5183 = vst [vmem:[%s5143 + $0x4c] sm:$0xf] %v5182
                %v5184 = vld [vmem:[%s5142 + $0x50] sm:$0xf]
                %5185 = vst [vmem:[%s5143 + $0x50] sm:$0xf] %v5184
                %v5186 = vld [vmem:[%s5142 + $0x54] sm:$0xf]
                %5187 = vst [vmem:[%s5143 + $0x54] sm:$0xf] %v5186
                %v5188 = vld [vmem:[%s5142 + $0x58] sm:$0xf]
                %5189 = vst [vmem:[%s5143 + $0x58] sm:$0xf] %v5188
                %v5190 = vld [vmem:[%s5142 + $0x5c] sm:$0xf]
                %5191 = vst [vmem:[%s5143 + $0x5c] sm:$0xf] %v5190
                %v5192 = vld [vmem:[%s5142 + $0x60] sm:$0xf]
                %5193 = vst [vmem:[%s5143 + $0x60] sm:$0xf] %v5192
                %v5194 = vld [vmem:[%s5142 + $0x64] sm:$0xf]
                %5195 = vst [vmem:[%s5143 + $0x64] sm:$0xf] %v5194
                %v5196 = vld [vmem:[%s5142 + $0x68] sm:$0xf]
                %5197 = vst [vmem:[%s5143 + $0x68] sm:$0xf] %v5196
                %v5198 = vld [vmem:[%s5142 + $0x6c] sm:$0xf]
                %5199 = vst [vmem:[%s5143 + $0x6c] sm:$0xf] %v5198
                %v5200 = vld [vmem:[%s5142 + $0x70] sm:$0xf]
                %5201 = vst [vmem:[%s5143 + $0x70] sm:$0xf] %v5200
                %v5202 = vld [vmem:[%s5142 + $0x74] sm:$0xf]
                %5203 = vst [vmem:[%s5143 + $0x74] sm:$0xf] %v5202
                %v5204 = vld [vmem:[%s5142 + $0x78] sm:$0xf]
                %5205 = vst [vmem:[%s5143 + $0x78] sm:$0xf] %v5204
                %v5206 = vld [vmem:[%s5142 + $0x7c] sm:$0xf]
                %5207 = vst [vmem:[%s5143 + $0x7c] sm:$0xf] %v5206
                %v5208 = vld [vmem:[%s5142 + $0x80] sm:$0xf]
                %5209 = vst [vmem:[%s5143 + $0x80] sm:$0xf] %v5208
                %v5210 = vld [vmem:[%s5142 + $0x84] sm:$0xf]
                %5211 = vst [vmem:[%s5143 + $0x84] sm:$0xf] %v5210
                %v5212 = vld [vmem:[%s5142 + $0x88] sm:$0xf]
                %5213 = vst [vmem:[%s5143 + $0x88] sm:$0xf] %v5212
                %v5214 = vld [vmem:[%s5142 + $0x8c] sm:$0xf]
                %5215 = vst [vmem:[%s5143 + $0x8c] sm:$0xf] %v5214
                %v5216 = vld [vmem:[%s5142 + $0x90] sm:$0xf]
                %5217 = vst [vmem:[%s5143 + $0x90] sm:$0xf] %v5216
                %v5218 = vld [vmem:[%s5142 + $0x94] sm:$0xf]
                %5219 = vst [vmem:[%s5143 + $0x94] sm:$0xf] %v5218
                %v5220 = vld [vmem:[%s5142 + $0x98] sm:$0xf]
                %5221 = vst [vmem:[%s5143 + $0x98] sm:$0xf] %v5220
                %v5222 = vld [vmem:[%s5142 + $0x9c] sm:$0xf]
                %5223 = vst [vmem:[%s5143 + $0x9c] sm:$0xf] %v5222
                %v5224 = vld [vmem:[%s5142 + $0xa0] sm:$0xf]
                %5225 = vst [vmem:[%s5143 + $0xa0] sm:$0xf] %v5224
                %v5226 = vld [vmem:[%s5142 + $0xa4] sm:$0xf]
                %5227 = vst [vmem:[%s5143 + $0xa4] sm:$0xf] %v5226
                %v5228 = vld [vmem:[%s5142 + $0xa8] sm:$0xf]
                %5229 = vst [vmem:[%s5143 + $0xa8] sm:$0xf] %v5228
                %v5230 = vld [vmem:[%s5142 + $0xac] sm:$0xf]
                %5231 = vst [vmem:[%s5143 + $0xac] sm:$0xf] %v5230
                %v5232 = vld [vmem:[%s5142 + $0xb0] sm:$0xf]
                %5233 = vst [vmem:[%s5143 + $0xb0] sm:$0xf] %v5232
                %v5234 = vld [vmem:[%s5142 + $0xb4] sm:$0xf]
                %5235 = vst [vmem:[%s5143 + $0xb4] sm:$0xf] %v5234
                %v5236 = vld [vmem:[%s5142 + $0xb8] sm:$0xf]
                %5237 = vst [vmem:[%s5143 + $0xb8] sm:$0xf] %v5236
                %v5238 = vld [vmem:[%s5142 + $0xbc] sm:$0xf]
                %5239 = vst [vmem:[%s5143 + $0xbc] sm:$0xf] %v5238
                %v5240 = vld [vmem:[%s5142 + $0xc0] sm:$0xf]
                %5241 = vst [vmem:[%s5143 + $0xc0] sm:$0xf] %v5240
                %v5242 = vld [vmem:[%s5142 + $0xc4] sm:$0xf]
                %5243 = vst [vmem:[%s5143 + $0xc4] sm:$0xf] %v5242
                %v5244 = vld [vmem:[%s5142 + $0xc8] sm:$0xf]
                %5245 = vst [vmem:[%s5143 + $0xc8] sm:$0xf] %v5244
                %v5246 = vld [vmem:[%s5142 + $0xcc] sm:$0xf]
                %5247 = vst [vmem:[%s5143 + $0xcc] sm:$0xf] %v5246
                %v5248 = vld [vmem:[%s5142 + $0xd0] sm:$0xf]
                %5249 = vst [vmem:[%s5143 + $0xd0] sm:$0xf] %v5248
                %v5250 = vld [vmem:[%s5142 + $0xd4] sm:$0xf]
                %5251 = vst [vmem:[%s5143 + $0xd4] sm:$0xf] %v5250
                %v5252 = vld [vmem:[%s5142 + $0xd8] sm:$0xf]
                %5253 = vst [vmem:[%s5143 + $0xd8] sm:$0xf] %v5252
                %v5254 = vld [vmem:[%s5142 + $0xdc] sm:$0xf]
                %5255 = vst [vmem:[%s5143 + $0xdc] sm:$0xf] %v5254
                %v5256 = vld [vmem:[%s5142 + $0xe0] sm:$0xf]
                %5257 = vst [vmem:[%s5143 + $0xe0] sm:$0xf] %v5256
                %v5258 = vld [vmem:[%s5142 + $0xe4] sm:$0xf]
                %5259 = vst [vmem:[%s5143 + $0xe4] sm:$0xf] %v5258
                %v5260 = vld [vmem:[%s5142 + $0xe8] sm:$0xf]
                %5261 = vst [vmem:[%s5143 + $0xe8] sm:$0xf] %v5260
                %v5262 = vld [vmem:[%s5142 + $0xec] sm:$0xf]
                %5263 = vst [vmem:[%s5143 + $0xec] sm:$0xf] %v5262
                %v5264 = vld [vmem:[%s5142 + $0xf0] sm:$0xf]
                %5265 = vst [vmem:[%s5143 + $0xf0] sm:$0xf] %v5264
                %v5266 = vld [vmem:[%s5142 + $0xf4] sm:$0xf]
                %5267 = vst [vmem:[%s5143 + $0xf4] sm:$0xf] %v5266
                %v5268 = vld [vmem:[%s5142 + $0xf8] sm:$0xf]
                %5269 = vst [vmem:[%s5143 + $0xf8] sm:$0xf] %v5268
                %v5270 = vld [vmem:[%s5142 + $0xfc] sm:$0xf]
                %5271 = vst [vmem:[%s5143 + $0xfc] sm:$0xf] %v5270
                %s5272 = sadd.s32 1, %s5141
                %p5273 = scmp.ge.s32.totalorder %s5272, %s5134
                %s5274 = scalar_select %p5273, 0, %s5272
                %s5275 = smul.u32 %s5274, 256
                %s5276 = smul.u32 %s5274, 256
                %s5277 = scalar_lea.vmem %s5113, %s5275 [#allocation2]
                %s5278 = scalar_lea.vmem %s5125, %s5276
              $region57: #{pallas_matmul.1} parent=51 // loop_footer
                %s5138 = sadd.s32 %s5136, 1
              $region58: #{pallas_matmul.1} parent=51 // loop_footer_branch
                %5135 = sbr.rel target = $region54
              $region59: #{pallas_matmul.1} parent=51 // loop_exit
                _
              %s5279 = sshrl.u32 %s5120, 6
              %s5280 = sand.u32 %s5120, 63
              %s5281 = smul.u32 %s5279, 64
              %s5282 = smul.u32 4, %s5281
              %s5283 = scalar_lea.vmem %s5113, %s5282 [#allocation2]
              %s5284 = smul.u32 4, %s5281
              %s5285 = scalar_lea.vmem %s5125, %s5284
              // While loop
              $region60: #{pallas_matmul.1} parent=51 // loop_pre_header
                _
              $region61: #{pallas_matmul.1} parent=51 // loop_header
                %s5287 = sphi 0, %s5289
                %p5288 = scmp.ge.s32.totalorder %s5287, %s5280
                %s5292 = sphi 0, %s5299
                %s5293 = sphi %s5283, %s5302
                %s5294 = sphi %s5285, %s5303
              $region62: #{pallas_matmul.1} parent=51 // loop_header_branch
                %5291 = sbr.rel (%p5288) target = $region66
              $region63: #{pallas_matmul.1} parent=51 // loop_body
                %v5295 = vld [vmem:[%s5293] sm:$0xf]
                %5296 = vst [vmem:[%s5294] sm:$0xf] %v5295
                %s5297 = sadd.s32 1, %s5292
                %p5298 = scmp.ge.s32.totalorder %s5297, %s5280
                %s5299 = scalar_select %p5298, 0, %s5297
                %s5300 = smul.u32 %s5299, 4
                %s5301 = smul.u32 %s5299, 4
                %s5302 = scalar_lea.vmem %s5283, %s5300 [#allocation2]
                %s5303 = scalar_lea.vmem %s5285, %s5301
              $region64: #{pallas_matmul.1} parent=51 // loop_footer
                %s5289 = sadd.s32 %s5287, 1
              $region65: #{pallas_matmul.1} parent=51 // loop_footer_branch
                %5286 = sbr.rel target = $region61
              $region66: #{pallas_matmul.1} parent=51 // loop_exit
                _
            $region52: #{pallas_matmul.1} parent=43 // pred_fallthru
              _
          $region44: #{pallas_matmul.1} parent=39 // pred_fallthru
            _
          %5477 = vnop
        $region40: #{pallas_matmul.1} parent=35 // pred_fallthru
          _
      $region36: #{pallas_matmul.1} parent=5 // pred_fallthru
        _
      %p5478 = scmp.le.s32.totalorder 2, %s10
      // Predicated region
      $region85: #{pallas_matmul.1} parent=5 // pred_check
        %p5479 = pneg %p5478
      $region86: #{pallas_matmul.1} parent=5 // pred_check_branch
        %5481 = sbr.rel (%p5479) target = $region88
      $region87: #{pallas_matmul.1} parent=5 // pred_region
        %s5482 = ssub.s32 %s10, 2
        // Predicated region
        $region89: #{pallas_matmul.1} parent=87 // pred_check
          %p5483 = pneg %p168
        $region90: #{pallas_matmul.1} parent=87 // pred_check_branch
          %5485 = sbr.rel (%p5483) target = $region92
        $region91: #{pallas_matmul.1} parent=87 // pred_region
          %s5486 = sand.u32 %s153, 1
          %s5487 = sand.u32 %s153, 1
          %s5488 = smul.addr %s5487, 1024
          %s5489 = scalar_lea.vmem [#allocation2], %s5488
        $region92: #{pallas_matmul.1} parent=87 // pred_fallthru
          _
      $region88: #{pallas_matmul.1} parent=5 // pred_fallthru
        _
    $region6: #{pallas_matmul.1} parent=1 // loop_footer
      %s14 = sadd.s32 1, %s10
    $region7: #{pallas_matmul.1} parent=1 // loop_footer_branch
      %9 = sbr.rel target = $region3
    $region8: #{pallas_matmul.1} parent=1 // loop_exit
      _

</llo_original>
